<compile_context>
chip_gen: v7x
topology: tpu7x:2x2x1
jax: 0.10.0
libtpu: 0.0.40
codegen_flags: <defaults>
</compile_context>

<pallas_src>
import functools

import jax
import jax.numpy as jnp
from jax.experimental import pallas as pl
from jax.experimental.pallas import tpu as pltpu


# ---------------------------------------------------------------------------
# Packed-parameter slab layout: one (232, 128) f32 array.
# Every matrix block starts on an 8-row (sublane-tile) boundary; each stage's
# bias / gamma / beta vectors are grouped into the same aligned tile.
# ---------------------------------------------------------------------------
_F_W1 = 0                                   # (2, 64)   rows 0..1
_F_B1, _F_G1, _F_BE1 = 2, 3, 4
_F_B2, _F_G2, _F_BE2 = 5, 6, 7
_F_W2 = 8                                   # (64, 64)  rows 8..71
_S_W1 = 72                                  # (5, 16)   rows 72..76
_S_B1, _S_G1, _S_BE1 = 77, 78, 79
_S_W2 = 80                                  # (16, 16)  rows 80..95
_S_B2, _S_G2, _S_BE2 = 96, 97, 98
_P_W1 = 99                                  # (1, 16)
_P_B1, _P_G1, _P_BE1 = 100, 101, 102
_P_W2 = 104                                 # (16, 16)  rows 104..119
_P_B2, _P_G2, _P_BE2 = 120, 121, 122
_R_W1 = 128                                 # (96, 32)  rows 128..223
_R_B1, _R_G1, _R_BE1 = 224, 225, 226
_R_W2T = 227                                # (1, 32)
_R_B2 = 228                                 # scalar in col 0
_N_ROWS = 232                               # multiple of 8
_N_LANES = 128

_HIGHEST = jax.lax.Precision.HIGHEST


# ---------------------------------------------------------------------------
# In-kernel helpers
# ---------------------------------------------------------------------------
def _ln(x, g, b, eps=1e-5):
    """LayerNorm; the two moment reductions are independent (overlap on XLU)."""
    inv_n = 1.0 / x.shape[-1]
    s1 = jnp.sum(x, axis=-1, keepdims=True)
    s2 = jnp.sum(x * x, axis=-1, keepdims=True)
    mu = s1 * inv_n
    var = jnp.maximum(s2 * inv_n - mu * mu, 0.0)
    return (x - mu) * jax.lax.rsqrt(var + eps) * g + b


def _dot(a, b):
    return jnp.dot(a, b, preferred_element_type=jnp.float32, precision=_HIGHEST)


# ---------------------------------------------------------------------------
# Kernel: one batch tile of `tb` rows per grid step.
# ---------------------------------------------------------------------------
def encoder_kernel(basic_ref, mask_ref, summary_ref, prior_ref, p_ref,
                   out_ref, h1s_ref):
    tb = out_ref.shape[0]
    A = mask_ref.shape[1]

    # ---- unpack parameter slab (static, 8-row-aligned slices) --------------
    f_w1_0 = p_ref[_F_W1:_F_W1 + 1, :64]
    f_w1_1 = p_ref[_F_W1 + 1:_F_W1 + 2, :64]
    f_b1 = p_ref[_F_B1:_F_B1 + 1, :64]
    f_g1 = p_ref[_F_G1:_F_G1 + 1, :64]
    f_be1 = p_ref[_F_BE1:_F_BE1 + 1, :64]
    f_b2 = p_ref[_F_B2:_F_B2 + 1, :64]
    f_g2 = p_ref[_F_G2:_F_G2 + 1, :64]
    f_be2 = p_ref[_F_BE2:_F_BE2 + 1, :64]
    f_w2 = p_ref[_F_W2:_F_W2 + 64, :64]

    s_w1 = p_ref[_S_W1:_S_W1 + 5, :16]
    s_b1 = p_ref[_S_B1:_S_B1 + 1, :16]
    s_g1 = p_ref[_S_G1:_S_G1 + 1, :16]
    s_be1 = p_ref[_S_BE1:_S_BE1 + 1, :16]
    s_w2 = p_ref[_S_W2:_S_W2 + 16, :16]
    s_b2 = p_ref[_S_B2:_S_B2 + 1, :16]
    s_g2 = p_ref[_S_G2:_S_G2 + 1, :16]
    s_be2 = p_ref[_S_BE2:_S_BE2 + 1, :16]

    p_w1 = p_ref[_P_W1:_P_W1 + 1, :16]
    p_b1 = p_ref[_P_B1:_P_B1 + 1, :16]
    p_g1 = p_ref[_P_G1:_P_G1 + 1, :16]
    p_be1 = p_ref[_P_BE1:_P_BE1 + 1, :16]
    p_w2 = p_ref[_P_W2:_P_W2 + 16, :16]
    p_b2 = p_ref[_P_B2:_P_B2 + 1, :16]
    p_g2 = p_ref[_P_G2:_P_G2 + 1, :16]
    p_be2 = p_ref[_P_BE2:_P_BE2 + 1, :16]

    r_w1a = p_ref[_R_W1:_R_W1 + 64, :32]          # pooled rows
    r_w1b = p_ref[_R_W1 + 64:_R_W1 + 80, :32]     # summary rows
    r_w1c = p_ref[_R_W1 + 80:_R_W1 + 96, :32]     # prior rows
    r_b1 = p_ref[_R_B1:_R_B1 + 1, :32]
    r_g1 = p_ref[_R_G1:_R_G1 + 1, :32]
    r_be1 = p_ref[_R_BE1:_R_BE1 + 1, :32]
    r_w2t = p_ref[_R_W2T:_R_W2T + 1, :32]
    r_b2 = p_ref[_R_B2:_R_B2 + 1, 0:1]

    # ---- feature extractor ---------------------------------------------------
    # Layer 1 (K=2): VPU broadcast FMAs per agent, stacked into VMEM scratch.
    for a in range(A):                                     # A small & static
        x0 = basic_ref[:, 2 * a:2 * a + 1]                 # (tb, 1)
        x1 = basic_ref[:, 2 * a + 1:2 * a + 2]             # (tb, 1)
        h1 = jnp.maximum(x0 * f_w1_0 + x1 * f_w1_1 + f_b1, 0.0)   # (tb, 64)
        h1s_ref[a * tb:(a + 1) * tb, :] = h1               # aligned (tb mult of 8)

    # LN1 + ONE (A*tb, 64) @ (64, 64) matmul + LN2 on the stacked tensor.
    h = _ln(h1s_ref[...], f_g1, f_be1)                     # (A*tb, 64)
    h = jnp.maximum(_dot(h, f_w2) + f_b2, 0.0)
    h = _ln(h, f_g2, f_be2)

    # Masked mean pool over the agent axis (no O(B^2*A) matmul).
    maskv = mask_ref[...]                                  # (tb, A)
    pooled = jnp.zeros((tb, 64), jnp.float32)
    for a in range(A):
        pooled = pooled + h[a * tb:(a + 1) * tb, :] * maskv[:, a:a + 1]
    cnt = jnp.maximum(jnp.sum(maskv, axis=-1, keepdims=True), 1.0)  # clamp(min=1)
    pooled = pooled / cnt

    # ---- summary processor (K=5 first layer on the VPU) --------------------
    sm = summary_ref[...]                                  # (tb, 5)
    hs = sm[:, 0:1] * s_w1[0:1, :] + s_b1
    for k in range(1, 5):
        hs = hs + sm[:, k:k + 1] * s_w1[k:k + 1, :]
    hs = jnp.maximum(hs, 0.0)
    hs = _ln(hs, s_g1, s_be1)
    hs = jnp.maximum(_dot(hs, s_w2) + s_b2, 0.0)
    s_feat = _ln(hs, s_g2, s_be2)                          # (tb, 16)

    # ---- prior processor (K=1 first layer on the VPU) ----------------------
    pr = prior_ref[...]                                    # (tb, 1)
    hp = jnp.maximum(pr * p_w1 + p_b1, 0.0)
    hp = _ln(hp, p_g1, p_be1)
    hp = jnp.maximum(_dot(hp, p_w2) + p_b2, 0.0)
    p_feat = _ln(hp, p_g2, p_be2)                          # (tb, 16)

    # ---- regressor: concat avoided by splitting W1 into three row blocks ---
    hr = (_dot(pooled, r_w1a) + _dot(s_feat, r_w1b) + _dot(p_feat, r_w1c)
          + r_b1)                                          # (tb, 32)
    hr = jnp.maximum(hr, 0.0)
    hr = _ln(hr, r_g1, r_be1)
    # Final (32 -> 1) layer: VPU multiply + lane reduction (no N=1 matmul).
    delta = jnp.sum(hr * r_w2t, axis=-1, keepdims=True) + r_b2
    out_ref[...] = pr + delta                              # residual: prior + f(x)


# ---------------------------------------------------------------------------
# Parameter init (PyTorch-Linear-style uniform) and slab packing.
# Linear weights stored transposed vs torch: shape (fan_in, fan_out).
# ---------------------------------------------------------------------------
def _init_linear(key, fan_in, fan_out):
    k1, k2 = jax.random.split(key)
    bound = 1.0 / float(fan_in) ** 0.5
    w = jax.random.uniform(k1, (fan_in, fan_out), jnp.float32, -bound, bound)
    b = jax.random.uniform(k2, (fan_out,), jnp.float32, -bound, bound)
    return w, b


def _init_mlp(key, inp, hid):
    k1, k2 = jax.random.split(key)
    w1, b1 = _init_linear(k1, inp, hid)
    w2, b2 = _init_linear(k2, hid, hid)
    return dict(w1=w1, b1=b1,
                g1=jnp.ones((hid,), jnp.float32), be1=jnp.zeros((hid,), jnp.float32),
                w2=w2, b2=b2,
                g2=jnp.ones((hid,), jnp.float32), be2=jnp.zeros((hid,), jnp.float32))


def init_params(key):
    ks = jax.random.split(key, 5)
    feat = _init_mlp(ks[0], 2, 64)
    summ = _init_mlp(ks[1], 5, 16)
    prio = _init_mlp(ks[2], 1, 16)
    wr1, br1 = _init_linear(ks[3], 64 + 16 + 16, 32)
    wr2, br2 = _init_linear(ks[4], 32, 1)
    reg = dict(w1=wr1, b1=br1,
               g1=jnp.ones((32,), jnp.float32), be1=jnp.zeros((32,), jnp.float32),
               w2=wr2, b2=br2)
    return dict(feat=feat, summ=summ, prio=prio, reg=reg)


def pack_params(p):
    """Pack all parameters into one (232, 128) f32, 8-row-aligned VMEM slab."""
    slab = jnp.zeros((_N_ROWS, _N_LANES), jnp.float32)

    def put(s, row, arr):
        arr = jnp.asarray(arr, jnp.float32)
        if arr.ndim == 1:
            arr = arr[None, :]
        r, c = arr.shape
        return s.at[row:row + r, :c].set(arr)

    f, sm, pr, rg = p["feat"], p["summ"], p["prio"], p["reg"]
    slab = put(slab, _F_W1, f["w1"]);   slab = put(slab, _F_B1, f["b1"])
    slab = put(slab, _F_G1, f["g1"]);   slab = put(slab, _F_BE1, f["be1"])
    slab = put(slab, _F_B2, f["b2"]);   slab = put(slab, _F_G2, f["g2"])
    slab = put(slab, _F_BE2, f["be2"]); slab = put(slab, _F_W2, f["w2"])
    slab = put(slab, _S_W1, sm["w1"]);  slab = put(slab, _S_B1, sm["b1"])
    slab = put(slab, _S_G1, sm["g1"]);  slab = put(slab, _S_BE1, sm["be1"])
    slab = put(slab, _S_W2, sm["w2"]);  slab = put(slab, _S_B2, sm["b2"])
    slab = put(slab, _S_G2, sm["g2"]);  slab = put(slab, _S_BE2, sm["be2"])
    slab = put(slab, _P_W1, pr["w1"]);  slab = put(slab, _P_B1, pr["b1"])
    slab = put(slab, _P_G1, pr["g1"]);  slab = put(slab, _P_BE1, pr["be1"])
    slab = put(slab, _P_W2, pr["w2"]);  slab = put(slab, _P_B2, pr["b2"])
    slab = put(slab, _P_G2, pr["g2"]);  slab = put(slab, _P_BE2, pr["be2"])
    slab = put(slab, _R_W1, rg["w1"]);  slab = put(slab, _R_B1, rg["b1"])
    slab = put(slab, _R_G1, rg["g1"]);  slab = put(slab, _R_BE1, rg["be1"])
    slab = put(slab, _R_W2T, rg["w2"].T)        # (1, 32)
    slab = put(slab, _R_B2, rg["b2"])           # scalar in col 0
    return slab


# ---------------------------------------------------------------------------
# Wrapper
# ---------------------------------------------------------------------------
def _round_up(x, m):
    return ((x + m - 1) // m) * m


def _pick_tb(B, max_tile):
    """Largest tile <= max_tile that leaves >= 2 grid steps when B allows.

    (>= 2 steps lets both v7x TensorCores get work; harmless on v5e/v6e.)
    """
    for tb in (2048, 1024, 512, 256, 128, 64, 32, 16, 8):
        if tb <= max_tile and 2 * tb <= B:
            return tb
    return 8


@functools.partial(jax.jit, static_argnames=("max_tile",))
def underwater_encoder(basic, mask, summary, prior, params_slab, *, max_tile=1024):
    B, A, _ = basic.shape
    # Free metadata-only reshape (B, A, 2) -> (B, 2*A); no pooling matrix.
    basic2d = jnp.reshape(basic, (B, 2 * A)).astype(jnp.float32)
    maskf = mask.astype(jnp.float32)                      # (B, A)
    summary = summary.astype(jnp.float32)
    prior = prior.astype(jnp.float32)

    tb = _pick_tb(B, max_tile)
    Bp = _round_up(B, tb)                                 # pad instead of tb=B fallback
    pad = Bp - B
    if pad:
        basic2d = jnp.pad(basic2d, ((0, pad), (0, 0)))
        maskf = jnp.pad(maskf, ((0, pad), (0, 0)))        # mask=0 -> padded rows inert
        summary = jnp.pad(summary, ((0, pad), (0, 0)))
        prior_p = jnp.pad(prior, ((0, pad), (0, 0)))
    else:
        prior_p = prior
    grid = (Bp // tb,)

    out = pl.pallas_call(
        encoder_kernel,
        out_shape=jax.ShapeDtypeStruct((Bp, 1), jnp.float32),
        grid_spec=pltpu.PrefetchScalarGridSpec(
            num_scalar_prefetch=0,
            grid=grid,
            in_specs=[
                pl.BlockSpec((tb, 2 * A), lambda i: (i, 0)),
                pl.BlockSpec((tb, A), lambda i: (i, 0)),
                pl.BlockSpec((tb, 5), lambda i: (i, 0)),
                pl.BlockSpec((tb, 1), lambda i: (i, 0)),
                # Parameter slab: constant block index -> fetched once, reused.
                pl.BlockSpec((_N_ROWS, _N_LANES), lambda i: (0, 0)),
            ],
            out_specs=pl.BlockSpec((tb, 1), lambda i: (i, 0)),
            # Stacked layer-1 hidden for all agents: one big MXU matmul.
            scratch_shapes=[pltpu.VMEM((A * tb, 64), jnp.float32)],
        ),
        compiler_params=pltpu.CompilerParams(
            dimension_semantics=("parallel",),
            # 48 MiB: plenty for the ~20 MiB worst-case working set at tb=2048
            # yet comfortably under v7x's 64 MiB physical VMEM per TensorCore.
            vmem_limit_bytes=48 * 1024 * 1024,
        ),
    )(basic2d, maskf, summary, prior_p, params_slab)
    return out[:B]


# ---------------------------------------------------------------------------
# Pure-JAX reference (mirrors the PyTorch forward exactly)
# ---------------------------------------------------------------------------
def _ref_ln(x, g, b, eps=1e-5):
    mu = jnp.mean(x, -1, keepdims=True)
    var = jnp.mean((x - mu) ** 2, -1, keepdims=True)
    return (x - mu) / jnp.sqrt(var + eps) * g + b


def _ref_mlp(x, m):
    h = _ref_ln(jnp.maximum(x @ m["w1"] + m["b1"], 0.0), m["g1"], m["be1"])
    return _ref_ln(jnp.maximum(h @ m["w2"] + m["b2"], 0.0), m["g2"], m["be2"])


def reference(basic, mask, summary, prior, p):
    B, A, _ = basic.shape
    proc = _ref_mlp(basic.reshape(-1, 2), p["feat"]).reshape(B, A, 64)
    proc = proc * mask.astype(jnp.float32)[:, :, None]
    pooled = proc.sum(1) / jnp.maximum(mask.astype(jnp.float32).sum(1), 1.0)[:, None]
    comb = jnp.concatenate(
        [pooled, _ref_mlp(summary, p["summ"]), _ref_mlp(prior, p["prio"])], axis=1)
    r = p["reg"]
    h = _ref_ln(jnp.maximum(comb @ r["w1"] + r["b1"], 0.0), r["g1"], r["be1"])
    return prior + (h @ r["w2"] + r["b2"])


# ---------------------------------------------------------------------------
if __name__ == "__main__":
    key = jax.random.PRNGKey(0)
    kb, km, ksm, kpr, kpm = jax.random.split(key, 5)

    params = init_params(kpm)
    slab = pack_params(params)

    # Check 1: tiny batch (padded to one 8-row tile).
    B, A = 2, 8
    basic = jax.random.normal(kb, (B, A, 2), jnp.float32)
    mask = jax.random.uniform(km, (B, A)) > 0.3          # bool mask
    summary = jax.random.normal(ksm, (B, 5), jnp.float32)
    prior = jax.random.normal(kpr, (B, 1), jnp.float32)

    out = jax.block_until_ready(underwater_encoder(basic, mask, summary, prior, slab))
    ref = reference(basic, mask, summary, prior, params)
    assert out.shape == (B, 1)
    assert jnp.allclose(out, ref, rtol=1e-4, atol=1e-4), (out, ref)

    # Check 2: awkward batch/agent count -> exercises padding + multi-step grid.
    k2 = jax.random.split(key, 4)
    B2, A2 = 24, 5
    basic2 = jax.random.normal(k2[0], (B2, A2, 2), jnp.float32)
    mask2 = jax.random.uniform(k2[1], (B2, A2)) > 0.5
    summary2 = jax.random.normal(k2[2], (B2, 5), jnp.float32)
    prior2 = jax.random.normal(k2[3], (B2, 1), jnp.float32)
    out2 = jax.block_until_ready(
        underwater_encoder(basic2, mask2, summary2, prior2, slab))
    ref2 = reference(basic2, mask2, summary2, prior2, params)
    assert out2.shape == (B2, 1)
    assert jnp.allclose(out2, ref2, rtol=1e-4, atol=1e-4), (out2, ref2)

    print("KERNEL_OK")
</pallas_src>

<mosaic_0001>
module attributes {stable_mosaic.version = 11 : i64} {
  func.func @encoder_kernel(%arg0: i32, %arg1: memref<8x16xf32, #tpu.memory_space<vmem>>, %arg2: memref<8x8xf32, #tpu.memory_space<vmem>>, %arg3: memref<8x5xf32, #tpu.memory_space<vmem>>, %arg4: memref<8x1xf32, #tpu.memory_space<vmem>>, %arg5: memref<232x128xf32, #tpu.memory_space<vmem>>, %arg6: memref<8x1xf32, #tpu.memory_space<vmem>>, %arg7: memref<64x64xf32, #tpu.memory_space<vmem>>) attributes {dimension_semantics = [#tpu.dimension_semantics<parallel>], iteration_bounds = array<i64: 1>, scalar_prefetch = 0 : i64, scratch_operands = 1 : i64, tpu.core_type = #tpu.core_type<tc>, window_params = [{transform_indices = @transform_0, window_bounds = array<i64: 8, 16>}, {transform_indices = @transform_1, window_bounds = array<i64: 8, 8>}, {transform_indices = @transform_2, window_bounds = array<i64: 8, 5>}, {transform_indices = @transform_3, window_bounds = array<i64: 8, 1>}, {pipeline_mode = #tpu.pipeline_mode<synchronous>, transform_indices = @transform_4, window_bounds = array<i64: 232, 128>}, {transform_indices = @transform_5, window_bounds = array<i64: 8, 1>}]} {
    %c0 = arith.constant 0 : index
    %c0_0 = arith.constant 0 : index
    %0 = vector.load %arg5[%c0, %c0_0] : memref<232x128xf32, #tpu.memory_space<vmem>>, vector<1x64xf32>
    %c1 = arith.constant 1 : index
    %c0_1 = arith.constant 0 : index
    %1 = vector.load %arg5[%c1, %c0_1] : memref<232x128xf32, #tpu.memory_space<vmem>>, vector<1x64xf32>
    %c2 = arith.constant 2 : index
    %c0_2 = arith.constant 0 : index
    %2 = vector.load %arg5[%c2, %c0_2] : memref<232x128xf32, #tpu.memory_space<vmem>>, vector<1x64xf32>
    %c3 = arith.constant 3 : index
    %c0_3 = arith.constant 0 : index
    %3 = vector.load %arg5[%c3, %c0_3] : memref<232x128xf32, #tpu.memory_space<vmem>>, vector<1x64xf32>
    %c4 = arith.constant 4 : index
    %c0_4 = arith.constant 0 : index
    %4 = vector.load %arg5[%c4, %c0_4] : memref<232x128xf32, #tpu.memory_space<vmem>>, vector<1x64xf32>
    %c5 = arith.constant 5 : index
    %c0_5 = arith.constant 0 : index
    %5 = vector.load %arg5[%c5, %c0_5] : memref<232x128xf32, #tpu.memory_space<vmem>>, vector<1x64xf32>
    %c6 = arith.constant 6 : index
    %c0_6 = arith.constant 0 : index
    %6 = vector.load %arg5[%c6, %c0_6] : memref<232x128xf32, #tpu.memory_space<vmem>>, vector<1x64xf32>
    %c7 = arith.constant 7 : index
    %c0_7 = arith.constant 0 : index
    %7 = vector.load %arg5[%c7, %c0_7] : memref<232x128xf32, #tpu.memory_space<vmem>>, vector<1x64xf32>
    %c8 = arith.constant 8 : index
    %c0_8 = arith.constant 0 : index
    %8 = vector.load %arg5[%c8, %c0_8] : memref<232x128xf32, #tpu.memory_space<vmem>>, vector<64x64xf32>
    %c72 = arith.constant 72 : index
    %c0_9 = arith.constant 0 : index
    %9 = vector.load %arg5[%c72, %c0_9] : memref<232x128xf32, #tpu.memory_space<vmem>>, vector<5x16xf32>
    %c77 = arith.constant 77 : index
    %c0_10 = arith.constant 0 : index
    %10 = vector.load %arg5[%c77, %c0_10] : memref<232x128xf32, #tpu.memory_space<vmem>>, vector<1x16xf32>
    %c78 = arith.constant 78 : index
    %c0_11 = arith.constant 0 : index
    %11 = vector.load %arg5[%c78, %c0_11] : memref<232x128xf32, #tpu.memory_space<vmem>>, vector<1x16xf32>
    %c79 = arith.constant 79 : index
    %c0_12 = arith.constant 0 : index
    %12 = vector.load %arg5[%c79, %c0_12] : memref<232x128xf32, #tpu.memory_space<vmem>>, vector<1x16xf32>
    %c80 = arith.constant 80 : index
    %c0_13 = arith.constant 0 : index
    %13 = vector.load %arg5[%c80, %c0_13] : memref<232x128xf32, #tpu.memory_space<vmem>>, vector<16x16xf32>
    %c96 = arith.constant 96 : index
    %c0_14 = arith.constant 0 : index
    %14 = vector.load %arg5[%c96, %c0_14] : memref<232x128xf32, #tpu.memory_space<vmem>>, vector<1x16xf32>
    %c97 = arith.constant 97 : index
    %c0_15 = arith.constant 0 : index
    %15 = vector.load %arg5[%c97, %c0_15] : memref<232x128xf32, #tpu.memory_space<vmem>>, vector<1x16xf32>
    %c98 = arith.constant 98 : index
    %c0_16 = arith.constant 0 : index
    %16 = vector.load %arg5[%c98, %c0_16] : memref<232x128xf32, #tpu.memory_space<vmem>>, vector<1x16xf32>
    %c99 = arith.constant 99 : index
    %c0_17 = arith.constant 0 : index
    %17 = vector.load %arg5[%c99, %c0_17] : memref<232x128xf32, #tpu.memory_space<vmem>>, vector<1x16xf32>
    %c100 = arith.constant 100 : index
    %c0_18 = arith.constant 0 : index
    %18 = vector.load %arg5[%c100, %c0_18] : memref<232x128xf32, #tpu.memory_space<vmem>>, vector<1x16xf32>
    %c101 = arith.constant 101 : index
    %c0_19 = arith.constant 0 : index
    %19 = vector.load %arg5[%c101, %c0_19] : memref<232x128xf32, #tpu.memory_space<vmem>>, vector<1x16xf32>
    %c102 = arith.constant 102 : index
    %c0_20 = arith.constant 0 : index
    %20 = vector.load %arg5[%c102, %c0_20] : memref<232x128xf32, #tpu.memory_space<vmem>>, vector<1x16xf32>
    %c104 = arith.constant 104 : index
    %c0_21 = arith.constant 0 : index
    %21 = vector.load %arg5[%c104, %c0_21] : memref<232x128xf32, #tpu.memory_space<vmem>>, vector<16x16xf32>
    %c120 = arith.constant 120 : index
    %c0_22 = arith.constant 0 : index
    %22 = vector.load %arg5[%c120, %c0_22] : memref<232x128xf32, #tpu.memory_space<vmem>>, vector<1x16xf32>
    %c121 = arith.constant 121 : index
    %c0_23 = arith.constant 0 : index
    %23 = vector.load %arg5[%c121, %c0_23] : memref<232x128xf32, #tpu.memory_space<vmem>>, vector<1x16xf32>
    %c122 = arith.constant 122 : index
    %c0_24 = arith.constant 0 : index
    %24 = vector.load %arg5[%c122, %c0_24] : memref<232x128xf32, #tpu.memory_space<vmem>>, vector<1x16xf32>
    %c128 = arith.constant 128 : index
    %c0_25 = arith.constant 0 : index
    %25 = vector.load %arg5[%c128, %c0_25] : memref<232x128xf32, #tpu.memory_space<vmem>>, vector<64x32xf32>
    %c192 = arith.constant 192 : index
    %c0_26 = arith.constant 0 : index
    %26 = vector.load %arg5[%c192, %c0_26] : memref<232x128xf32, #tpu.memory_space<vmem>>, vector<16x32xf32>
    %c208 = arith.constant 208 : index
    %c0_27 = arith.constant 0 : index
    %27 = vector.load %arg5[%c208, %c0_27] : memref<232x128xf32, #tpu.memory_space<vmem>>, vector<16x32xf32>
    %c224 = arith.constant 224 : index
    %c0_28 = arith.constant 0 : index
    %28 = vector.load %arg5[%c224, %c0_28] : memref<232x128xf32, #tpu.memory_space<vmem>>, vector<1x32xf32>
    %c225 = arith.constant 225 : index
    %c0_29 = arith.constant 0 : index
    %29 = vector.load %arg5[%c225, %c0_29] : memref<232x128xf32, #tpu.memory_space<vmem>>, vector<1x32xf32>
    %c226 = arith.constant 226 : index
    %c0_30 = arith.constant 0 : index
    %30 = vector.load %arg5[%c226, %c0_30] : memref<232x128xf32, #tpu.memory_space<vmem>>, vector<1x32xf32>
    %c227 = arith.constant 227 : index
    %c0_31 = arith.constant 0 : index
    %31 = vector.load %arg5[%c227, %c0_31] : memref<232x128xf32, #tpu.memory_space<vmem>>, vector<1x32xf32>
    %c228 = arith.constant 228 : index
    %c0_32 = arith.constant 0 : index
    %32 = vector.load %arg5[%c228, %c0_32] : memref<232x128xf32, #tpu.memory_space<vmem>>, vector<1x1xf32>
    %c0_33 = arith.constant 0 : index
    %c0_34 = arith.constant 0 : index
    %33 = vector.load %arg1[%c0_33, %c0_34] : memref<8x16xf32, #tpu.memory_space<vmem>>, vector<8x1xf32>
    %c0_35 = arith.constant 0 : index
    %c1_36 = arith.constant 1 : index
    %34 = vector.load %arg1[%c0_35, %c1_36] : memref<8x16xf32, #tpu.memory_space<vmem>>, vector<8x1xf32>
    %35 = vector.broadcast %33 : vector<8x1xf32> to vector<8x64xf32>
    %36 = vector.broadcast %0 : vector<1x64xf32> to vector<8x64xf32>
    %37 = arith.mulf %35, %36 : vector<8x64xf32>
    %38 = vector.broadcast %34 : vector<8x1xf32> to vector<8x64xf32>
    %39 = vector.broadcast %1 : vector<1x64xf32> to vector<8x64xf32>
    %40 = arith.mulf %38, %39 : vector<8x64xf32>
    %41 = arith.addf %37, %40 : vector<8x64xf32>
    %42 = vector.broadcast %2 : vector<1x64xf32> to vector<8x64xf32>
    %43 = arith.addf %41, %42 : vector<8x64xf32>
    %cst = arith.constant 0.000000e+00 : f32
    %44 = vector.broadcast %cst : f32 to vector<8x64xf32>
    %45 = arith.maximumf %43, %44 : vector<8x64xf32>
    %c0_37 = arith.constant 0 : index
    %c0_38 = arith.constant 0 : index
    %46 = vector.load %arg7[%c0_37, %c0_38] : memref<64x64xf32, #tpu.memory_space<vmem>>, vector<8x64xf32>
    tpu.vector_store %arg7[%c0_37, %c0_38], %45 {strides = array<i32>} : memref<64x64xf32, #tpu.memory_space<vmem>>, vector<8x64xf32>,
    %c0_39 = arith.constant 0 : index
    %c2_40 = arith.constant 2 : index
    %47 = vector.load %arg1[%c0_39, %c2_40] : memref<8x16xf32, #tpu.memory_space<vmem>>, vector<8x1xf32>
    %c0_41 = arith.constant 0 : index
    %c3_42 = arith.constant 3 : index
    %48 = vector.load %arg1[%c0_41, %c3_42] : memref<8x16xf32, #tpu.memory_space<vmem>>, vector<8x1xf32>
    %49 = vector.broadcast %47 : vector<8x1xf32> to vector<8x64xf32>
    %50 = vector.broadcast %0 : vector<1x64xf32> to vector<8x64xf32>
    %51 = arith.mulf %49, %50 : vector<8x64xf32>
    %52 = vector.broadcast %48 : vector<8x1xf32> to vector<8x64xf32>
    %53 = vector.broadcast %1 : vector<1x64xf32> to vector<8x64xf32>
    %54 = arith.mulf %52, %53 : vector<8x64xf32>
    %55 = arith.addf %51, %54 : vector<8x64xf32>
    %56 = vector.broadcast %2 : vector<1x64xf32> to vector<8x64xf32>
    %57 = arith.addf %55, %56 : vector<8x64xf32>
    %cst_43 = arith.constant 0.000000e+00 : f32
    %58 = vector.broadcast %cst_43 : f32 to vector<8x64xf32>
    %59 = arith.maximumf %57, %58 : vector<8x64xf32>
    %c8_44 = arith.constant 8 : index
    %c0_45 = arith.constant 0 : index
    %60 = vector.load %arg7[%c8_44, %c0_45] : memref<64x64xf32, #tpu.memory_space<vmem>>, vector<8x64xf32>
    tpu.vector_store %arg7[%c8_44, %c0_45], %59 {strides = array<i32>} : memref<64x64xf32, #tpu.memory_space<vmem>>, vector<8x64xf32>,
    %c0_46 = arith.constant 0 : index
    %c4_47 = arith.constant 4 : index
    %61 = vector.load %arg1[%c0_46, %c4_47] : memref<8x16xf32, #tpu.memory_space<vmem>>, vector<8x1xf32>
    %c0_48 = arith.constant 0 : index
    %c5_49 = arith.constant 5 : index
    %62 = vector.load %arg1[%c0_48, %c5_49] : memref<8x16xf32, #tpu.memory_space<vmem>>, vector<8x1xf32>
    %63 = vector.broadcast %61 : vector<8x1xf32> to vector<8x64xf32>
    %64 = vector.broadcast %0 : vector<1x64xf32> to vector<8x64xf32>
    %65 = arith.mulf %63, %64 : vector<8x64xf32>
    %66 = vector.broadcast %62 : vector<8x1xf32> to vector<8x64xf32>
    %67 = vector.broadcast %1 : vector<1x64xf32> to vector<8x64xf32>
    %68 = arith.mulf %66, %67 : vector<8x64xf32>
    %69 = arith.addf %65, %68 : vector<8x64xf32>
    %70 = vector.broadcast %2 : vector<1x64xf32> to vector<8x64xf32>
    %71 = arith.addf %69, %70 : vector<8x64xf32>
    %cst_50 = arith.constant 0.000000e+00 : f32
    %72 = vector.broadcast %cst_50 : f32 to vector<8x64xf32>
    %73 = arith.maximumf %71, %72 : vector<8x64xf32>
    %c16 = arith.constant 16 : index
    %c0_51 = arith.constant 0 : index
    %74 = vector.load %arg7[%c16, %c0_51] : memref<64x64xf32, #tpu.memory_space<vmem>>, vector<8x64xf32>
    tpu.vector_store %arg7[%c16, %c0_51], %73 {strides = array<i32>} : memref<64x64xf32, #tpu.memory_space<vmem>>, vector<8x64xf32>,
    %c0_52 = arith.constant 0 : index
    %c6_53 = arith.constant 6 : index
    %75 = vector.load %arg1[%c0_52, %c6_53] : memref<8x16xf32, #tpu.memory_space<vmem>>, vector<8x1xf32>
    %c0_54 = arith.constant 0 : index
    %c7_55 = arith.constant 7 : index
    %76 = vector.load %arg1[%c0_54, %c7_55] : memref<8x16xf32, #tpu.memory_space<vmem>>, vector<8x1xf32>
    %77 = vector.broadcast %75 : vector<8x1xf32> to vector<8x64xf32>
    %78 = vector.broadcast %0 : vector<1x64xf32> to vector<8x64xf32>
    %79 = arith.mulf %77, %78 : vector<8x64xf32>
    %80 = vector.broadcast %76 : vector<8x1xf32> to vector<8x64xf32>
    %81 = vector.broadcast %1 : vector<1x64xf32> to vector<8x64xf32>
    %82 = arith.mulf %80, %81 : vector<8x64xf32>
    %83 = arith.addf %79, %82 : vector<8x64xf32>
    %84 = vector.broadcast %2 : vector<1x64xf32> to vector<8x64xf32>
    %85 = arith.addf %83, %84 : vector<8x64xf32>
    %cst_56 = arith.constant 0.000000e+00 : f32
    %86 = vector.broadcast %cst_56 : f32 to vector<8x64xf32>
    %87 = arith.maximumf %85, %86 : vector<8x64xf32>
    %c24 = arith.constant 24 : index
    %c0_57 = arith.constant 0 : index
    %88 = vector.load %arg7[%c24, %c0_57] : memref<64x64xf32, #tpu.memory_space<vmem>>, vector<8x64xf32>
    tpu.vector_store %arg7[%c24, %c0_57], %87 {strides = array<i32>} : memref<64x64xf32, #tpu.memory_space<vmem>>, vector<8x64xf32>,
    %c0_58 = arith.constant 0 : index
    %c8_59 = arith.constant 8 : index
    %89 = vector.load %arg1[%c0_58, %c8_59] : memref<8x16xf32, #tpu.memory_space<vmem>>, vector<8x1xf32>
    %c0_60 = arith.constant 0 : index
    %c9 = arith.constant 9 : index
    %90 = vector.load %arg1[%c0_60, %c9] : memref<8x16xf32, #tpu.memory_space<vmem>>, vector<8x1xf32>
    %91 = vector.broadcast %89 : vector<8x1xf32> to vector<8x64xf32>
    %92 = vector.broadcast %0 : vector<1x64xf32> to vector<8x64xf32>
    %93 = arith.mulf %91, %92 : vector<8x64xf32>
    %94 = vector.broadcast %90 : vector<8x1xf32> to vector<8x64xf32>
    %95 = vector.broadcast %1 : vector<1x64xf32> to vector<8x64xf32>
    %96 = arith.mulf %94, %95 : vector<8x64xf32>
    %97 = arith.addf %93, %96 : vector<8x64xf32>
    %98 = vector.broadcast %2 : vector<1x64xf32> to vector<8x64xf32>
    %99 = arith.addf %97, %98 : vector<8x64xf32>
    %cst_61 = arith.constant 0.000000e+00 : f32
    %100 = vector.broadcast %cst_61 : f32 to vector<8x64xf32>
    %101 = arith.maximumf %99, %100 : vector<8x64xf32>
    %c32 = arith.constant 32 : index
    %c0_62 = arith.constant 0 : index
    %102 = vector.load %arg7[%c32, %c0_62] : memref<64x64xf32, #tpu.memory_space<vmem>>, vector<8x64xf32>
    tpu.vector_store %arg7[%c32, %c0_62], %101 {strides = array<i32>} : memref<64x64xf32, #tpu.memory_space<vmem>>, vector<8x64xf32>,
    %c0_63 = arith.constant 0 : index
    %c10 = arith.constant 10 : index
    %103 = vector.load %arg1[%c0_63, %c10] : memref<8x16xf32, #tpu.memory_space<vmem>>, vector<8x1xf32>
    %c0_64 = arith.constant 0 : index
    %c11 = arith.constant 11 : index
    %104 = vector.load %arg1[%c0_64, %c11] : memref<8x16xf32, #tpu.memory_space<vmem>>, vector<8x1xf32>
    %105 = vector.broadcast %103 : vector<8x1xf32> to vector<8x64xf32>
    %106 = vector.broadcast %0 : vector<1x64xf32> to vector<8x64xf32>
    %107 = arith.mulf %105, %106 : vector<8x64xf32>
    %108 = vector.broadcast %104 : vector<8x1xf32> to vector<8x64xf32>
    %109 = vector.broadcast %1 : vector<1x64xf32> to vector<8x64xf32>
    %110 = arith.mulf %108, %109 : vector<8x64xf32>
    %111 = arith.addf %107, %110 : vector<8x64xf32>
    %112 = vector.broadcast %2 : vector<1x64xf32> to vector<8x64xf32>
    %113 = arith.addf %111, %112 : vector<8x64xf32>
    %cst_65 = arith.constant 0.000000e+00 : f32
    %114 = vector.broadcast %cst_65 : f32 to vector<8x64xf32>
    %115 = arith.maximumf %113, %114 : vector<8x64xf32>
    %c40 = arith.constant 40 : index
    %c0_66 = arith.constant 0 : index
    %116 = vector.load %arg7[%c40, %c0_66] : memref<64x64xf32, #tpu.memory_space<vmem>>, vector<8x64xf32>
    tpu.vector_store %arg7[%c40, %c0_66], %115 {strides = array<i32>} : memref<64x64xf32, #tpu.memory_space<vmem>>, vector<8x64xf32>,
    %c0_67 = arith.constant 0 : index
    %c12 = arith.constant 12 : index
    %117 = vector.load %arg1[%c0_67, %c12] : memref<8x16xf32, #tpu.memory_space<vmem>>, vector<8x1xf32>
    %c0_68 = arith.constant 0 : index
    %c13 = arith.constant 13 : index
    %118 = vector.load %arg1[%c0_68, %c13] : memref<8x16xf32, #tpu.memory_space<vmem>>, vector<8x1xf32>
    %119 = vector.broadcast %117 : vector<8x1xf32> to vector<8x64xf32>
    %120 = vector.broadcast %0 : vector<1x64xf32> to vector<8x64xf32>
    %121 = arith.mulf %119, %120 : vector<8x64xf32>
    %122 = vector.broadcast %118 : vector<8x1xf32> to vector<8x64xf32>
    %123 = vector.broadcast %1 : vector<1x64xf32> to vector<8x64xf32>
    %124 = arith.mulf %122, %123 : vector<8x64xf32>
    %125 = arith.addf %121, %124 : vector<8x64xf32>
    %126 = vector.broadcast %2 : vector<1x64xf32> to vector<8x64xf32>
    %127 = arith.addf %125, %126 : vector<8x64xf32>
    %cst_69 = arith.constant 0.000000e+00 : f32
    %128 = vector.broadcast %cst_69 : f32 to vector<8x64xf32>
    %129 = arith.maximumf %127, %128 : vector<8x64xf32>
    %c48 = arith.constant 48 : index
    %c0_70 = arith.constant 0 : index
    %130 = vector.load %arg7[%c48, %c0_70] : memref<64x64xf32, #tpu.memory_space<vmem>>, vector<8x64xf32>
    tpu.vector_store %arg7[%c48, %c0_70], %129 {strides = array<i32>} : memref<64x64xf32, #tpu.memory_space<vmem>>, vector<8x64xf32>,
    %c0_71 = arith.constant 0 : index
    %c14 = arith.constant 14 : index
    %131 = vector.load %arg1[%c0_71, %c14] : memref<8x16xf32, #tpu.memory_space<vmem>>, vector<8x1xf32>
    %c0_72 = arith.constant 0 : index
    %c15 = arith.constant 15 : index
    %132 = vector.load %arg1[%c0_72, %c15] : memref<8x16xf32, #tpu.memory_space<vmem>>, vector<8x1xf32>
    %133 = vector.broadcast %131 : vector<8x1xf32> to vector<8x64xf32>
    %134 = vector.broadcast %0 : vector<1x64xf32> to vector<8x64xf32>
    %135 = arith.mulf %133, %134 : vector<8x64xf32>
    %136 = vector.broadcast %132 : vector<8x1xf32> to vector<8x64xf32>
    %137 = vector.broadcast %1 : vector<1x64xf32> to vector<8x64xf32>
    %138 = arith.mulf %136, %137 : vector<8x64xf32>
    %139 = arith.addf %135, %138 : vector<8x64xf32>
    %140 = vector.broadcast %2 : vector<1x64xf32> to vector<8x64xf32>
    %141 = arith.addf %139, %140 : vector<8x64xf32>
    %cst_73 = arith.constant 0.000000e+00 : f32
    %142 = vector.broadcast %cst_73 : f32 to vector<8x64xf32>
    %143 = arith.maximumf %141, %142 : vector<8x64xf32>
    %c56 = arith.constant 56 : index
    %c0_74 = arith.constant 0 : index
    %144 = vector.load %arg7[%c56, %c0_74] : memref<64x64xf32, #tpu.memory_space<vmem>>, vector<8x64xf32>
    tpu.vector_store %arg7[%c56, %c0_74], %143 {strides = array<i32>} : memref<64x64xf32, #tpu.memory_space<vmem>>, vector<8x64xf32>,
    %c0_75 = arith.constant 0 : index
    %c0_76 = arith.constant 0 : index
    %145 = vector.load %arg7[%c0_75, %c0_76] : memref<64x64xf32, #tpu.memory_space<vmem>>, vector<64x64xf32>
    %cst_77 = arith.constant dense<0.000000e+00> : vector<64xf32>
    %146 = vector.multi_reduction <add>, %145, %cst_77 [1] : vector<64x64xf32> to vector<64xf32>
    %147 = vector.shape_cast %146 : vector<64xf32> to vector<64x1xf32>
    %148 = arith.mulf %145, %145 : vector<64x64xf32>
    %cst_78 = arith.constant dense<0.000000e+00> : vector<64xf32>
    %149 = vector.multi_reduction <add>, %148, %cst_78 [1] : vector<64x64xf32> to vector<64xf32>
    %150 = vector.shape_cast %149 : vector<64xf32> to vector<64x1xf32>
    %cst_79 = arith.constant 1.562500e-02 : f32
    %151 = vector.broadcast %cst_79 : f32 to vector<64x1xf32>
    %152 = arith.mulf %147, %151 : vector<64x1xf32>
    %cst_80 = arith.constant 1.562500e-02 : f32
    %153 = vector.broadcast %cst_80 : f32 to vector<64x1xf32>
    %154 = arith.mulf %150, %153 : vector<64x1xf32>
    %155 = arith.mulf %152, %152 : vector<64x1xf32>
    %156 = arith.subf %154, %155 : vector<64x1xf32>
    %cst_81 = arith.constant 0.000000e+00 : f32
    %157 = vector.broadcast %cst_81 : f32 to vector<64x1xf32>
    %158 = arith.maximumf %156, %157 : vector<64x1xf32>
    %159 = vector.broadcast %152 : vector<64x1xf32> to vector<64x64xf32>
    %160 = arith.subf %145, %159 : vector<64x64xf32>
    %cst_82 = arith.constant 9.99999974E-6 : f32
    %161 = vector.broadcast %cst_82 : f32 to vector<64x1xf32>
    %162 = arith.addf %158, %161 : vector<64x1xf32>
    %163 = math.rsqrt %162 : vector<64x1xf32>
    %164 = vector.broadcast %163 : vector<64x1xf32> to vector<64x64xf32>
    %165 = arith.mulf %160, %164 : vector<64x64xf32>
    %166 = vector.broadcast %3 : vector<1x64xf32> to vector<64x64xf32>
    %167 = arith.mulf %165, %166 : vector<64x64xf32>
    %168 = vector.broadcast %4 : vector<1x64xf32> to vector<64x64xf32>
    %169 = arith.addf %167, %168 : vector<64x64xf32>
    %cst_83 = arith.constant dense<0.000000e+00> : vector<64x64xf32>
    %170 = tpu.matmul %169, %8, %cst_83 {dimension_numbers = #tpu.dot_dimension_numbers<[1], [0], [0], [1], [0, 0, 1, 1], [], []>, precision = #tpu.contract_precision<fp32>} : vector<64x64xf32>, vector<64x64xf32>, vector<64x64xf32> -> vector<64x64xf32>
    %171 = vector.broadcast %5 : vector<1x64xf32> to vector<64x64xf32>
    %172 = arith.addf %170, %171 : vector<64x64xf32>
    %cst_84 = arith.constant 0.000000e+00 : f32
    %173 = vector.broadcast %cst_84 : f32 to vector<64x64xf32>
    %174 = arith.maximumf %172, %173 : vector<64x64xf32>
    %cst_85 = arith.constant dense<0.000000e+00> : vector<64xf32>
    %175 = vector.multi_reduction <add>, %174, %cst_85 [1] : vector<64x64xf32> to vector<64xf32>
    %176 = vector.shape_cast %175 : vector<64xf32> to vector<64x1xf32>
    %177 = arith.mulf %174, %174 : vector<64x64xf32>
    %cst_86 = arith.constant dense<0.000000e+00> : vector<64xf32>
    %178 = vector.multi_reduction <add>, %177, %cst_86 [1] : vector<64x64xf32> to vector<64xf32>
    %179 = vector.shape_cast %178 : vector<64xf32> to vector<64x1xf32>
    %cst_87 = arith.constant 1.562500e-02 : f32
    %180 = vector.broadcast %cst_87 : f32 to vector<64x1xf32>
    %181 = arith.mulf %176, %180 : vector<64x1xf32>
    %cst_88 = arith.constant 1.562500e-02 : f32
    %182 = vector.broadcast %cst_88 : f32 to vector<64x1xf32>
    %183 = arith.mulf %179, %182 : vector<64x1xf32>
    %184 = arith.mulf %181, %181 : vector<64x1xf32>
    %185 = arith.subf %183, %184 : vector<64x1xf32>
    %cst_89 = arith.constant 0.000000e+00 : f32
    %186 = vector.broadcast %cst_89 : f32 to vector<64x1xf32>
    %187 = arith.maximumf %185, %186 : vector<64x1xf32>
    %188 = vector.broadcast %181 : vector<64x1xf32> to vector<64x64xf32>
    %189 = arith.subf %174, %188 : vector<64x64xf32>
    %cst_90 = arith.constant 9.99999974E-6 : f32
    %190 = vector.broadcast %cst_90 : f32 to vector<64x1xf32>
    %191 = arith.addf %187, %190 : vector<64x1xf32>
    %192 = math.rsqrt %191 : vector<64x1xf32>
    %193 = vector.broadcast %192 : vector<64x1xf32> to vector<64x64xf32>
    %194 = arith.mulf %189, %193 : vector<64x64xf32>
    %195 = vector.broadcast %6 : vector<1x64xf32> to vector<64x64xf32>
    %196 = arith.mulf %194, %195 : vector<64x64xf32>
    %197 = vector.broadcast %7 : vector<1x64xf32> to vector<64x64xf32>
    %198 = arith.addf %196, %197 : vector<64x64xf32>
    %c0_91 = arith.constant 0 : index
    %c0_92 = arith.constant 0 : index
    %199 = vector.load %arg2[%c0_91, %c0_92] : memref<8x8xf32, #tpu.memory_space<vmem>>, vector<8x8xf32>
    %cst_93 = arith.constant 0.000000e+00 : f32
    %200 = vector.broadcast %cst_93 : f32 to vector<8x64xf32>
    %201 = vector.extract_strided_slice %198 {offsets = [0, 0], sizes = [8, 64], strides = [1, 1]} : vector<64x64xf32> to vector<8x64xf32>
    %202 = vector.extract_strided_slice %199 {offsets = [0, 0], sizes = [8, 1], strides = [1, 1]} : vector<8x8xf32> to vector<8x1xf32>
    %203 = vector.broadcast %202 : vector<8x1xf32> to vector<8x64xf32>
    %204 = arith.mulf %201, %203 : vector<8x64xf32>
    %205 = arith.addf %200, %204 : vector<8x64xf32>
    %206 = vector.extract_strided_slice %198 {offsets = [8, 0], sizes = [8, 64], strides = [1, 1]} : vector<64x64xf32> to vector<8x64xf32>
    %207 = vector.extract_strided_slice %199 {offsets = [0, 1], sizes = [8, 1], strides = [1, 1]} : vector<8x8xf32> to vector<8x1xf32>
    %208 = vector.broadcast %207 : vector<8x1xf32> to vector<8x64xf32>
    %209 = arith.mulf %206, %208 : vector<8x64xf32>
    %210 = arith.addf %205, %209 : vector<8x64xf32>
    %211 = vector.extract_strided_slice %198 {offsets = [16, 0], sizes = [8, 64], strides = [1, 1]} : vector<64x64xf32> to vector<8x64xf32>
    %212 = vector.extract_strided_slice %199 {offsets = [0, 2], sizes = [8, 1], strides = [1, 1]} : vector<8x8xf32> to vector<8x1xf32>
    %213 = vector.broadcast %212 : vector<8x1xf32> to vector<8x64xf32>
    %214 = arith.mulf %211, %213 : vector<8x64xf32>
    %215 = arith.addf %210, %214 : vector<8x64xf32>
    %216 = vector.extract_strided_slice %198 {offsets = [24, 0], sizes = [8, 64], strides = [1, 1]} : vector<64x64xf32> to vector<8x64xf32>
    %217 = vector.extract_strided_slice %199 {offsets = [0, 3], sizes = [8, 1], strides = [1, 1]} : vector<8x8xf32> to vector<8x1xf32>
    %218 = vector.broadcast %217 : vector<8x1xf32> to vector<8x64xf32>
    %219 = arith.mulf %216, %218 : vector<8x64xf32>
    %220 = arith.addf %215, %219 : vector<8x64xf32>
    %221 = vector.extract_strided_slice %198 {offsets = [32, 0], sizes = [8, 64], strides = [1, 1]} : vector<64x64xf32> to vector<8x64xf32>
    %222 = vector.extract_strided_slice %199 {offsets = [0, 4], sizes = [8, 1], strides = [1, 1]} : vector<8x8xf32> to vector<8x1xf32>
    %223 = vector.broadcast %222 : vector<8x1xf32> to vector<8x64xf32>
    %224 = arith.mulf %221, %223 : vector<8x64xf32>
    %225 = arith.addf %220, %224 : vector<8x64xf32>
    %226 = vector.extract_strided_slice %198 {offsets = [40, 0], sizes = [8, 64], strides = [1, 1]} : vector<64x64xf32> to vector<8x64xf32>
    %227 = vector.extract_strided_slice %199 {offsets = [0, 5], sizes = [8, 1], strides = [1, 1]} : vector<8x8xf32> to vector<8x1xf32>
    %228 = vector.broadcast %227 : vector<8x1xf32> to vector<8x64xf32>
    %229 = arith.mulf %226, %228 : vector<8x64xf32>
    %230 = arith.addf %225, %229 : vector<8x64xf32>
    %231 = vector.extract_strided_slice %198 {offsets = [48, 0], sizes = [8, 64], strides = [1, 1]} : vector<64x64xf32> to vector<8x64xf32>
    %232 = vector.extract_strided_slice %199 {offsets = [0, 6], sizes = [8, 1], strides = [1, 1]} : vector<8x8xf32> to vector<8x1xf32>
    %233 = vector.broadcast %232 : vector<8x1xf32> to vector<8x64xf32>
    %234 = arith.mulf %231, %233 : vector<8x64xf32>
    %235 = arith.addf %230, %234 : vector<8x64xf32>
    %236 = vector.extract_strided_slice %198 {offsets = [56, 0], sizes = [8, 64], strides = [1, 1]} : vector<64x64xf32> to vector<8x64xf32>
    %237 = vector.extract_strided_slice %199 {offsets = [0, 7], sizes = [8, 1], strides = [1, 1]} : vector<8x8xf32> to vector<8x1xf32>
    %238 = vector.broadcast %237 : vector<8x1xf32> to vector<8x64xf32>
    %239 = arith.mulf %236, %238 : vector<8x64xf32>
    %240 = arith.addf %235, %239 : vector<8x64xf32>
    %cst_94 = arith.constant dense<0.000000e+00> : vector<8xf32>
    %241 = vector.multi_reduction <add>, %199, %cst_94 [1] : vector<8x8xf32> to vector<8xf32>
    %242 = vector.shape_cast %241 : vector<8xf32> to vector<8x1xf32>
    %cst_95 = arith.constant 1.000000e+00 : f32
    %243 = vector.broadcast %cst_95 : f32 to vector<8x1xf32>
    %244 = arith.maximumf %242, %243 : vector<8x1xf32>
    %245 = vector.broadcast %244 : vector<8x1xf32> to vector<8x64xf32>
    %246 = arith.divf %240, %245 : vector<8x64xf32>
    %c0_96 = arith.constant 0 : index
    %c0_97 = arith.constant 0 : index
    %247 = vector.load %arg3[%c0_96, %c0_97] : memref<8x5xf32, #tpu.memory_space<vmem>>, vector<8x5xf32>
    %248 = vector.extract_strided_slice %247 {offsets = [0, 0], sizes = [8, 1], strides = [1, 1]} : vector<8x5xf32> to vector<8x1xf32>
    %249 = vector.extract_strided_slice %9 {offsets = [0, 0], sizes = [1, 16], strides = [1, 1]} : vector<5x16xf32> to vector<1x16xf32>
    %250 = vector.broadcast %248 : vector<8x1xf32> to vector<8x16xf32>
    %251 = vector.broadcast %249 : vector<1x16xf32> to vector<8x16xf32>
    %252 = arith.mulf %250, %251 : vector<8x16xf32>
    %253 = vector.broadcast %10 : vector<1x16xf32> to vector<8x16xf32>
    %254 = arith.addf %252, %253 : vector<8x16xf32>
    %255 = vector.extract_strided_slice %247 {offsets = [0, 1], sizes = [8, 1], strides = [1, 1]} : vector<8x5xf32> to vector<8x1xf32>
    %256 = vector.extract_strided_slice %9 {offsets = [1, 0], sizes = [1, 16], strides = [1, 1]} : vector<5x16xf32> to vector<1x16xf32>
    %257 = vector.broadcast %255 : vector<8x1xf32> to vector<8x16xf32>
    %258 = vector.broadcast %256 : vector<1x16xf32> to vector<8x16xf32>
    %259 = arith.mulf %257, %258 : vector<8x16xf32>
    %260 = arith.addf %254, %259 : vector<8x16xf32>
    %261 = vector.extract_strided_slice %247 {offsets = [0, 2], sizes = [8, 1], strides = [1, 1]} : vector<8x5xf32> to vector<8x1xf32>
    %262 = vector.extract_strided_slice %9 {offsets = [2, 0], sizes = [1, 16], strides = [1, 1]} : vector<5x16xf32> to vector<1x16xf32>
    %263 = vector.broadcast %261 : vector<8x1xf32> to vector<8x16xf32>
    %264 = vector.broadcast %262 : vector<1x16xf32> to vector<8x16xf32>
    %265 = arith.mulf %263, %264 : vector<8x16xf32>
    %266 = arith.addf %260, %265 : vector<8x16xf32>
    %267 = vector.extract_strided_slice %247 {offsets = [0, 3], sizes = [8, 1], strides = [1, 1]} : vector<8x5xf32> to vector<8x1xf32>
    %268 = vector.extract_strided_slice %9 {offsets = [3, 0], sizes = [1, 16], strides = [1, 1]} : vector<5x16xf32> to vector<1x16xf32>
    %269 = vector.broadcast %267 : vector<8x1xf32> to vector<8x16xf32>
    %270 = vector.broadcast %268 : vector<1x16xf32> to vector<8x16xf32>
    %271 = arith.mulf %269, %270 : vector<8x16xf32>
    %272 = arith.addf %266, %271 : vector<8x16xf32>
    %273 = vector.extract_strided_slice %247 {offsets = [0, 4], sizes = [8, 1], strides = [1, 1]} : vector<8x5xf32> to vector<8x1xf32>
    %274 = vector.extract_strided_slice %9 {offsets = [4, 0], sizes = [1, 16], strides = [1, 1]} : vector<5x16xf32> to vector<1x16xf32>
    %275 = vector.broadcast %273 : vector<8x1xf32> to vector<8x16xf32>
    %276 = vector.broadcast %274 : vector<1x16xf32> to vector<8x16xf32>
    %277 = arith.mulf %275, %276 : vector<8x16xf32>
    %278 = arith.addf %272, %277 : vector<8x16xf32>
    %cst_98 = arith.constant 0.000000e+00 : f32
    %279 = vector.broadcast %cst_98 : f32 to vector<8x16xf32>
    %280 = arith.maximumf %278, %279 : vector<8x16xf32>
    %cst_99 = arith.constant dense<0.000000e+00> : vector<8xf32>
    %281 = vector.multi_reduction <add>, %280, %cst_99 [1] : vector<8x16xf32> to vector<8xf32>
    %282 = vector.shape_cast %281 : vector<8xf32> to vector<8x1xf32>
    %283 = arith.mulf %280, %280 : vector<8x16xf32>
    %cst_100 = arith.constant dense<0.000000e+00> : vector<8xf32>
    %284 = vector.multi_reduction <add>, %283, %cst_100 [1] : vector<8x16xf32> to vector<8xf32>
    %285 = vector.shape_cast %284 : vector<8xf32> to vector<8x1xf32>
    %cst_101 = arith.constant 6.250000e-02 : f32
    %286 = vector.broadcast %cst_101 : f32 to vector<8x1xf32>
    %287 = arith.mulf %282, %286 : vector<8x1xf32>
    %cst_102 = arith.constant 6.250000e-02 : f32
    %288 = vector.broadcast %cst_102 : f32 to vector<8x1xf32>
    %289 = arith.mulf %285, %288 : vector<8x1xf32>
    %290 = arith.mulf %287, %287 : vector<8x1xf32>
    %291 = arith.subf %289, %290 : vector<8x1xf32>
    %cst_103 = arith.constant 0.000000e+00 : f32
    %292 = vector.broadcast %cst_103 : f32 to vector<8x1xf32>
    %293 = arith.maximumf %291, %292 : vector<8x1xf32>
    %294 = vector.broadcast %287 : vector<8x1xf32> to vector<8x16xf32>
    %295 = arith.subf %280, %294 : vector<8x16xf32>
    %cst_104 = arith.constant 9.99999974E-6 : f32
    %296 = vector.broadcast %cst_104 : f32 to vector<8x1xf32>
    %297 = arith.addf %293, %296 : vector<8x1xf32>
    %298 = math.rsqrt %297 : vector<8x1xf32>
    %299 = vector.broadcast %298 : vector<8x1xf32> to vector<8x16xf32>
    %300 = arith.mulf %295, %299 : vector<8x16xf32>
    %301 = vector.broadcast %11 : vector<1x16xf32> to vector<8x16xf32>
    %302 = arith.mulf %300, %301 : vector<8x16xf32>
    %303 = vector.broadcast %12 : vector<1x16xf32> to vector<8x16xf32>
    %304 = arith.addf %302, %303 : vector<8x16xf32>
    %cst_105 = arith.constant dense<0.000000e+00> : vector<8x16xf32>
    %305 = tpu.matmul %304, %13, %cst_105 {dimension_numbers = #tpu.dot_dimension_numbers<[1], [0], [0], [1], [0, 0, 1, 1], [], []>, precision = #tpu.contract_precision<fp32>} : vector<8x16xf32>, vector<16x16xf32>, vector<8x16xf32> -> vector<8x16xf32>
    %306 = vector.broadcast %14 : vector<1x16xf32> to vector<8x16xf32>
    %307 = arith.addf %305, %306 : vector<8x16xf32>
    %cst_106 = arith.constant 0.000000e+00 : f32
    %308 = vector.broadcast %cst_106 : f32 to vector<8x16xf32>
    %309 = arith.maximumf %307, %308 : vector<8x16xf32>
    %cst_107 = arith.constant dense<0.000000e+00> : vector<8xf32>
    %310 = vector.multi_reduction <add>, %309, %cst_107 [1] : vector<8x16xf32> to vector<8xf32>
    %311 = vector.shape_cast %310 : vector<8xf32> to vector<8x1xf32>
    %312 = arith.mulf %309, %309 : vector<8x16xf32>
    %cst_108 = arith.constant dense<0.000000e+00> : vector<8xf32>
    %313 = vector.multi_reduction <add>, %312, %cst_108 [1] : vector<8x16xf32> to vector<8xf32>
    %314 = vector.shape_cast %313 : vector<8xf32> to vector<8x1xf32>
    %cst_109 = arith.constant 6.250000e-02 : f32
    %315 = vector.broadcast %cst_109 : f32 to vector<8x1xf32>
    %316 = arith.mulf %311, %315 : vector<8x1xf32>
    %cst_110 = arith.constant 6.250000e-02 : f32
    %317 = vector.broadcast %cst_110 : f32 to vector<8x1xf32>
    %318 = arith.mulf %314, %317 : vector<8x1xf32>
    %319 = arith.mulf %316, %316 : vector<8x1xf32>
    %320 = arith.subf %318, %319 : vector<8x1xf32>
    %cst_111 = arith.constant 0.000000e+00 : f32
    %321 = vector.broadcast %cst_111 : f32 to vector<8x1xf32>
    %322 = arith.maximumf %320, %321 : vector<8x1xf32>
    %323 = vector.broadcast %316 : vector<8x1xf32> to vector<8x16xf32>
    %324 = arith.subf %309, %323 : vector<8x16xf32>
    %cst_112 = arith.constant 9.99999974E-6 : f32
    %325 = vector.broadcast %cst_112 : f32 to vector<8x1xf32>
    %326 = arith.addf %322, %325 : vector<8x1xf32>
    %327 = math.rsqrt %326 : vector<8x1xf32>
    %328 = vector.broadcast %327 : vector<8x1xf32> to vector<8x16xf32>
    %329 = arith.mulf %324, %328 : vector<8x16xf32>
    %330 = vector.broadcast %15 : vector<1x16xf32> to vector<8x16xf32>
    %331 = arith.mulf %329, %330 : vector<8x16xf32>
    %332 = vector.broadcast %16 : vector<1x16xf32> to vector<8x16xf32>
    %333 = arith.addf %331, %332 : vector<8x16xf32>
    %c0_113 = arith.constant 0 : index
    %c0_114 = arith.constant 0 : index
    %334 = vector.load %arg4[%c0_113, %c0_114] : memref<8x1xf32, #tpu.memory_space<vmem>>, vector<8x1xf32>
    %335 = vector.broadcast %334 : vector<8x1xf32> to vector<8x16xf32>
    %336 = vector.broadcast %17 : vector<1x16xf32> to vector<8x16xf32>
    %337 = arith.mulf %335, %336 : vector<8x16xf32>
    %338 = vector.broadcast %18 : vector<1x16xf32> to vector<8x16xf32>
    %339 = arith.addf %337, %338 : vector<8x16xf32>
    %cst_115 = arith.constant 0.000000e+00 : f32
    %340 = vector.broadcast %cst_115 : f32 to vector<8x16xf32>
    %341 = arith.maximumf %339, %340 : vector<8x16xf32>
    %cst_116 = arith.constant dense<0.000000e+00> : vector<8xf32>
    %342 = vector.multi_reduction <add>, %341, %cst_116 [1] : vector<8x16xf32> to vector<8xf32>
    %343 = vector.shape_cast %342 : vector<8xf32> to vector<8x1xf32>
    %344 = arith.mulf %341, %341 : vector<8x16xf32>
    %cst_117 = arith.constant dense<0.000000e+00> : vector<8xf32>
    %345 = vector.multi_reduction <add>, %344, %cst_117 [1] : vector<8x16xf32> to vector<8xf32>
    %346 = vector.shape_cast %345 : vector<8xf32> to vector<8x1xf32>
    %cst_118 = arith.constant 6.250000e-02 : f32
    %347 = vector.broadcast %cst_118 : f32 to vector<8x1xf32>
    %348 = arith.mulf %343, %347 : vector<8x1xf32>
    %cst_119 = arith.constant 6.250000e-02 : f32
    %349 = vector.broadcast %cst_119 : f32 to vector<8x1xf32>
    %350 = arith.mulf %346, %349 : vector<8x1xf32>
    %351 = arith.mulf %348, %348 : vector<8x1xf32>
    %352 = arith.subf %350, %351 : vector<8x1xf32>
    %cst_120 = arith.constant 0.000000e+00 : f32
    %353 = vector.broadcast %cst_120 : f32 to vector<8x1xf32>
    %354 = arith.maximumf %352, %353 : vector<8x1xf32>
    %355 = vector.broadcast %348 : vector<8x1xf32> to vector<8x16xf32>
    %356 = arith.subf %341, %355 : vector<8x16xf32>
    %cst_121 = arith.constant 9.99999974E-6 : f32
    %357 = vector.broadcast %cst_121 : f32 to vector<8x1xf32>
    %358 = arith.addf %354, %357 : vector<8x1xf32>
    %359 = math.rsqrt %358 : vector<8x1xf32>
    %360 = vector.broadcast %359 : vector<8x1xf32> to vector<8x16xf32>
    %361 = arith.mulf %356, %360 : vector<8x16xf32>
    %362 = vector.broadcast %19 : vector<1x16xf32> to vector<8x16xf32>
    %363 = arith.mulf %361, %362 : vector<8x16xf32>
    %364 = vector.broadcast %20 : vector<1x16xf32> to vector<8x16xf32>
    %365 = arith.addf %363, %364 : vector<8x16xf32>
    %cst_122 = arith.constant dense<0.000000e+00> : vector<8x16xf32>
    %366 = tpu.matmul %365, %21, %cst_122 {dimension_numbers = #tpu.dot_dimension_numbers<[1], [0], [0], [1], [0, 0, 1, 1], [], []>, precision = #tpu.contract_precision<fp32>} : vector<8x16xf32>, vector<16x16xf32>, vector<8x16xf32> -> vector<8x16xf32>
    %367 = vector.broadcast %22 : vector<1x16xf32> to vector<8x16xf32>
    %368 = arith.addf %366, %367 : vector<8x16xf32>
    %cst_123 = arith.constant 0.000000e+00 : f32
    %369 = vector.broadcast %cst_123 : f32 to vector<8x16xf32>
    %370 = arith.maximumf %368, %369 : vector<8x16xf32>
    %cst_124 = arith.constant dense<0.000000e+00> : vector<8xf32>
    %371 = vector.multi_reduction <add>, %370, %cst_124 [1] : vector<8x16xf32> to vector<8xf32>
    %372 = vector.shape_cast %371 : vector<8xf32> to vector<8x1xf32>
    %373 = arith.mulf %370, %370 : vector<8x16xf32>
    %cst_125 = arith.constant dense<0.000000e+00> : vector<8xf32>
    %374 = vector.multi_reduction <add>, %373, %cst_125 [1] : vector<8x16xf32> to vector<8xf32>
    %375 = vector.shape_cast %374 : vector<8xf32> to vector<8x1xf32>
    %cst_126 = arith.constant 6.250000e-02 : f32
    %376 = vector.broadcast %cst_126 : f32 to vector<8x1xf32>
    %377 = arith.mulf %372, %376 : vector<8x1xf32>
    %cst_127 = arith.constant 6.250000e-02 : f32
    %378 = vector.broadcast %cst_127 : f32 to vector<8x1xf32>
    %379 = arith.mulf %375, %378 : vector<8x1xf32>
    %380 = arith.mulf %377, %377 : vector<8x1xf32>
    %381 = arith.subf %379, %380 : vector<8x1xf32>
    %cst_128 = arith.constant 0.000000e+00 : f32
    %382 = vector.broadcast %cst_128 : f32 to vector<8x1xf32>
    %383 = arith.maximumf %381, %382 : vector<8x1xf32>
    %384 = vector.broadcast %377 : vector<8x1xf32> to vector<8x16xf32>
    %385 = arith.subf %370, %384 : vector<8x16xf32>
    %cst_129 = arith.constant 9.99999974E-6 : f32
    %386 = vector.broadcast %cst_129 : f32 to vector<8x1xf32>
    %387 = arith.addf %383, %386 : vector<8x1xf32>
    %388 = math.rsqrt %387 : vector<8x1xf32>
    %389 = vector.broadcast %388 : vector<8x1xf32> to vector<8x16xf32>
    %390 = arith.mulf %385, %389 : vector<8x16xf32>
    %391 = vector.broadcast %23 : vector<1x16xf32> to vector<8x16xf32>
    %392 = arith.mulf %390, %391 : vector<8x16xf32>
    %393 = vector.broadcast %24 : vector<1x16xf32> to vector<8x16xf32>
    %394 = arith.addf %392, %393 : vector<8x16xf32>
    %cst_130 = arith.constant dense<0.000000e+00> : vector<8x32xf32>
    %395 = tpu.matmul %246, %25, %cst_130 {dimension_numbers = #tpu.dot_dimension_numbers<[1], [0], [0], [1], [0, 0, 1, 1], [], []>, precision = #tpu.contract_precision<fp32>} : vector<8x64xf32>, vector<64x32xf32>, vector<8x32xf32> -> vector<8x32xf32>
    %cst_131 = arith.constant dense<0.000000e+00> : vector<8x32xf32>
    %396 = tpu.matmul %333, %26, %cst_131 {dimension_numbers = #tpu.dot_dimension_numbers<[1], [0], [0], [1], [0, 0, 1, 1], [], []>, precision = #tpu.contract_precision<fp32>} : vector<8x16xf32>, vector<16x32xf32>, vector<8x32xf32> -> vector<8x32xf32>
    %397 = arith.addf %395, %396 : vector<8x32xf32>
    %cst_132 = arith.constant dense<0.000000e+00> : vector<8x32xf32>
    %398 = tpu.matmul %394, %27, %cst_132 {dimension_numbers = #tpu.dot_dimension_numbers<[1], [0], [0], [1], [0, 0, 1, 1], [], []>, precision = #tpu.contract_precision<fp32>} : vector<8x16xf32>, vector<16x32xf32>, vector<8x32xf32> -> vector<8x32xf32>
    %399 = arith.addf %397, %398 : vector<8x32xf32>
    %400 = vector.broadcast %28 : vector<1x32xf32> to vector<8x32xf32>
    %401 = arith.addf %399, %400 : vector<8x32xf32>
    %cst_133 = arith.constant 0.000000e+00 : f32
    %402 = vector.broadcast %cst_133 : f32 to vector<8x32xf32>
    %403 = arith.maximumf %401, %402 : vector<8x32xf32>
    %cst_134 = arith.constant dense<0.000000e+00> : vector<8xf32>
    %404 = vector.multi_reduction <add>, %403, %cst_134 [1] : vector<8x32xf32> to vector<8xf32>
    %405 = vector.shape_cast %404 : vector<8xf32> to vector<8x1xf32>
    %406 = arith.mulf %403, %403 : vector<8x32xf32>
    %cst_135 = arith.constant dense<0.000000e+00> : vector<8xf32>
    %407 = vector.multi_reduction <add>, %406, %cst_135 [1] : vector<8x32xf32> to vector<8xf32>
    %408 = vector.shape_cast %407 : vector<8xf32> to vector<8x1xf32>
    %cst_136 = arith.constant 3.125000e-02 : f32
    %409 = vector.broadcast %cst_136 : f32 to vector<8x1xf32>
    %410 = arith.mulf %405, %409 : vector<8x1xf32>
    %cst_137 = arith.constant 3.125000e-02 : f32
    %411 = vector.broadcast %cst_137 : f32 to vector<8x1xf32>
    %412 = arith.mulf %408, %411 : vector<8x1xf32>
    %413 = arith.mulf %410, %410 : vector<8x1xf32>
    %414 = arith.subf %412, %413 : vector<8x1xf32>
    %cst_138 = arith.constant 0.000000e+00 : f32
    %415 = vector.broadcast %cst_138 : f32 to vector<8x1xf32>
    %416 = arith.maximumf %414, %415 : vector<8x1xf32>
    %417 = vector.broadcast %410 : vector<8x1xf32> to vector<8x32xf32>
    %418 = arith.subf %403, %417 : vector<8x32xf32>
    %cst_139 = arith.constant 9.99999974E-6 : f32
    %419 = vector.broadcast %cst_139 : f32 to vector<8x1xf32>
    %420 = arith.addf %416, %419 : vector<8x1xf32>
    %421 = math.rsqrt %420 : vector<8x1xf32>
    %422 = vector.broadcast %421 : vector<8x1xf32> to vector<8x32xf32>
    %423 = arith.mulf %418, %422 : vector<8x32xf32>
    %424 = vector.broadcast %29 : vector<1x32xf32> to vector<8x32xf32>
    %425 = arith.mulf %423, %424 : vector<8x32xf32>
    %426 = vector.broadcast %30 : vector<1x32xf32> to vector<8x32xf32>
    %427 = arith.addf %425, %426 : vector<8x32xf32>
    %428 = vector.broadcast %31 : vector<1x32xf32> to vector<8x32xf32>
    %429 = arith.mulf %427, %428 : vector<8x32xf32>
    %cst_140 = arith.constant dense<0.000000e+00> : vector<8xf32>
    %430 = vector.multi_reduction <add>, %429, %cst_140 [1] : vector<8x32xf32> to vector<8xf32>
    %431 = vector.shape_cast %430 : vector<8xf32> to vector<8x1xf32>
    %432 = vector.broadcast %32 : vector<1x1xf32> to vector<8x1xf32>
    %433 = arith.addf %431, %432 : vector<8x1xf32>
    %434 = arith.addf %334, %433 : vector<8x1xf32>
    %c0_141 = arith.constant 0 : index
    %c0_142 = arith.constant 0 : index
    %435 = vector.load %arg6[%c0_141, %c0_142] : memref<8x1xf32, #tpu.memory_space<vmem>>, vector<8x1xf32>
    tpu.vector_store %arg6[%c0_141, %c0_142], %434 {strides = array<i32>} : memref<8x1xf32, #tpu.memory_space<vmem>>, vector<8x1xf32>,
    return
  }
  func.func @transform_0(%arg0: i32) -> (i32, i32) {
    %c0_i32 = arith.constant 0 : i32
    %c0_i32_0 = arith.constant 0 : i32
    return %arg0, %c0_i32 : i32, i32
  }
  func.func @transform_1(%arg0: i32) -> (i32, i32) {
    %c0_i32 = arith.constant 0 : i32
    %c0_i32_0 = arith.constant 0 : i32
    return %arg0, %c0_i32 : i32, i32
  }
  func.func @transform_2(%arg0: i32) -> (i32, i32) {
    %c0_i32 = arith.constant 0 : i32
    %c0_i32_0 = arith.constant 0 : i32
    return %arg0, %c0_i32 : i32, i32
  }
  func.func @transform_3(%arg0: i32) -> (i32, i32) {
    %c0_i32 = arith.constant 0 : i32
    %c0_i32_0 = arith.constant 0 : i32
    return %arg0, %c0_i32 : i32, i32
  }
  func.func @transform_4(%arg0: i32) -> (i32, i32) {
    %c0_i32 = arith.constant 0 : i32
    %c0_i32_0 = arith.constant 0 : i32
    %c0_i32_1 = arith.constant 0 : i32
    return %c0_i32, %c0_i32_0 : i32, i32
  }
  func.func @transform_5(%arg0: i32) -> (i32, i32) {
    %c0_i32 = arith.constant 0 : i32
    %c0_i32_0 = arith.constant 0 : i32
    return %arg0, %c0_i32 : i32, i32
  }
}

</mosaic_0001>

<llo_original>
// kernel: underwater_encoder.1
$region0: #{underwater_encoder.1}
  #allocation0 [shape = 'u32[]', space=smem, size = 0x4, offset = 0x4, fixed_abs, tag = 'smem constant byte address 0x4 - core index']
  #allocation1 [shape = 'u32[144,128]{1,0:T(1,128)}', space=vmem, size = 0x12000, scoped, tag = 'internal scratch']
  #allocation2 [shape = 'f32[64,64]{1,0:T(8,128)}', space=vmem, size = 0x8000, scoped, tag = 'scratch operand']
  %s0 = inlined_call_operand.vmem [shape: f32[8,16], index: 0, kind: input, shape index: {}]
  %s1 = inlined_call_operand.vmem [shape: f32[8,8], index: 1, kind: input, shape index: {}]
  %s2 = inlined_call_operand.vmem [shape: f32[8,5], index: 2, kind: input, shape index: {}]
  %s3 = inlined_call_operand.vmem [shape: f32[8,1], index: 3, kind: input, shape index: {}]
  %s4 = inlined_call_operand.hbm [shape: f32[232,128], index: 4, kind: input, shape index: {}]
  %s5 = inlined_call_operand.vmem [shape: f32[8,1], index: 5, kind: output, shape index: {}]
  %s6 = sld [smem:[#allocation0]]
  $region34: #{underwater_encoder.1} parent=0
    _
  %s8 = ssub.s32 1, %s6
  %s9 = scalar_select 0, %s8, %s6
  $region1: #{underwater_encoder.1} parent=0
    #allocation3 [shape = 'u8[118784]{0}', space=vmem, size = 0x1d000, scoped, tag = 'input window, operand 4, single buffered']
    #allocation4 [shape = 's32[1]{0}', space=sflag, size = 0x4, scoped, tag = 'scoped memory for underwater_encoder.1']
    %10 = vsyncpa [#allocation4], 0
    // Predicated region
    $region2: #{underwater_encoder.1} parent=1 // pred_check
      _
    $region3: #{underwater_encoder.1} parent=1 // pred_check_branch
      %12 = sbr.rel (0) target = $region5
    $region4: #{underwater_encoder.1} parent=1 // pred_region
      _
    $region5: #{underwater_encoder.1} parent=1 // pred_fallthru
      _
    // Predicated region
    $region6: #{underwater_encoder.1} parent=1 // pred_check
      _
    $region7: #{underwater_encoder.1} parent=1 // pred_check_branch
      %14 = sbr.rel (0) target = $region9
    $region8: #{underwater_encoder.1} parent=1 // pred_region
      _
    $region9: #{underwater_encoder.1} parent=1 // pred_fallthru
      _
    // Predicated region
    $region10: #{underwater_encoder.1} parent=1 // pred_check
      _
    $region11: #{underwater_encoder.1} parent=1 // pred_check_branch
      %16 = sbr.rel (0) target = $region13
    $region12: #{underwater_encoder.1} parent=1 // pred_region
      _
    $region13: #{underwater_encoder.1} parent=1 // pred_fallthru
      _
    // Predicated region
    $region14: #{underwater_encoder.1} parent=1 // pred_check
      _
    $region15: #{underwater_encoder.1} parent=1 // pred_check_branch
      %18 = sbr.rel (0) target = $region17
    $region16: #{underwater_encoder.1} parent=1 // pred_region
      _
    $region17: #{underwater_encoder.1} parent=1 // pred_fallthru
      _
    // Predicated region
    $region18: #{underwater_encoder.1} parent=1 // pred_check
      _
    $region19: #{underwater_encoder.1} parent=1 // pred_check_branch
      %20 = sbr.rel (0) target = $region21
    $region20: #{underwater_encoder.1} parent=1 // pred_region
      %s22 = ssub.s32 3712, 3712
      %23 = vsyncadd [#allocation4], %s22
      %s24 = sshll.u32 [#allocation3], 4
      %s25 = int_to_ptr.vmem [resolvable:$true] %s24
      %30 = dma.hbm_to_vmem [thread:$0]  %s4, 3712, %s25, [#allocation4], 128, 128, 8
    $region21: #{underwater_encoder.1} parent=1 // pred_fallthru
      _
    // Predicated region
    $region22: #{underwater_encoder.1} parent=1 // pred_check
      _
    $region23: #{underwater_encoder.1} parent=1 // pred_check_branch
      %32 = sbr.rel (0) target = $region25
    $region24: #{underwater_encoder.1} parent=1 // pred_region
      %33 = dma.done [#allocation4], 3712
    $region25: #{underwater_encoder.1} parent=1 // pred_fallthru
      _
    %v34 = vld [vmem:[#allocation3] sm:$0x1]
    %v35 = vld [vmem:[#allocation3 + $0x1] sm:$0x1]
    %v36 = vld [vmem:[#allocation3 + $0x2] sm:$0x1]
    %v37 = vld [vmem:[#allocation3 + $0x3] sm:$0x1]
    %v38 = vld [vmem:[#allocation3 + $0x4] sm:$0x1]
    %v39 = vld [vmem:[#allocation3 + $0x5] sm:$0x1]
    %v40 = vld [vmem:[#allocation3 + $0x6] sm:$0x1]
    %v41 = vld [vmem:[#allocation3 + $0x7] sm:$0x1]
    %v42 = vld [vmem:[#allocation3 + $0x8] sm:$0xff]
    %v43 = vld [vmem:[#allocation3 + $0x10] sm:$0xff]
    %v44 = vld [vmem:[#allocation3 + $0x18] sm:$0xff]
    %v45 = vld [vmem:[#allocation3 + $0x20] sm:$0xff]
    %v46 = vld [vmem:[#allocation3 + $0x28] sm:$0xff]
    %v47 = vld [vmem:[#allocation3 + $0x30] sm:$0xff]
    %v48 = vld [vmem:[#allocation3 + $0x38] sm:$0xff]
    %v49 = vld [vmem:[#allocation3 + $0x40] sm:$0xff]
    %v50 = vld [vmem:[#allocation3 + $0x48] sm:$0x1f]
    %v51 = vld [vmem:[#allocation3 + $0x4d] sm:$0x1]
    %v52 = vld [vmem:[#allocation3 + $0x4e] sm:$0x1]
    %v53 = vld [vmem:[#allocation3 + $0x4f] sm:$0x1]
    %v54 = vld [vmem:[#allocation3 + $0x50] sm:$0xff]
    %v55 = vld [vmem:[#allocation3 + $0x58] sm:$0xff]
    %v56 = vld [vmem:[#allocation3 + $0x60] sm:$0x1]
    %v57 = vld [vmem:[#allocation3 + $0x61] sm:$0x1]
    %v58 = vld [vmem:[#allocation3 + $0x62] sm:$0x1]
    %v59 = vld [vmem:[#allocation3 + $0x63] sm:$0x1]
    %v60 = vld [vmem:[#allocation3 + $0x64] sm:$0x1]
    %v61 = vld [vmem:[#allocation3 + $0x65] sm:$0x1]
    %v62 = vld [vmem:[#allocation3 + $0x66] sm:$0x1]
    %v63 = vld [vmem:[#allocation3 + $0x68] sm:$0xff]
    %v64 = vld [vmem:[#allocation3 + $0x70] sm:$0xff]
    %v65 = vld [vmem:[#allocation3 + $0x78] sm:$0x1]
    %v66 = vld [vmem:[#allocation3 + $0x79] sm:$0x1]
    %v67 = vld [vmem:[#allocation3 + $0x7a] sm:$0x1]
    %v68 = vld [vmem:[#allocation3 + $0x80] sm:$0xff]
    %v69 = vld [vmem:[#allocation3 + $0x88] sm:$0xff]
    %v70 = vld [vmem:[#allocation3 + $0x90] sm:$0xff]
    %v71 = vld [vmem:[#allocation3 + $0x98] sm:$0xff]
    %v72 = vld [vmem:[#allocation3 + $0xa0] sm:$0xff]
    %v73 = vld [vmem:[#allocation3 + $0xa8] sm:$0xff]
    %v74 = vld [vmem:[#allocation3 + $0xb0] sm:$0xff]
    %v75 = vld [vmem:[#allocation3 + $0xb8] sm:$0xff]
    %v76 = vld [vmem:[#allocation3 + $0xc0] sm:$0xff]
    %v77 = vld [vmem:[#allocation3 + $0xc8] sm:$0xff]
    %v78 = vld [vmem:[#allocation3 + $0xd0] sm:$0xff]
    %v79 = vld [vmem:[#allocation3 + $0xd8] sm:$0xff]
    %v80 = vld [vmem:[#allocation3 + $0xe0] sm:$0x1]
    %v81 = vld [vmem:[#allocation3 + $0xe1] sm:$0x1]
    %v82 = vld [vmem:[#allocation3 + $0xe2] sm:$0x1]
    %v83 = vld [vmem:[#allocation3 + $0xe3] sm:$0x1]
    %v84 = vld [vmem:[#allocation3 + $0xe4] sm:$0x1]
    %v85 = vld [vmem:[%s0] sm:$0xff]
    %87 = vset.pattern.permute.xlu0 0
    %88 = vperm.xlu0 %87, %v85
    %v89 = vpop.permute.xlu0 %88
    %v91 = vlaneseq
    %v92 = vshrl.u32 %v91, 7
    %v93 = vsub.s32 0, %v92
    %v94 = vrot.slane %v34, %v93
    %v95 = vmul.f32 %v89, %v94
    %96 = vset.pattern.permute.xlu0 1
    %97 = vperm.xlu0 %96, %v85
    %v98 = vpop.permute.xlu0 %97
    %v100 = vlaneseq
    %v101 = vshrl.u32 %v100, 7
    %v102 = vsub.s32 0, %v101
    %v103 = vrot.slane %v35, %v102
    %v104 = vmul.f32 %v98, %v103
    %v105 = vadd.f32 %v95, %v104
    %v106 = vlaneseq
    %v107 = vshrl.u32 %v106, 7
    %v108 = vsub.s32 0, %v107
    %v109 = vrot.slane %v36, %v108
    %v110 = vadd.f32 %v105, %v109
    %v111 = vmax.f32 %v110, 0.0
    %vm112 = vcmask 523264
    %113 = vst.msk [vmem:[#allocation2] sm:$0xff] %vm112, %v111
    %v114 = vld [vmem:[%s0] sm:$0xff]
    %116 = vset.pattern.permute.xlu0 2
    %117 = vperm.xlu0 %116, %v114
    %v118 = vpop.permute.xlu0 %117
    %v120 = vmul.f32 %v118, %v94
    %121 = vset.pattern.permute.xlu0 3
    %122 = vperm.xlu0 %121, %v114
    %v123 = vpop.permute.xlu0 %122
    %v125 = vmul.f32 %v123, %v103
    %v126 = vadd.f32 %v120, %v125
    %v127 = vadd.f32 %v126, %v109
    %v128 = vmax.f32 %v127, 0.0
    %129 = vst.msk [vmem:[#allocation2 + $0x8] sm:$0xff] %vm112, %v128
    %v130 = vld [vmem:[%s0] sm:$0xff]
    %132 = vset.pattern.permute.xlu0 4
    %133 = vperm.xlu0 %132, %v130
    %v134 = vpop.permute.xlu0 %133
    %v136 = vmul.f32 %v134, %v94
    %137 = vset.pattern.permute.xlu0 5
    %138 = vperm.xlu0 %137, %v130
    %v139 = vpop.permute.xlu0 %138
    %v141 = vmul.f32 %v139, %v103
    %v142 = vadd.f32 %v136, %v141
    %v143 = vadd.f32 %v142, %v109
    %v144 = vmax.f32 %v143, 0.0
    %145 = vst.msk [vmem:[#allocation2 + $0x10] sm:$0xff] %vm112, %v144
    %v146 = vld [vmem:[%s0] sm:$0xff]
    %148 = vset.pattern.permute.xlu0 6
    %149 = vperm.xlu0 %148, %v146
    %v150 = vpop.permute.xlu0 %149
    %v152 = vmul.f32 %v150, %v94
    %153 = vset.pattern.permute.xlu0 7
    %154 = vperm.xlu0 %153, %v146
    %v155 = vpop.permute.xlu0 %154
    %v157 = vmul.f32 %v155, %v103
    %v158 = vadd.f32 %v152, %v157
    %v159 = vadd.f32 %v158, %v109
    %v160 = vmax.f32 %v159, 0.0
    %161 = vst.msk [vmem:[#allocation2 + $0x18] sm:$0xff] %vm112, %v160
    %v162 = vld [vmem:[%s0] sm:$0xff]
    %164 = vset.pattern.permute.xlu0 8
    %165 = vperm.xlu0 %164, %v162
    %v166 = vpop.permute.xlu0 %165
    %v168 = vmul.f32 %v166, %v94
    %169 = vset.pattern.permute.xlu0 9
    %170 = vperm.xlu0 %169, %v162
    %v171 = vpop.permute.xlu0 %170
    %v173 = vmul.f32 %v171, %v103
    %v174 = vadd.f32 %v168, %v173
    %v175 = vadd.f32 %v174, %v109
    %v176 = vmax.f32 %v175, 0.0
    %177 = vst.msk [vmem:[#allocation2 + $0x20] sm:$0xff] %vm112, %v176
    %v178 = vld [vmem:[%s0] sm:$0xff]
    %180 = vset.pattern.permute.xlu0 10
    %181 = vperm.xlu0 %180, %v178
    %v182 = vpop.permute.xlu0 %181
    %v184 = vmul.f32 %v182, %v94
    %185 = vset.pattern.permute.xlu0 11
    %186 = vperm.xlu0 %185, %v178
    %v187 = vpop.permute.xlu0 %186
    %v189 = vmul.f32 %v187, %v103
    %v190 = vadd.f32 %v184, %v189
    %v191 = vadd.f32 %v190, %v109
    %v192 = vmax.f32 %v191, 0.0
    %193 = vst.msk [vmem:[#allocation2 + $0x28] sm:$0xff] %vm112, %v192
    %v194 = vld [vmem:[%s0] sm:$0xff]
    %196 = vset.pattern.permute.xlu0 12
    %197 = vperm.xlu0 %196, %v194
    %v198 = vpop.permute.xlu0 %197
    %v200 = vmul.f32 %v198, %v94
    %201 = vset.pattern.permute.xlu0 13
    %202 = vperm.xlu0 %201, %v194
    %v203 = vpop.permute.xlu0 %202
    %v205 = vmul.f32 %v203, %v103
    %v206 = vadd.f32 %v200, %v205
    %v207 = vadd.f32 %v206, %v109
    %v208 = vmax.f32 %v207, 0.0
    %209 = vst.msk [vmem:[#allocation2 + $0x30] sm:$0xff] %vm112, %v208
    %v210 = vld [vmem:[%s0] sm:$0xff]
    %212 = vset.pattern.permute.xlu0 14
    %213 = vperm.xlu0 %212, %v210
    %v214 = vpop.permute.xlu0 %213
    %v216 = vmul.f32 %v214, %v94
    %217 = vset.pattern.permute.xlu0 15
    %218 = vperm.xlu0 %217, %v210
    %v219 = vpop.permute.xlu0 %218
    %v221 = vmul.f32 %v219, %v103
    %v222 = vadd.f32 %v216, %v221
    %v223 = vadd.f32 %v222, %v109
    %v224 = vmax.f32 %v223, 0.0
    %225 = vst.msk [vmem:[#allocation2 + $0x38] sm:$0xff] %vm112, %v224
    %v226 = vld [vmem:[#allocation2] sm:$0xff]
    %v227 = vld [vmem:[#allocation2 + $0x8] sm:$0xff]
    %v228 = vld [vmem:[#allocation2 + $0x10] sm:$0xff]
    %v229 = vld [vmem:[#allocation2 + $0x18] sm:$0xff]
    %v230 = vld [vmem:[#allocation2 + $0x20] sm:$0xff]
    %v231 = vld [vmem:[#allocation2 + $0x28] sm:$0xff]
    %v232 = vld [vmem:[#allocation2 + $0x30] sm:$0xff]
    %v233 = vld [vmem:[#allocation2 + $0x38] sm:$0xff]
    %v234 = vsel %vm112, %v226, 0.0
    %235 = vadd.xlane.f32.xlu0 %v234
    %v236 = vpop.xlane.xlu0 %235
    %v237 = vsel %vm112, %v227, 0.0
    %238 = vadd.xlane.f32.xlu0 %v237
    %v239 = vpop.xlane.xlu0 %238
    %v240 = vsel %vm112, %v228, 0.0
    %241 = vadd.xlane.f32.xlu0 %v240
    %v242 = vpop.xlane.xlu0 %241
    %v243 = vsel %vm112, %v229, 0.0
    %244 = vadd.xlane.f32.xlu0 %v243
    %v245 = vpop.xlane.xlu0 %244
    %v246 = vsel %vm112, %v230, 0.0
    %247 = vadd.xlane.f32.xlu0 %v246
    %v248 = vpop.xlane.xlu0 %247
    %v249 = vsel %vm112, %v231, 0.0
    %250 = vadd.xlane.f32.xlu0 %v249
    %v251 = vpop.xlane.xlu0 %250
    %v252 = vsel %vm112, %v232, 0.0
    %253 = vadd.xlane.f32.xlu0 %v252
    %v254 = vpop.xlane.xlu0 %253
    %v255 = vsel %vm112, %v233, 0.0
    %256 = vadd.xlane.f32.xlu0 %v255
    %v257 = vpop.xlane.xlu0 %256
    %v258 = vmul.f32 %v226, %v226
    %v259 = vmul.f32 %v227, %v227
    %v260 = vmul.f32 %v228, %v228
    %v261 = vmul.f32 %v229, %v229
    %v262 = vmul.f32 %v230, %v230
    %v263 = vmul.f32 %v231, %v231
    %v264 = vmul.f32 %v232, %v232
    %v265 = vmul.f32 %v233, %v233
    %v266 = vsel %vm112, %v258, 0.0
    %267 = vadd.xlane.f32.xlu0 %v266
    %v268 = vpop.xlane.xlu0 %267
    %v269 = vsel %vm112, %v259, 0.0
    %270 = vadd.xlane.f32.xlu0 %v269
    %v271 = vpop.xlane.xlu0 %270
    %v272 = vsel %vm112, %v260, 0.0
    %273 = vadd.xlane.f32.xlu0 %v272
    %v274 = vpop.xlane.xlu0 %273
    %v275 = vsel %vm112, %v261, 0.0
    %276 = vadd.xlane.f32.xlu0 %v275
    %v277 = vpop.xlane.xlu0 %276
    %v278 = vsel %vm112, %v262, 0.0
    %279 = vadd.xlane.f32.xlu0 %v278
    %v280 = vpop.xlane.xlu0 %279
    %v281 = vsel %vm112, %v263, 0.0
    %282 = vadd.xlane.f32.xlu0 %v281
    %v283 = vpop.xlane.xlu0 %282
    %v284 = vsel %vm112, %v264, 0.0
    %285 = vadd.xlane.f32.xlu0 %v284
    %v286 = vpop.xlane.xlu0 %285
    %v287 = vsel %vm112, %v265, 0.0
    %288 = vadd.xlane.f32.xlu0 %v287
    %v289 = vpop.xlane.xlu0 %288
    %v290 = vmul.f32 %v236, 0.015625
    %v291 = vmul.f32 %v239, 0.015625
    %v292 = vmul.f32 %v242, 0.015625
    %v293 = vmul.f32 %v245, 0.015625
    %v294 = vmul.f32 %v248, 0.015625
    %v295 = vmul.f32 %v251, 0.015625
    %v296 = vmul.f32 %v254, 0.015625
    %v297 = vmul.f32 %v257, 0.015625
    %v298 = vmul.f32 %v268, 0.015625
    %v299 = vmul.f32 %v271, 0.015625
    %v300 = vmul.f32 %v274, 0.015625
    %v301 = vmul.f32 %v277, 0.015625
    %v302 = vmul.f32 %v280, 0.015625
    %v303 = vmul.f32 %v283, 0.015625
    %v304 = vmul.f32 %v286, 0.015625
    %v305 = vmul.f32 %v289, 0.015625
    %v306 = vmul.f32 %v290, %v290
    %v307 = vmul.f32 %v291, %v291
    %v308 = vmul.f32 %v292, %v292
    %v309 = vmul.f32 %v293, %v293
    %v310 = vmul.f32 %v294, %v294
    %v311 = vmul.f32 %v295, %v295
    %v312 = vmul.f32 %v296, %v296
    %v313 = vmul.f32 %v297, %v297
    %v314 = vsub.f32 %v298, %v306
    %v315 = vsub.f32 %v299, %v307
    %v316 = vsub.f32 %v300, %v308
    %v317 = vsub.f32 %v301, %v309
    %v318 = vsub.f32 %v302, %v310
    %v319 = vsub.f32 %v303, %v311
    %v320 = vsub.f32 %v304, %v312
    %v321 = vsub.f32 %v305, %v313
    %v322 = vmax.f32 %v314, 0.0
    %v323 = vmax.f32 %v315, 0.0
    %v324 = vmax.f32 %v316, 0.0
    %v325 = vmax.f32 %v317, 0.0
    %v326 = vmax.f32 %v318, 0.0
    %v327 = vmax.f32 %v319, 0.0
    %v328 = vmax.f32 %v320, 0.0
    %v329 = vmax.f32 %v321, 0.0
    %v330 = vsub.f32 %v226, %v290
    %v331 = vsub.f32 %v227, %v291
    %v332 = vsub.f32 %v228, %v292
    %v333 = vsub.f32 %v229, %v293
    %v334 = vsub.f32 %v230, %v294
    %v335 = vsub.f32 %v231, %v295
    %v336 = vsub.f32 %v232, %v296
    %v337 = vsub.f32 %v233, %v297
    %v338 = vadd.f32 %v322, 1e-05
    %v339 = vadd.f32 %v323, 1e-05
    %v340 = vadd.f32 %v324, 1e-05
    %v341 = vadd.f32 %v325, 1e-05
    %v342 = vadd.f32 %v326, 1e-05
    %v343 = vadd.f32 %v327, 1e-05
    %v344 = vadd.f32 %v328, 1e-05
    %v345 = vadd.f32 %v329, 1e-05
    %v346 = vrsqrt.pop %v338
    %v347 = vrsqrt.pop %v339
    %v348 = vrsqrt.pop %v340
    %v349 = vrsqrt.pop %v341
    %v350 = vrsqrt.pop %v342
    %v351 = vrsqrt.pop %v343
    %v352 = vrsqrt.pop %v344
    %v353 = vrsqrt.pop %v345
    %v354 = vmul.f32 %v330, %v346
    %v355 = vmul.f32 %v331, %v347
    %v356 = vmul.f32 %v332, %v348
    %v357 = vmul.f32 %v333, %v349
    %v358 = vmul.f32 %v334, %v350
    %v359 = vmul.f32 %v335, %v351
    %v360 = vmul.f32 %v336, %v352
    %v361 = vmul.f32 %v337, %v353
    %v362 = vlaneseq
    %v363 = vshrl.u32 %v362, 7
    %v364 = vsub.s32 0, %v363
    %v365 = vrot.slane %v37, %v364
    %v366 = vmul.f32 %v354, %v365
    %v367 = vmul.f32 %v355, %v365
    %v368 = vmul.f32 %v356, %v365
    %v369 = vmul.f32 %v357, %v365
    %v370 = vmul.f32 %v358, %v365
    %v371 = vmul.f32 %v359, %v365
    %v372 = vmul.f32 %v360, %v365
    %v373 = vmul.f32 %v361, %v365
    %v374 = vlaneseq
    %v375 = vshrl.u32 %v374, 7
    %v376 = vsub.s32 0, %v375
    %v377 = vrot.slane %v38, %v376
    %v378 = vadd.f32 %v366, %v377
    %v379 = vadd.f32 %v367, %v377
    %v380 = vadd.f32 %v368, %v377
    %v381 = vadd.f32 %v369, %v377
    %v382 = vadd.f32 %v370, %v377
    %v383 = vadd.f32 %v371, %v377
    %v384 = vadd.f32 %v372, %v377
    %v385 = vadd.f32 %v373, %v377
    %v386 = vlaneseq
    %v387 = vshrl.u32 %v386, 7
    %v388 = vsub.s32 0, %v387
    %v389 = vrot.slane %v39, %v388
    %v391 = vsel %vm112, %v378, 0
    %v394 = vsel %vm112, %v379, 0
    %v397 = vsel %vm112, %v380, 0
    %v400 = vsel %vm112, %v381, 0
    %v403 = vsel %vm112, %v382, 0
    %v406 = vsel %vm112, %v383, 0
    %v409 = vsel %vm112, %v384, 0
    %v412 = vsel %vm112, %v385, 0
    %414 = vmatprep.subr.mxu0 0.0
    %v415 = vand.u32 %v42, 4294901760
    %416 = vmatpush1.msra.mxu0 %v415
    %417 = vmatprep.subr.mxu0 0.0
    %v418 = vand.u32 %v43, 4294901760
    %419 = vmatpush1.msra.mxu0 %v418
    %420 = vmatprep.subr.mxu0 0.0
    %v421 = vand.u32 %v44, 4294901760
    %422 = vmatpush1.msra.mxu0 %v421
    %423 = vmatprep.subr.mxu0 0.0
    %v424 = vand.u32 %v45, 4294901760
    %425 = vmatpush1.msra.mxu0 %v424
    %426 = vmatprep.subr.mxu0 0.0
    %v427 = vand.u32 %v46, 4294901760
    %428 = vmatpush1.msra.mxu0 %v427
    %429 = vmatprep.subr.mxu0 0.0
    %v430 = vand.u32 %v47, 4294901760
    %431 = vmatpush1.msra.mxu0 %v430
    %432 = vmatprep.subr.mxu0 0.0
    %v433 = vand.u32 %v48, 4294901760
    %434 = vmatpush1.msra.mxu0 %v433
    %435 = vmatprep.subr.mxu0 0.0
    %v436 = vand.u32 %v49, 4294901760
    %437 = vmatpush1.msra.mxu0 %v436
    %438 = vmatprep.subr.mxu0 0.0
    %439 = vmatpush1.msra.mxu0 0.0
    %440 = vmatprep.subr.mxu0 0.0
    %441 = vmatpush1.msra.mxu0 0.0
    %442 = vmatprep.subr.mxu0 0.0
    %443 = vmatpush1.msra.mxu0 0.0
    %444 = vmatprep.subr.mxu0 0.0
    %445 = vmatpush1.msra.mxu0 0.0
    %446 = vmatprep.subr.mxu0 0.0
    %447 = vmatpush1.msra.mxu0 0.0
    %448 = vmatprep.subr.mxu0 0.0
    %449 = vmatpush1.msra.mxu0 0.0
    %450 = vmatprep.subr.mxu0 0.0
    %451 = vmatpush1.msra.mxu0 0.0
    %452 = vmatprep.subr.mxu0 0.0
    %453 = vmatpush1.msra.mxu0 0.0
    %454 = vmatprep.subr.mxu0 0.0
    %455 = vmatpush1.msra.mxu0 0.0
    %456 = vmatprep.subr.mxu0 0.0
    %457 = vmatpush1.msra.mxu0 0.0
    %458 = vmatprep.subr.mxu0 0.0
    %459 = vmatpush1.msra.mxu0 0.0
    %460 = vmatprep.subr.mxu0 0.0
    %461 = vmatpush1.msra.mxu0 0.0
    %462 = vmatprep.subr.mxu0 0.0
    %463 = vmatpush1.msra.mxu0 0.0
    %464 = vmatprep.subr.mxu0 0.0
    %465 = vmatpush1.msra.mxu0 0.0
    %466 = vmatprep.subr.mxu0 0.0
    %467 = vmatpush1.msra.mxu0 0.0
    %468 = vmatprep.subr.mxu0 0.0
    %469 = vmatpush1.msra.mxu0 0.0
    %470 = vmatprep.subr.mxu0 0.0
    %471 = vmatpush1.msra.mxu0 0.0
    %472 = vmatprep.subr.mxu0 0.0
    %473 = vmatpush1.msra.mxu0 0.0
    %474 = vmatprep.subr.mxu0 0.0
    %475 = vmatpush1.msra.mxu0 0.0
    %476 = vmatprep.subr.mxu0 0.0
    %477 = vmatpush1.msra.mxu0 0.0
    %478 = vmatprep.subr.mxu0 0.0
    %479 = vmatpush1.msra.mxu0 0.0
    %480 = vmatprep.subr.mxu0 0.0
    %481 = vmatpush1.msra.mxu0 0.0
    %482 = vmatprep.subr.mxu0 0.0
    %483 = vmatpush1.msra.mxu0 0.0
    %484 = vmatprep.subr.mxu0 0.0
    %485 = vmatpush1.msra.mxu0 0.0
    %486 = vmatprep.mubr.f32.mxu0 0.0
    %v487 = vand.u32 %v391, 4294901760
    %v488 = vsub.f32 %v391, %v487
    %v489 = vand.u32 %v488, 4294901760
    %v490 = vsub.f32 %v488, %v489
    %v491 = vand.u32 %v490, 4294901760
    %492 = vmatmul.mubr.f32.gmra.mrb[0].mxu0 %v491
    %v493 = vpop.f32.mrb[0].mxu0
    %v494 = vadd.f32 %v389, %v493
    %v495 = vpop.f32.mrb[0].mxu0
    %496 = vmatprep.mubr.f32.mxu0 0.0
    %v497 = vand.u32 %v394, 4294901760
    %v498 = vsub.f32 %v394, %v497
    %v499 = vand.u32 %v498, 4294901760
    %v500 = vsub.f32 %v498, %v499
    %v501 = vand.u32 %v500, 4294901760
    %502 = vmatmul.mubr.f32.gmra.mrb[0].mxu0 %v501
    %v503 = vpop.f32.mrb[0].mxu0
    %v504 = vadd.f32 %v389, %v503
    %v505 = vpop.f32.mrb[0].mxu0
    %506 = vmatprep.mubr.f32.mxu0 0.0
    %v507 = vand.u32 %v397, 4294901760
    %v508 = vsub.f32 %v397, %v507
    %v509 = vand.u32 %v508, 4294901760
    %v510 = vsub.f32 %v508, %v509
    %v511 = vand.u32 %v510, 4294901760
    %512 = vmatmul.mubr.f32.gmra.mrb[0].mxu0 %v511
    %v513 = vpop.f32.mrb[0].mxu0
    %v514 = vadd.f32 %v389, %v513
    %v515 = vpop.f32.mrb[0].mxu0
    %516 = vmatprep.mubr.f32.mxu0 0.0
    %v517 = vand.u32 %v400, 4294901760
    %v518 = vsub.f32 %v400, %v517
    %v519 = vand.u32 %v518, 4294901760
    %v520 = vsub.f32 %v518, %v519
    %v521 = vand.u32 %v520, 4294901760
    %522 = vmatmul.mubr.f32.gmra.mrb[0].mxu0 %v521
    %v523 = vpop.f32.mrb[0].mxu0
    %v524 = vadd.f32 %v389, %v523
    %v525 = vpop.f32.mrb[0].mxu0
    %526 = vmatprep.mubr.f32.mxu0 0.0
    %v527 = vand.u32 %v403, 4294901760
    %v528 = vsub.f32 %v403, %v527
    %v529 = vand.u32 %v528, 4294901760
    %v530 = vsub.f32 %v528, %v529
    %v531 = vand.u32 %v530, 4294901760
    %532 = vmatmul.mubr.f32.gmra.mrb[0].mxu0 %v531
    %v533 = vpop.f32.mrb[0].mxu0
    %v534 = vadd.f32 %v389, %v533
    %v535 = vpop.f32.mrb[0].mxu0
    %536 = vmatprep.mubr.f32.mxu0 0.0
    %v537 = vand.u32 %v406, 4294901760
    %v538 = vsub.f32 %v406, %v537
    %v539 = vand.u32 %v538, 4294901760
    %v540 = vsub.f32 %v538, %v539
    %v541 = vand.u32 %v540, 4294901760
    %542 = vmatmul.mubr.f32.gmra.mrb[0].mxu0 %v541
    %v543 = vpop.f32.mrb[0].mxu0
    %v544 = vadd.f32 %v389, %v543
    %v545 = vpop.f32.mrb[0].mxu0
    %546 = vmatprep.mubr.f32.mxu0 0.0
    %v547 = vand.u32 %v409, 4294901760
    %v548 = vsub.f32 %v409, %v547
    %v549 = vand.u32 %v548, 4294901760
    %v550 = vsub.f32 %v548, %v549
    %v551 = vand.u32 %v550, 4294901760
    %552 = vmatmul.mubr.f32.gmra.mrb[0].mxu0 %v551
    %v553 = vpop.f32.mrb[0].mxu0
    %v554 = vadd.f32 %v389, %v553
    %v555 = vpop.f32.mrb[0].mxu0
    %556 = vmatprep.mubr.f32.mxu0 0.0
    %v557 = vand.u32 %v412, 4294901760
    %v558 = vsub.f32 %v412, %v557
    %v559 = vand.u32 %v558, 4294901760
    %v560 = vsub.f32 %v558, %v559
    %v561 = vand.u32 %v560, 4294901760
    %562 = vmatmul.mubr.f32.gmra.mrb[0].mxu0 %v561
    %v563 = vpop.f32.mrb[0].mxu0
    %v564 = vadd.f32 %v389, %v563
    %v565 = vpop.f32.mrb[0].mxu0
    %566 = vdwg.mxu0
    %567 = vmatprep.subr.mxu0 0.0
    %v568 = vand.u32 %v42, 4294901760
    %v569 = vsub.f32 %v42, %v568
    %v570 = vand.u32 %v569, 4294901760
    %v571 = vsub.f32 %v569, %v570
    %v572 = vand.u32 %v571, 4294901760
    %573 = vmatpush1.msra.mxu0 %v572
    %574 = vmatprep.subr.mxu0 0.0
    %v575 = vand.u32 %v43, 4294901760
    %v576 = vsub.f32 %v43, %v575
    %v577 = vand.u32 %v576, 4294901760
    %v578 = vsub.f32 %v576, %v577
    %v579 = vand.u32 %v578, 4294901760
    %580 = vmatpush1.msra.mxu0 %v579
    %581 = vmatprep.subr.mxu0 0.0
    %v582 = vand.u32 %v44, 4294901760
    %v583 = vsub.f32 %v44, %v582
    %v584 = vand.u32 %v583, 4294901760
    %v585 = vsub.f32 %v583, %v584
    %v586 = vand.u32 %v585, 4294901760
    %587 = vmatpush1.msra.mxu0 %v586
    %588 = vmatprep.subr.mxu0 0.0
    %v589 = vand.u32 %v45, 4294901760
    %v590 = vsub.f32 %v45, %v589
    %v591 = vand.u32 %v590, 4294901760
    %v592 = vsub.f32 %v590, %v591
    %v593 = vand.u32 %v592, 4294901760
    %594 = vmatpush1.msra.mxu0 %v593
    %595 = vmatprep.subr.mxu0 0.0
    %v596 = vand.u32 %v46, 4294901760
    %v597 = vsub.f32 %v46, %v596
    %v598 = vand.u32 %v597, 4294901760
    %v599 = vsub.f32 %v597, %v598
    %v600 = vand.u32 %v599, 4294901760
    %601 = vmatpush1.msra.mxu0 %v600
    %602 = vmatprep.subr.mxu0 0.0
    %v603 = vand.u32 %v47, 4294901760
    %v604 = vsub.f32 %v47, %v603
    %v605 = vand.u32 %v604, 4294901760
    %v606 = vsub.f32 %v604, %v605
    %v607 = vand.u32 %v606, 4294901760
    %608 = vmatpush1.msra.mxu0 %v607
    %609 = vmatprep.subr.mxu0 0.0
    %v610 = vand.u32 %v48, 4294901760
    %v611 = vsub.f32 %v48, %v610
    %v612 = vand.u32 %v611, 4294901760
    %v613 = vsub.f32 %v611, %v612
    %v614 = vand.u32 %v613, 4294901760
    %615 = vmatpush1.msra.mxu0 %v614
    %616 = vmatprep.subr.mxu0 0.0
    %v617 = vand.u32 %v49, 4294901760
    %v618 = vsub.f32 %v49, %v617
    %v619 = vand.u32 %v618, 4294901760
    %v620 = vsub.f32 %v618, %v619
    %v621 = vand.u32 %v620, 4294901760
    %622 = vmatpush1.msra.mxu0 %v621
    %623 = vmatprep.subr.mxu0 0.0
    %624 = vmatpush1.msra.mxu0 0.0
    %625 = vmatprep.subr.mxu0 0.0
    %626 = vmatpush1.msra.mxu0 0.0
    %627 = vmatprep.subr.mxu0 0.0
    %628 = vmatpush1.msra.mxu0 0.0
    %629 = vmatprep.subr.mxu0 0.0
    %630 = vmatpush1.msra.mxu0 0.0
    %631 = vmatprep.subr.mxu0 0.0
    %632 = vmatpush1.msra.mxu0 0.0
    %633 = vmatprep.subr.mxu0 0.0
    %634 = vmatpush1.msra.mxu0 0.0
    %635 = vmatprep.subr.mxu0 0.0
    %636 = vmatpush1.msra.mxu0 0.0
    %637 = vmatprep.subr.mxu0 0.0
    %638 = vmatpush1.msra.mxu0 0.0
    %639 = vmatprep.subr.mxu0 0.0
    %640 = vmatpush1.msra.mxu0 0.0
    %641 = vmatprep.subr.mxu0 0.0
    %642 = vmatpush1.msra.mxu0 0.0
    %643 = vmatprep.subr.mxu0 0.0
    %644 = vmatpush1.msra.mxu0 0.0
    %645 = vmatprep.subr.mxu0 0.0
    %646 = vmatpush1.msra.mxu0 0.0
    %647 = vmatprep.subr.mxu0 0.0
    %648 = vmatpush1.msra.mxu0 0.0
    %649 = vmatprep.subr.mxu0 0.0
    %650 = vmatpush1.msra.mxu0 0.0
    %651 = vmatprep.subr.mxu0 0.0
    %652 = vmatpush1.msra.mxu0 0.0
    %653 = vmatprep.subr.mxu0 0.0
    %654 = vmatpush1.msra.mxu0 0.0
    %655 = vmatprep.subr.mxu0 0.0
    %656 = vmatpush1.msra.mxu0 0.0
    %657 = vmatprep.subr.mxu0 0.0
    %658 = vmatpush1.msra.mxu0 0.0
    %659 = vmatprep.subr.mxu0 0.0
    %660 = vmatpush1.msra.mxu0 0.0
    %661 = vmatprep.subr.mxu0 0.0
    %662 = vmatpush1.msra.mxu0 0.0
    %663 = vmatprep.subr.mxu0 0.0
    %664 = vmatpush1.msra.mxu0 0.0
    %665 = vmatprep.subr.mxu0 0.0
    %666 = vmatpush1.msra.mxu0 0.0
    %667 = vmatprep.subr.mxu0 0.0
    %668 = vmatpush1.msra.mxu0 0.0
    %669 = vmatprep.subr.mxu0 0.0
    %670 = vmatpush1.msra.mxu0 0.0
    %671 = vmatprep.mubr.f32.mxu0 0.0
    %v672 = vand.u32 %v391, 4294901760
    %673 = vmatmul.mubr.f32.gmra.mrb[0].mxu0 %v672
    %v674 = vpop.f32.mrb[0].mxu0
    %v675 = vadd.f32 %v494, %v674
    %v676 = vpop.f32.mrb[0].mxu0
    %677 = vmatprep.mubr.f32.mxu0 0.0
    %v678 = vand.u32 %v394, 4294901760
    %679 = vmatmul.mubr.f32.gmra.mrb[0].mxu0 %v678
    %v680 = vpop.f32.mrb[0].mxu0
    %v681 = vadd.f32 %v504, %v680
    %v682 = vpop.f32.mrb[0].mxu0
    %683 = vmatprep.mubr.f32.mxu0 0.0
    %v684 = vand.u32 %v397, 4294901760
    %685 = vmatmul.mubr.f32.gmra.mrb[0].mxu0 %v684
    %v686 = vpop.f32.mrb[0].mxu0
    %v687 = vadd.f32 %v514, %v686
    %v688 = vpop.f32.mrb[0].mxu0
    %689 = vmatprep.mubr.f32.mxu0 0.0
    %v690 = vand.u32 %v400, 4294901760
    %691 = vmatmul.mubr.f32.gmra.mrb[0].mxu0 %v690
    %v692 = vpop.f32.mrb[0].mxu0
    %v693 = vadd.f32 %v524, %v692
    %v694 = vpop.f32.mrb[0].mxu0
    %695 = vmatprep.mubr.f32.mxu0 0.0
    %v696 = vand.u32 %v403, 4294901760
    %697 = vmatmul.mubr.f32.gmra.mrb[0].mxu0 %v696
    %v698 = vpop.f32.mrb[0].mxu0
    %v699 = vadd.f32 %v534, %v698
    %v700 = vpop.f32.mrb[0].mxu0
    %701 = vmatprep.mubr.f32.mxu0 0.0
    %v702 = vand.u32 %v406, 4294901760
    %703 = vmatmul.mubr.f32.gmra.mrb[0].mxu0 %v702
    %v704 = vpop.f32.mrb[0].mxu0
    %v705 = vadd.f32 %v544, %v704
    %v706 = vpop.f32.mrb[0].mxu0
    %707 = vmatprep.mubr.f32.mxu0 0.0
    %v708 = vand.u32 %v409, 4294901760
    %709 = vmatmul.mubr.f32.gmra.mrb[0].mxu0 %v708
    %v710 = vpop.f32.mrb[0].mxu0
    %v711 = vadd.f32 %v554, %v710
    %v712 = vpop.f32.mrb[0].mxu0
    %713 = vmatprep.mubr.f32.mxu0 0.0
    %v714 = vand.u32 %v412, 4294901760
    %715 = vmatmul.mubr.f32.gmra.mrb[0].mxu0 %v714
    %v716 = vpop.f32.mrb[0].mxu0
    %v717 = vadd.f32 %v564, %v716
    %v718 = vpop.f32.mrb[0].mxu0
    %719 = vdwg.mxu0
    %720 = vmatprep.subr.mxu0 0.0
    %v721 = vand.u32 %v42, 4294901760
    %v722 = vsub.f32 %v42, %v721
    %723 = vmatpush1.msra.mxu0 %v722
    %724 = vmatprep.subr.mxu0 0.0
    %v725 = vand.u32 %v43, 4294901760
    %v726 = vsub.f32 %v43, %v725
    %727 = vmatpush1.msra.mxu0 %v726
    %728 = vmatprep.subr.mxu0 0.0
    %v729 = vand.u32 %v44, 4294901760
    %v730 = vsub.f32 %v44, %v729
    %731 = vmatpush1.msra.mxu0 %v730
    %732 = vmatprep.subr.mxu0 0.0
    %v733 = vand.u32 %v45, 4294901760
    %v734 = vsub.f32 %v45, %v733
    %735 = vmatpush1.msra.mxu0 %v734
    %736 = vmatprep.subr.mxu0 0.0
    %v737 = vand.u32 %v46, 4294901760
    %v738 = vsub.f32 %v46, %v737
    %739 = vmatpush1.msra.mxu0 %v738
    %740 = vmatprep.subr.mxu0 0.0
    %v741 = vand.u32 %v47, 4294901760
    %v742 = vsub.f32 %v47, %v741
    %743 = vmatpush1.msra.mxu0 %v742
    %744 = vmatprep.subr.mxu0 0.0
    %v745 = vand.u32 %v48, 4294901760
    %v746 = vsub.f32 %v48, %v745
    %747 = vmatpush1.msra.mxu0 %v746
    %748 = vmatprep.subr.mxu0 0.0
    %v749 = vand.u32 %v49, 4294901760
    %v750 = vsub.f32 %v49, %v749
    %751 = vmatpush1.msra.mxu0 %v750
    %752 = vmatprep.subr.mxu0 0.0
    %753 = vmatpush1.msra.mxu0 0.0
    %754 = vmatprep.subr.mxu0 0.0
    %755 = vmatpush1.msra.mxu0 0.0
    %756 = vmatprep.subr.mxu0 0.0
    %757 = vmatpush1.msra.mxu0 0.0
    %758 = vmatprep.subr.mxu0 0.0
    %759 = vmatpush1.msra.mxu0 0.0
    %760 = vmatprep.subr.mxu0 0.0
    %761 = vmatpush1.msra.mxu0 0.0
    %762 = vmatprep.subr.mxu0 0.0
    %763 = vmatpush1.msra.mxu0 0.0
    %764 = vmatprep.subr.mxu0 0.0
    %765 = vmatpush1.msra.mxu0 0.0
    %766 = vmatprep.subr.mxu0 0.0
    %767 = vmatpush1.msra.mxu0 0.0
    %768 = vmatprep.subr.mxu0 0.0
    %769 = vmatpush1.msra.mxu0 0.0
    %770 = vmatprep.subr.mxu0 0.0
    %771 = vmatpush1.msra.mxu0 0.0
    %772 = vmatprep.subr.mxu0 0.0
    %773 = vmatpush1.msra.mxu0 0.0
    %774 = vmatprep.subr.mxu0 0.0
    %775 = vmatpush1.msra.mxu0 0.0
    %776 = vmatprep.subr.mxu0 0.0
    %777 = vmatpush1.msra.mxu0 0.0
    %778 = vmatprep.subr.mxu0 0.0
    %779 = vmatpush1.msra.mxu0 0.0
    %780 = vmatprep.subr.mxu0 0.0
    %781 = vmatpush1.msra.mxu0 0.0
    %782 = vmatprep.subr.mxu0 0.0
    %783 = vmatpush1.msra.mxu0 0.0
    %784 = vmatprep.subr.mxu0 0.0
    %785 = vmatpush1.msra.mxu0 0.0
    %786 = vmatprep.subr.mxu0 0.0
    %787 = vmatpush1.msra.mxu0 0.0
    %788 = vmatprep.subr.mxu0 0.0
    %789 = vmatpush1.msra.mxu0 0.0
    %790 = vmatprep.subr.mxu0 0.0
    %791 = vmatpush1.msra.mxu0 0.0
    %792 = vmatprep.subr.mxu0 0.0
    %793 = vmatpush1.msra.mxu0 0.0
    %794 = vmatprep.subr.mxu0 0.0
    %795 = vmatpush1.msra.mxu0 0.0
    %796 = vmatprep.subr.mxu0 0.0
    %797 = vmatpush1.msra.mxu0 0.0
    %798 = vmatprep.subr.mxu0 0.0
    %799 = vmatpush1.msra.mxu0 0.0
    %800 = vmatprep.mubr.f32.mxu0 0.0
    %v801 = vand.u32 %v391, 4294901760
    %v802 = vsub.f32 %v391, %v801
    %803 = vmatmul.mubr.f32.gmra.mrb[0].mxu0 %v802
    %v804 = vpop.f32.mrb[0].mxu0
    %v805 = vadd.f32 %v675, %v804
    %v806 = vpop.f32.mrb[0].mxu0
    %807 = vmatprep.mubr.f32.mxu0 0.0
    %v808 = vand.u32 %v394, 4294901760
    %v809 = vsub.f32 %v394, %v808
    %810 = vmatmul.mubr.f32.gmra.mrb[0].mxu0 %v809
    %v811 = vpop.f32.mrb[0].mxu0
    %v812 = vadd.f32 %v681, %v811
    %v813 = vpop.f32.mrb[0].mxu0
    %814 = vmatprep.mubr.f32.mxu0 0.0
    %v815 = vand.u32 %v397, 4294901760
    %v816 = vsub.f32 %v397, %v815
    %817 = vmatmul.mubr.f32.gmra.mrb[0].mxu0 %v816
    %v818 = vpop.f32.mrb[0].mxu0
    %v819 = vadd.f32 %v687, %v818
    %v820 = vpop.f32.mrb[0].mxu0
    %821 = vmatprep.mubr.f32.mxu0 0.0
    %v822 = vand.u32 %v400, 4294901760
    %v823 = vsub.f32 %v400, %v822
    %824 = vmatmul.mubr.f32.gmra.mrb[0].mxu0 %v823
    %v825 = vpop.f32.mrb[0].mxu0
    %v826 = vadd.f32 %v693, %v825
    %v827 = vpop.f32.mrb[0].mxu0
    %828 = vmatprep.mubr.f32.mxu0 0.0
    %v829 = vand.u32 %v403, 4294901760
    %v830 = vsub.f32 %v403, %v829
    %831 = vmatmul.mubr.f32.gmra.mrb[0].mxu0 %v830
    %v832 = vpop.f32.mrb[0].mxu0
    %v833 = vadd.f32 %v699, %v832
    %v834 = vpop.f32.mrb[0].mxu0
    %835 = vmatprep.mubr.f32.mxu0 0.0
    %v836 = vand.u32 %v406, 4294901760
    %v837 = vsub.f32 %v406, %v836
    %838 = vmatmul.mubr.f32.gmra.mrb[0].mxu0 %v837
    %v839 = vpop.f32.mrb[0].mxu0
    %v840 = vadd.f32 %v705, %v839
    %v841 = vpop.f32.mrb[0].mxu0
    %842 = vmatprep.mubr.f32.mxu0 0.0
    %v843 = vand.u32 %v409, 4294901760
    %v844 = vsub.f32 %v409, %v843
    %845 = vmatmul.mubr.f32.gmra.mrb[0].mxu0 %v844
    %v846 = vpop.f32.mrb[0].mxu0
    %v847 = vadd.f32 %v711, %v846
    %v848 = vpop.f32.mrb[0].mxu0
    %849 = vmatprep.mubr.f32.mxu0 0.0
    %v850 = vand.u32 %v412, 4294901760
    %v851 = vsub.f32 %v412, %v850
    %852 = vmatmul.mubr.f32.gmra.mrb[0].mxu0 %v851
    %v853 = vpop.f32.mrb[0].mxu0
    %v854 = vadd.f32 %v717, %v853
    %v855 = vpop.f32.mrb[0].mxu0
    %856 = vdwg.mxu0
    %857 = vmatprep.subr.mxu0 0.0
    %v858 = vand.u32 %v42, 4294901760
    %859 = vmatpush1.msra.mxu0 %v858
    %860 = vmatprep.subr.mxu0 0.0
    %v861 = vand.u32 %v43, 4294901760
    %862 = vmatpush1.msra.mxu0 %v861
    %863 = vmatprep.subr.mxu0 0.0
    %v864 = vand.u32 %v44, 4294901760
    %865 = vmatpush1.msra.mxu0 %v864
    %866 = vmatprep.subr.mxu0 0.0
    %v867 = vand.u32 %v45, 4294901760
    %868 = vmatpush1.msra.mxu0 %v867
    %869 = vmatprep.subr.mxu0 0.0
    %v870 = vand.u32 %v46, 4294901760
    %871 = vmatpush1.msra.mxu0 %v870
    %872 = vmatprep.subr.mxu0 0.0
    %v873 = vand.u32 %v47, 4294901760
    %874 = vmatpush1.msra.mxu0 %v873
    %875 = vmatprep.subr.mxu0 0.0
    %v876 = vand.u32 %v48, 4294901760
    %877 = vmatpush1.msra.mxu0 %v876
    %878 = vmatprep.subr.mxu0 0.0
    %v879 = vand.u32 %v49, 4294901760
    %880 = vmatpush1.msra.mxu0 %v879
    %881 = vmatprep.subr.mxu0 0.0
    %882 = vmatpush1.msra.mxu0 0.0
    %883 = vmatprep.subr.mxu0 0.0
    %884 = vmatpush1.msra.mxu0 0.0
    %885 = vmatprep.subr.mxu0 0.0
    %886 = vmatpush1.msra.mxu0 0.0
    %887 = vmatprep.subr.mxu0 0.0
    %888 = vmatpush1.msra.mxu0 0.0
    %889 = vmatprep.subr.mxu0 0.0
    %890 = vmatpush1.msra.mxu0 0.0
    %891 = vmatprep.subr.mxu0 0.0
    %892 = vmatpush1.msra.mxu0 0.0
    %893 = vmatprep.subr.mxu0 0.0
    %894 = vmatpush1.msra.mxu0 0.0
    %895 = vmatprep.subr.mxu0 0.0
    %896 = vmatpush1.msra.mxu0 0.0
    %897 = vmatprep.subr.mxu0 0.0
    %898 = vmatpush1.msra.mxu0 0.0
    %899 = vmatprep.subr.mxu0 0.0
    %900 = vmatpush1.msra.mxu0 0.0
    %901 = vmatprep.subr.mxu0 0.0
    %902 = vmatpush1.msra.mxu0 0.0
    %903 = vmatprep.subr.mxu0 0.0
    %904 = vmatpush1.msra.mxu0 0.0
    %905 = vmatprep.subr.mxu0 0.0
    %906 = vmatpush1.msra.mxu0 0.0
    %907 = vmatprep.subr.mxu0 0.0
    %908 = vmatpush1.msra.mxu0 0.0
    %909 = vmatprep.subr.mxu0 0.0
    %910 = vmatpush1.msra.mxu0 0.0
    %911 = vmatprep.subr.mxu0 0.0
    %912 = vmatpush1.msra.mxu0 0.0
    %913 = vmatprep.subr.mxu0 0.0
    %914 = vmatpush1.msra.mxu0 0.0
    %915 = vmatprep.subr.mxu0 0.0
    %916 = vmatpush1.msra.mxu0 0.0
    %917 = vmatprep.subr.mxu0 0.0
    %918 = vmatpush1.msra.mxu0 0.0
    %919 = vmatprep.subr.mxu0 0.0
    %920 = vmatpush1.msra.mxu0 0.0
    %921 = vmatprep.subr.mxu0 0.0
    %922 = vmatpush1.msra.mxu0 0.0
    %923 = vmatprep.subr.mxu0 0.0
    %924 = vmatpush1.msra.mxu0 0.0
    %925 = vmatprep.subr.mxu0 0.0
    %926 = vmatpush1.msra.mxu0 0.0
    %927 = vmatprep.subr.mxu0 0.0
    %928 = vmatpush1.msra.mxu0 0.0
    %929 = vmatprep.mubr.f32.mxu0 0.0
    %v930 = vand.u32 %v391, 4294901760
    %v931 = vsub.f32 %v391, %v930
    %v932 = vand.u32 %v931, 4294901760
    %933 = vmatmul.mubr.f32.gmra.mrb[0].mxu0 %v932
    %v934 = vpop.f32.mrb[0].mxu0
    %v935 = vadd.f32 %v805, %v934
    %v936 = vpop.f32.mrb[0].mxu0
    %937 = vmatprep.mubr.f32.mxu0 0.0
    %v938 = vand.u32 %v394, 4294901760
    %v939 = vsub.f32 %v394, %v938
    %v940 = vand.u32 %v939, 4294901760
    %941 = vmatmul.mubr.f32.gmra.mrb[0].mxu0 %v940
    %v942 = vpop.f32.mrb[0].mxu0
    %v943 = vadd.f32 %v812, %v942
    %v944 = vpop.f32.mrb[0].mxu0
    %945 = vmatprep.mubr.f32.mxu0 0.0
    %v946 = vand.u32 %v397, 4294901760
    %v947 = vsub.f32 %v397, %v946
    %v948 = vand.u32 %v947, 4294901760
    %949 = vmatmul.mubr.f32.gmra.mrb[0].mxu0 %v948
    %v950 = vpop.f32.mrb[0].mxu0
    %v951 = vadd.f32 %v819, %v950
    %v952 = vpop.f32.mrb[0].mxu0
    %953 = vmatprep.mubr.f32.mxu0 0.0
    %v954 = vand.u32 %v400, 4294901760
    %v955 = vsub.f32 %v400, %v954
    %v956 = vand.u32 %v955, 4294901760
    %957 = vmatmul.mubr.f32.gmra.mrb[0].mxu0 %v956
    %v958 = vpop.f32.mrb[0].mxu0
    %v959 = vadd.f32 %v826, %v958
    %v960 = vpop.f32.mrb[0].mxu0
    %961 = vmatprep.mubr.f32.mxu0 0.0
    %v962 = vand.u32 %v403, 4294901760
    %v963 = vsub.f32 %v403, %v962
    %v964 = vand.u32 %v963, 4294901760
    %965 = vmatmul.mubr.f32.gmra.mrb[0].mxu0 %v964
    %v966 = vpop.f32.mrb[0].mxu0
    %v967 = vadd.f32 %v833, %v966
    %v968 = vpop.f32.mrb[0].mxu0
    %969 = vmatprep.mubr.f32.mxu0 0.0
    %v970 = vand.u32 %v406, 4294901760
    %v971 = vsub.f32 %v406, %v970
    %v972 = vand.u32 %v971, 4294901760
    %973 = vmatmul.mubr.f32.gmra.mrb[0].mxu0 %v972
    %v974 = vpop.f32.mrb[0].mxu0
    %v975 = vadd.f32 %v840, %v974
    %v976 = vpop.f32.mrb[0].mxu0
    %977 = vmatprep.mubr.f32.mxu0 0.0
    %v978 = vand.u32 %v409, 4294901760
    %v979 = vsub.f32 %v409, %v978
    %v980 = vand.u32 %v979, 4294901760
    %981 = vmatmul.mubr.f32.gmra.mrb[0].mxu0 %v980
    %v982 = vpop.f32.mrb[0].mxu0
    %v983 = vadd.f32 %v847, %v982
    %v984 = vpop.f32.mrb[0].mxu0
    %985 = vmatprep.mubr.f32.mxu0 0.0
    %v986 = vand.u32 %v412, 4294901760
    %v987 = vsub.f32 %v412, %v986
    %v988 = vand.u32 %v987, 4294901760
    %989 = vmatmul.mubr.f32.gmra.mrb[0].mxu0 %v988
    %v990 = vpop.f32.mrb[0].mxu0
    %v991 = vadd.f32 %v854, %v990
    %v992 = vpop.f32.mrb[0].mxu0
    %993 = vdwg.mxu0
    %994 = vmatprep.subr.mxu0 0.0
    %v995 = vand.u32 %v42, 4294901760
    %v996 = vsub.f32 %v42, %v995
    %v997 = vand.u32 %v996, 4294901760
    %998 = vmatpush1.msra.mxu0 %v997
    %999 = vmatprep.subr.mxu0 0.0
    %v1000 = vand.u32 %v43, 4294901760
    %v1001 = vsub.f32 %v43, %v1000
    %v1002 = vand.u32 %v1001, 4294901760
    %1003 = vmatpush1.msra.mxu0 %v1002
    %1004 = vmatprep.subr.mxu0 0.0
    %v1005 = vand.u32 %v44, 4294901760
    %v1006 = vsub.f32 %v44, %v1005
    %v1007 = vand.u32 %v1006, 4294901760
    %1008 = vmatpush1.msra.mxu0 %v1007
    %1009 = vmatprep.subr.mxu0 0.0
    %v1010 = vand.u32 %v45, 4294901760
    %v1011 = vsub.f32 %v45, %v1010
    %v1012 = vand.u32 %v1011, 4294901760
    %1013 = vmatpush1.msra.mxu0 %v1012
    %1014 = vmatprep.subr.mxu0 0.0
    %v1015 = vand.u32 %v46, 4294901760
    %v1016 = vsub.f32 %v46, %v1015
    %v1017 = vand.u32 %v1016, 4294901760
    %1018 = vmatpush1.msra.mxu0 %v1017
    %1019 = vmatprep.subr.mxu0 0.0
    %v1020 = vand.u32 %v47, 4294901760
    %v1021 = vsub.f32 %v47, %v1020
    %v1022 = vand.u32 %v1021, 4294901760
    %1023 = vmatpush1.msra.mxu0 %v1022
    %1024 = vmatprep.subr.mxu0 0.0
    %v1025 = vand.u32 %v48, 4294901760
    %v1026 = vsub.f32 %v48, %v1025
    %v1027 = vand.u32 %v1026, 4294901760
    %1028 = vmatpush1.msra.mxu0 %v1027
    %1029 = vmatprep.subr.mxu0 0.0
    %v1030 = vand.u32 %v49, 4294901760
    %v1031 = vsub.f32 %v49, %v1030
    %v1032 = vand.u32 %v1031, 4294901760
    %1033 = vmatpush1.msra.mxu0 %v1032
    %1034 = vmatprep.subr.mxu0 0.0
    %1035 = vmatpush1.msra.mxu0 0.0
    %1036 = vmatprep.subr.mxu0 0.0
    %1037 = vmatpush1.msra.mxu0 0.0
    %1038 = vmatprep.subr.mxu0 0.0
    %1039 = vmatpush1.msra.mxu0 0.0
    %1040 = vmatprep.subr.mxu0 0.0
    %1041 = vmatpush1.msra.mxu0 0.0
    %1042 = vmatprep.subr.mxu0 0.0
    %1043 = vmatpush1.msra.mxu0 0.0
    %1044 = vmatprep.subr.mxu0 0.0
    %1045 = vmatpush1.msra.mxu0 0.0
    %1046 = vmatprep.subr.mxu0 0.0
    %1047 = vmatpush1.msra.mxu0 0.0
    %1048 = vmatprep.subr.mxu0 0.0
    %1049 = vmatpush1.msra.mxu0 0.0
    %1050 = vmatprep.subr.mxu0 0.0
    %1051 = vmatpush1.msra.mxu0 0.0
    %1052 = vmatprep.subr.mxu0 0.0
    %1053 = vmatpush1.msra.mxu0 0.0
    %1054 = vmatprep.subr.mxu0 0.0
    %1055 = vmatpush1.msra.mxu0 0.0
    %1056 = vmatprep.subr.mxu0 0.0
    %1057 = vmatpush1.msra.mxu0 0.0
    %1058 = vmatprep.subr.mxu0 0.0
    %1059 = vmatpush1.msra.mxu0 0.0
    %1060 = vmatprep.subr.mxu0 0.0
    %1061 = vmatpush1.msra.mxu0 0.0
    %1062 = vmatprep.subr.mxu0 0.0
    %1063 = vmatpush1.msra.mxu0 0.0
    %1064 = vmatprep.subr.mxu0 0.0
    %1065 = vmatpush1.msra.mxu0 0.0
    %1066 = vmatprep.subr.mxu0 0.0
    %1067 = vmatpush1.msra.mxu0 0.0
    %1068 = vmatprep.subr.mxu0 0.0
    %1069 = vmatpush1.msra.mxu0 0.0
    %1070 = vmatprep.subr.mxu0 0.0
    %1071 = vmatpush1.msra.mxu0 0.0
    %1072 = vmatprep.subr.mxu0 0.0
    %1073 = vmatpush1.msra.mxu0 0.0
    %1074 = vmatprep.subr.mxu0 0.0
    %1075 = vmatpush1.msra.mxu0 0.0
    %1076 = vmatprep.subr.mxu0 0.0
    %1077 = vmatpush1.msra.mxu0 0.0
    %1078 = vmatprep.subr.mxu0 0.0
    %1079 = vmatpush1.msra.mxu0 0.0
    %1080 = vmatprep.subr.mxu0 0.0
    %1081 = vmatpush1.msra.mxu0 0.0
    %1082 = vmatprep.mubr.f32.mxu0 0.0
    %v1083 = vand.u32 %v391, 4294901760
    %1084 = vmatmul.mubr.f32.gmra.mrb[0].mxu0 %v1083
    %v1085 = vpop.f32.mrb[0].mxu0
    %v1086 = vadd.f32 %v935, %v1085
    %v1087 = vpop.f32.mrb[0].mxu0
    %1088 = vmatprep.mubr.f32.mxu0 0.0
    %v1089 = vand.u32 %v394, 4294901760
    %1090 = vmatmul.mubr.f32.gmra.mrb[0].mxu0 %v1089
    %v1091 = vpop.f32.mrb[0].mxu0
    %v1092 = vadd.f32 %v943, %v1091
    %v1093 = vpop.f32.mrb[0].mxu0
    %1094 = vmatprep.mubr.f32.mxu0 0.0
    %v1095 = vand.u32 %v397, 4294901760
    %1096 = vmatmul.mubr.f32.gmra.mrb[0].mxu0 %v1095
    %v1097 = vpop.f32.mrb[0].mxu0
    %v1098 = vadd.f32 %v951, %v1097
    %v1099 = vpop.f32.mrb[0].mxu0
    %1100 = vmatprep.mubr.f32.mxu0 0.0
    %v1101 = vand.u32 %v400, 4294901760
    %1102 = vmatmul.mubr.f32.gmra.mrb[0].mxu0 %v1101
    %v1103 = vpop.f32.mrb[0].mxu0
    %v1104 = vadd.f32 %v959, %v1103
    %v1105 = vpop.f32.mrb[0].mxu0
    %1106 = vmatprep.mubr.f32.mxu0 0.0
    %v1107 = vand.u32 %v403, 4294901760
    %1108 = vmatmul.mubr.f32.gmra.mrb[0].mxu0 %v1107
    %v1109 = vpop.f32.mrb[0].mxu0
    %v1110 = vadd.f32 %v967, %v1109
    %v1111 = vpop.f32.mrb[0].mxu0
    %1112 = vmatprep.mubr.f32.mxu0 0.0
    %v1113 = vand.u32 %v406, 4294901760
    %1114 = vmatmul.mubr.f32.gmra.mrb[0].mxu0 %v1113
    %v1115 = vpop.f32.mrb[0].mxu0
    %v1116 = vadd.f32 %v975, %v1115
    %v1117 = vpop.f32.mrb[0].mxu0
    %1118 = vmatprep.mubr.f32.mxu0 0.0
    %v1119 = vand.u32 %v409, 4294901760
    %1120 = vmatmul.mubr.f32.gmra.mrb[0].mxu0 %v1119
    %v1121 = vpop.f32.mrb[0].mxu0
    %v1122 = vadd.f32 %v983, %v1121
    %v1123 = vpop.f32.mrb[0].mxu0
    %1124 = vmatprep.mubr.f32.mxu0 0.0
    %v1125 = vand.u32 %v412, 4294901760
    %1126 = vmatmul.mubr.f32.gmra.mrb[0].mxu0 %v1125
    %v1127 = vpop.f32.mrb[0].mxu0
    %v1128 = vadd.f32 %v991, %v1127
    %v1129 = vpop.f32.mrb[0].mxu0
    %1130 = vdwg.mxu0
    %1131 = vmatprep.subr.mxu0 0.0
    %v1132 = vand.u32 %v42, 4294901760
    %1133 = vmatpush1.msra.mxu0 %v1132
    %1134 = vmatprep.subr.mxu0 0.0
    %v1135 = vand.u32 %v43, 4294901760
    %1136 = vmatpush1.msra.mxu0 %v1135
    %1137 = vmatprep.subr.mxu0 0.0
    %v1138 = vand.u32 %v44, 4294901760
    %1139 = vmatpush1.msra.mxu0 %v1138
    %1140 = vmatprep.subr.mxu0 0.0
    %v1141 = vand.u32 %v45, 4294901760
    %1142 = vmatpush1.msra.mxu0 %v1141
    %1143 = vmatprep.subr.mxu0 0.0
    %v1144 = vand.u32 %v46, 4294901760
    %1145 = vmatpush1.msra.mxu0 %v1144
    %1146 = vmatprep.subr.mxu0 0.0
    %v1147 = vand.u32 %v47, 4294901760
    %1148 = vmatpush1.msra.mxu0 %v1147
    %1149 = vmatprep.subr.mxu0 0.0
    %v1150 = vand.u32 %v48, 4294901760
    %1151 = vmatpush1.msra.mxu0 %v1150
    %1152 = vmatprep.subr.mxu0 0.0
    %v1153 = vand.u32 %v49, 4294901760
    %1154 = vmatpush1.msra.mxu0 %v1153
    %1155 = vmatprep.subr.mxu0 0.0
    %1156 = vmatpush1.msra.mxu0 0.0
    %1157 = vmatprep.subr.mxu0 0.0
    %1158 = vmatpush1.msra.mxu0 0.0
    %1159 = vmatprep.subr.mxu0 0.0
    %1160 = vmatpush1.msra.mxu0 0.0
    %1161 = vmatprep.subr.mxu0 0.0
    %1162 = vmatpush1.msra.mxu0 0.0
    %1163 = vmatprep.subr.mxu0 0.0
    %1164 = vmatpush1.msra.mxu0 0.0
    %1165 = vmatprep.subr.mxu0 0.0
    %1166 = vmatpush1.msra.mxu0 0.0
    %1167 = vmatprep.subr.mxu0 0.0
    %1168 = vmatpush1.msra.mxu0 0.0
    %1169 = vmatprep.subr.mxu0 0.0
    %1170 = vmatpush1.msra.mxu0 0.0
    %1171 = vmatprep.subr.mxu0 0.0
    %1172 = vmatpush1.msra.mxu0 0.0
    %1173 = vmatprep.subr.mxu0 0.0
    %1174 = vmatpush1.msra.mxu0 0.0
    %1175 = vmatprep.subr.mxu0 0.0
    %1176 = vmatpush1.msra.mxu0 0.0
    %1177 = vmatprep.subr.mxu0 0.0
    %1178 = vmatpush1.msra.mxu0 0.0
    %1179 = vmatprep.subr.mxu0 0.0
    %1180 = vmatpush1.msra.mxu0 0.0
    %1181 = vmatprep.subr.mxu0 0.0
    %1182 = vmatpush1.msra.mxu0 0.0
    %1183 = vmatprep.subr.mxu0 0.0
    %1184 = vmatpush1.msra.mxu0 0.0
    %1185 = vmatprep.subr.mxu0 0.0
    %1186 = vmatpush1.msra.mxu0 0.0
    %1187 = vmatprep.subr.mxu0 0.0
    %1188 = vmatpush1.msra.mxu0 0.0
    %1189 = vmatprep.subr.mxu0 0.0
    %1190 = vmatpush1.msra.mxu0 0.0
    %1191 = vmatprep.subr.mxu0 0.0
    %1192 = vmatpush1.msra.mxu0 0.0
    %1193 = vmatprep.subr.mxu0 0.0
    %1194 = vmatpush1.msra.mxu0 0.0
    %1195 = vmatprep.subr.mxu0 0.0
    %1196 = vmatpush1.msra.mxu0 0.0
    %1197 = vmatprep.subr.mxu0 0.0
    %1198 = vmatpush1.msra.mxu0 0.0
    %1199 = vmatprep.subr.mxu0 0.0
    %1200 = vmatpush1.msra.mxu0 0.0
    %1201 = vmatprep.subr.mxu0 0.0
    %1202 = vmatpush1.msra.mxu0 0.0
    %1203 = vmatprep.mubr.f32.mxu0 0.0
    %v1204 = vand.u32 %v391, 4294901760
    %1205 = vmatmul.mubr.f32.gmra.mrb[0].mxu0 %v1204
    %v1206 = vpop.f32.mrb[0].mxu0
    %v1207 = vadd.f32 %v1086, %v1206
    %v1208 = vpop.f32.mrb[0].mxu0
    %1209 = vmatprep.mubr.f32.mxu0 0.0
    %v1210 = vand.u32 %v394, 4294901760
    %1211 = vmatmul.mubr.f32.gmra.mrb[0].mxu0 %v1210
    %v1212 = vpop.f32.mrb[0].mxu0
    %v1213 = vadd.f32 %v1092, %v1212
    %v1214 = vpop.f32.mrb[0].mxu0
    %1215 = vmatprep.mubr.f32.mxu0 0.0
    %v1216 = vand.u32 %v397, 4294901760
    %1217 = vmatmul.mubr.f32.gmra.mrb[0].mxu0 %v1216
    %v1218 = vpop.f32.mrb[0].mxu0
    %v1219 = vadd.f32 %v1098, %v1218
    %v1220 = vpop.f32.mrb[0].mxu0
    %1221 = vmatprep.mubr.f32.mxu0 0.0
    %v1222 = vand.u32 %v400, 4294901760
    %1223 = vmatmul.mubr.f32.gmra.mrb[0].mxu0 %v1222
    %v1224 = vpop.f32.mrb[0].mxu0
    %v1225 = vadd.f32 %v1104, %v1224
    %v1226 = vpop.f32.mrb[0].mxu0
    %1227 = vmatprep.mubr.f32.mxu0 0.0
    %v1228 = vand.u32 %v403, 4294901760
    %1229 = vmatmul.mubr.f32.gmra.mrb[0].mxu0 %v1228
    %v1230 = vpop.f32.mrb[0].mxu0
    %v1231 = vadd.f32 %v1110, %v1230
    %v1232 = vpop.f32.mrb[0].mxu0
    %1233 = vmatprep.mubr.f32.mxu0 0.0
    %v1234 = vand.u32 %v406, 4294901760
    %1235 = vmatmul.mubr.f32.gmra.mrb[0].mxu0 %v1234
    %v1236 = vpop.f32.mrb[0].mxu0
    %v1237 = vadd.f32 %v1116, %v1236
    %v1238 = vpop.f32.mrb[0].mxu0
    %1239 = vmatprep.mubr.f32.mxu0 0.0
    %v1240 = vand.u32 %v409, 4294901760
    %1241 = vmatmul.mubr.f32.gmra.mrb[0].mxu0 %v1240
    %v1242 = vpop.f32.mrb[0].mxu0
    %v1243 = vadd.f32 %v1122, %v1242
    %v1244 = vpop.f32.mrb[0].mxu0
    %1245 = vmatprep.mubr.f32.mxu0 0.0
    %v1246 = vand.u32 %v412, 4294901760
    %1247 = vmatmul.mubr.f32.gmra.mrb[0].mxu0 %v1246
    %v1248 = vpop.f32.mrb[0].mxu0
    %v1249 = vadd.f32 %v1128, %v1248
    %v1250 = vpop.f32.mrb[0].mxu0
    %1251 = vdwg.mxu0
    %v1252 = vmax.f32 %v1207, 0.0
    %v1253 = vmax.f32 %v1213, 0.0
    %v1254 = vmax.f32 %v1219, 0.0
    %v1255 = vmax.f32 %v1225, 0.0
    %v1256 = vmax.f32 %v1231, 0.0
    %v1257 = vmax.f32 %v1237, 0.0
    %v1258 = vmax.f32 %v1243, 0.0
    %v1259 = vmax.f32 %v1249, 0.0
    %v1260 = vsel %vm112, %v1252, 0.0
    %1261 = vadd.xlane.f32.xlu0 %v1260
    %v1262 = vpop.xlane.xlu0 %1261
    %v1263 = vsel %vm112, %v1253, 0.0
    %1264 = vadd.xlane.f32.xlu0 %v1263
    %v1265 = vpop.xlane.xlu0 %1264
    %v1266 = vsel %vm112, %v1254, 0.0
    %1267 = vadd.xlane.f32.xlu0 %v1266
    %v1268 = vpop.xlane.xlu0 %1267
    %v1269 = vsel %vm112, %v1255, 0.0
    %1270 = vadd.xlane.f32.xlu0 %v1269
    %v1271 = vpop.xlane.xlu0 %1270
    %v1272 = vsel %vm112, %v1256, 0.0
    %1273 = vadd.xlane.f32.xlu0 %v1272
    %v1274 = vpop.xlane.xlu0 %1273
    %v1275 = vsel %vm112, %v1257, 0.0
    %1276 = vadd.xlane.f32.xlu0 %v1275
    %v1277 = vpop.xlane.xlu0 %1276
    %v1278 = vsel %vm112, %v1258, 0.0
    %1279 = vadd.xlane.f32.xlu0 %v1278
    %v1280 = vpop.xlane.xlu0 %1279
    %v1281 = vsel %vm112, %v1259, 0.0
    %1282 = vadd.xlane.f32.xlu0 %v1281
    %v1283 = vpop.xlane.xlu0 %1282
    %v1284 = vmul.f32 %v1252, %v1252
    %v1285 = vmul.f32 %v1253, %v1253
    %v1286 = vmul.f32 %v1254, %v1254
    %v1287 = vmul.f32 %v1255, %v1255
    %v1288 = vmul.f32 %v1256, %v1256
    %v1289 = vmul.f32 %v1257, %v1257
    %v1290 = vmul.f32 %v1258, %v1258
    %v1291 = vmul.f32 %v1259, %v1259
    %v1292 = vsel %vm112, %v1284, 0.0
    %1293 = vadd.xlane.f32.xlu0 %v1292
    %v1294 = vpop.xlane.xlu0 %1293
    %v1295 = vsel %vm112, %v1285, 0.0
    %1296 = vadd.xlane.f32.xlu0 %v1295
    %v1297 = vpop.xlane.xlu0 %1296
    %v1298 = vsel %vm112, %v1286, 0.0
    %1299 = vadd.xlane.f32.xlu0 %v1298
    %v1300 = vpop.xlane.xlu0 %1299
    %v1301 = vsel %vm112, %v1287, 0.0
    %1302 = vadd.xlane.f32.xlu0 %v1301
    %v1303 = vpop.xlane.xlu0 %1302
    %v1304 = vsel %vm112, %v1288, 0.0
    %1305 = vadd.xlane.f32.xlu0 %v1304
    %v1306 = vpop.xlane.xlu0 %1305
    %v1307 = vsel %vm112, %v1289, 0.0
    %1308 = vadd.xlane.f32.xlu0 %v1307
    %v1309 = vpop.xlane.xlu0 %1308
    %v1310 = vsel %vm112, %v1290, 0.0
    %1311 = vadd.xlane.f32.xlu0 %v1310
    %v1312 = vpop.xlane.xlu0 %1311
    %v1313 = vsel %vm112, %v1291, 0.0
    %1314 = vadd.xlane.f32.xlu0 %v1313
    %v1315 = vpop.xlane.xlu0 %1314
    %v1316 = vmul.f32 %v1262, 0.015625
    %v1317 = vmul.f32 %v1265, 0.015625
    %v1318 = vmul.f32 %v1268, 0.015625
    %v1319 = vmul.f32 %v1271, 0.015625
    %v1320 = vmul.f32 %v1274, 0.015625
    %v1321 = vmul.f32 %v1277, 0.015625
    %v1322 = vmul.f32 %v1280, 0.015625
    %v1323 = vmul.f32 %v1283, 0.015625
    %v1324 = vmul.f32 %v1294, 0.015625
    %v1325 = vmul.f32 %v1297, 0.015625
    %v1326 = vmul.f32 %v1300, 0.015625
    %v1327 = vmul.f32 %v1303, 0.015625
    %v1328 = vmul.f32 %v1306, 0.015625
    %v1329 = vmul.f32 %v1309, 0.015625
    %v1330 = vmul.f32 %v1312, 0.015625
    %v1331 = vmul.f32 %v1315, 0.015625
    %v1332 = vmul.f32 %v1316, %v1316
    %v1333 = vmul.f32 %v1317, %v1317
    %v1334 = vmul.f32 %v1318, %v1318
    %v1335 = vmul.f32 %v1319, %v1319
    %v1336 = vmul.f32 %v1320, %v1320
    %v1337 = vmul.f32 %v1321, %v1321
    %v1338 = vmul.f32 %v1322, %v1322
    %v1339 = vmul.f32 %v1323, %v1323
    %v1340 = vsub.f32 %v1324, %v1332
    %v1341 = vsub.f32 %v1325, %v1333
    %v1342 = vsub.f32 %v1326, %v1334
    %v1343 = vsub.f32 %v1327, %v1335
    %v1344 = vsub.f32 %v1328, %v1336
    %v1345 = vsub.f32 %v1329, %v1337
    %v1346 = vsub.f32 %v1330, %v1338
    %v1347 = vsub.f32 %v1331, %v1339
    %v1348 = vmax.f32 %v1340, 0.0
    %v1349 = vmax.f32 %v1341, 0.0
    %v1350 = vmax.f32 %v1342, 0.0
    %v1351 = vmax.f32 %v1343, 0.0
    %v1352 = vmax.f32 %v1344, 0.0
    %v1353 = vmax.f32 %v1345, 0.0
    %v1354 = vmax.f32 %v1346, 0.0
    %v1355 = vmax.f32 %v1347, 0.0
    %v1356 = vsub.f32 %v1252, %v1316
    %v1357 = vsub.f32 %v1253, %v1317
    %v1358 = vsub.f32 %v1254, %v1318
    %v1359 = vsub.f32 %v1255, %v1319
    %v1360 = vsub.f32 %v1256, %v1320
    %v1361 = vsub.f32 %v1257, %v1321
    %v1362 = vsub.f32 %v1258, %v1322
    %v1363 = vsub.f32 %v1259, %v1323
    %v1364 = vadd.f32 %v1348, 1e-05
    %v1365 = vadd.f32 %v1349, 1e-05
    %v1366 = vadd.f32 %v1350, 1e-05
    %v1367 = vadd.f32 %v1351, 1e-05
    %v1368 = vadd.f32 %v1352, 1e-05
    %v1369 = vadd.f32 %v1353, 1e-05
    %v1370 = vadd.f32 %v1354, 1e-05
    %v1371 = vadd.f32 %v1355, 1e-05
    %v1372 = vrsqrt.pop %v1364
    %v1373 = vrsqrt.pop %v1365
    %v1374 = vrsqrt.pop %v1366
    %v1375 = vrsqrt.pop %v1367
    %v1376 = vrsqrt.pop %v1368
    %v1377 = vrsqrt.pop %v1369
    %v1378 = vrsqrt.pop %v1370
    %v1379 = vrsqrt.pop %v1371
    %v1380 = vmul.f32 %v1356, %v1372
    %v1381 = vmul.f32 %v1357, %v1373
    %v1382 = vmul.f32 %v1358, %v1374
    %v1383 = vmul.f32 %v1359, %v1375
    %v1384 = vmul.f32 %v1360, %v1376
    %v1385 = vmul.f32 %v1361, %v1377
    %v1386 = vmul.f32 %v1362, %v1378
    %v1387 = vmul.f32 %v1363, %v1379
    %v1388 = vlaneseq
    %v1389 = vshrl.u32 %v1388, 7
    %v1390 = vsub.s32 0, %v1389
    %v1391 = vrot.slane %v40, %v1390
    %v1392 = vmul.f32 %v1380, %v1391
    %v1393 = vmul.f32 %v1381, %v1391
    %v1394 = vmul.f32 %v1382, %v1391
    %v1395 = vmul.f32 %v1383, %v1391
    %v1396 = vmul.f32 %v1384, %v1391
    %v1397 = vmul.f32 %v1385, %v1391
    %v1398 = vmul.f32 %v1386, %v1391
    %v1399 = vmul.f32 %v1387, %v1391
    %v1400 = vlaneseq
    %v1401 = vshrl.u32 %v1400, 7
    %v1402 = vsub.s32 0, %v1401
    %v1403 = vrot.slane %v41, %v1402
    %v1404 = vadd.f32 %v1392, %v1403
    %v1405 = vadd.f32 %v1393, %v1403
    %v1406 = vadd.f32 %v1394, %v1403
    %v1407 = vadd.f32 %v1395, %v1403
    %v1408 = vadd.f32 %v1396, %v1403
    %v1409 = vadd.f32 %v1397, %v1403
    %v1410 = vadd.f32 %v1398, %v1403
    %v1411 = vadd.f32 %v1399, %v1403
    %v1412 = vld [vmem:[%s1] sm:$0xff]
    %1414 = vset.pattern.permute.xlu0 0
    %1415 = vperm.xlu0 %1414, %v1412
    %v1416 = vpop.permute.xlu0 %1415
    %v1418 = vmul.f32 %v1404, %v1416
    %v1419 = vadd.f32 %v1418, 0.0
    %1420 = vset.pattern.permute.xlu0 1
    %1421 = vperm.xlu0 %1420, %v1412
    %v1422 = vpop.permute.xlu0 %1421
    %v1424 = vmul.f32 %v1405, %v1422
    %v1425 = vadd.f32 %v1419, %v1424
    %1426 = vset.pattern.permute.xlu0 2
    %1427 = vperm.xlu0 %1426, %v1412
    %v1428 = vpop.permute.xlu0 %1427
    %v1430 = vmul.f32 %v1406, %v1428
    %v1431 = vadd.f32 %v1425, %v1430
    %1432 = vset.pattern.permute.xlu0 3
    %1433 = vperm.xlu0 %1432, %v1412
    %v1434 = vpop.permute.xlu0 %1433
    %v1436 = vmul.f32 %v1407, %v1434
    %v1437 = vadd.f32 %v1431, %v1436
    %1438 = vset.pattern.permute.xlu0 4
    %1439 = vperm.xlu0 %1438, %v1412
    %v1440 = vpop.permute.xlu0 %1439
    %v1442 = vmul.f32 %v1408, %v1440
    %v1443 = vadd.f32 %v1437, %v1442
    %1444 = vset.pattern.permute.xlu0 5
    %1445 = vperm.xlu0 %1444, %v1412
    %v1446 = vpop.permute.xlu0 %1445
    %v1448 = vmul.f32 %v1409, %v1446
    %v1449 = vadd.f32 %v1443, %v1448
    %1450 = vset.pattern.permute.xlu0 6
    %1451 = vperm.xlu0 %1450, %v1412
    %v1452 = vpop.permute.xlu0 %1451
    %v1454 = vmul.f32 %v1410, %v1452
    %v1455 = vadd.f32 %v1449, %v1454
    %1456 = vset.pattern.permute.xlu0 7
    %1457 = vperm.xlu0 %1456, %v1412
    %v1458 = vpop.permute.xlu0 %1457
    %v1460 = vmul.f32 %v1411, %v1458
    %v1461 = vadd.f32 %v1455, %v1460
    %vm1462 = vcmask 64512
    %v1463 = vsel %vm1462, %v1412, 0.0
    %1464 = vadd.xlane.f32.xlu0 %v1463
    %v1465 = vpop.xlane.xlu0 %1464
    %v1466 = vmax.f32 %v1465, 1.0
    %v1467 = vrcp.pop %v1466
    %v1468 = vmul.f32 %v1461, %v1467
    %v1469 = vld [vmem:[%s2] sm:$0xff]
    %1471 = vset.pattern.permute.xlu0 0
    %1472 = vperm.xlu0 %1471, %v1469
    %v1473 = vpop.permute.xlu0 %1472
    %v1475 = vlaneseq
    %v1476 = vshrl.u32 %v1475, 7
    %v1477 = vsub.s32 0, %v1476
    %v1478 = vrot.slane %v50, %v1477
    %v1479 = vmul.f32 %v1473, %v1478
    %v1480 = vlaneseq
    %v1481 = vshrl.u32 %v1480, 7
    %v1482 = vsub.s32 0, %v1481
    %v1483 = vrot.slane %v51, %v1482
    %v1484 = vadd.f32 %v1479, %v1483
    %1485 = vset.pattern.permute.xlu0 1
    %1486 = vperm.xlu0 %1485, %v1469
    %v1487 = vpop.permute.xlu0 %1486
    %v1489 = vlaneseq
    %v1490 = vshrl.u32 %v1489, 7
    %v1491 = vsub.s32 1, %v1490
    %v1492 = vrot.slane %v50, %v1491
    %v1493 = vmul.f32 %v1487, %v1492
    %v1494 = vadd.f32 %v1484, %v1493
    %1495 = vset.pattern.permute.xlu0 2
    %1496 = vperm.xlu0 %1495, %v1469
    %v1497 = vpop.permute.xlu0 %1496
    %v1499 = vlaneseq
    %v1500 = vshrl.u32 %v1499, 7
    %v1501 = vsub.s32 2, %v1500
    %v1502 = vrot.slane %v50, %v1501
    %v1503 = vmul.f32 %v1497, %v1502
    %v1504 = vadd.f32 %v1494, %v1503
    %1505 = vset.pattern.permute.xlu0 3
    %1506 = vperm.xlu0 %1505, %v1469
    %v1507 = vpop.permute.xlu0 %1506
    %v1509 = vlaneseq
    %v1510 = vshrl.u32 %v1509, 7
    %v1511 = vsub.s32 3, %v1510
    %v1512 = vrot.slane %v50, %v1511
    %v1513 = vmul.f32 %v1507, %v1512
    %v1514 = vadd.f32 %v1504, %v1513
    %1515 = vset.pattern.permute.xlu0 4
    %1516 = vperm.xlu0 %1515, %v1469
    %v1517 = vpop.permute.xlu0 %1516
    %v1519 = vlaneseq
    %v1520 = vshrl.u32 %v1519, 7
    %v1521 = vsub.s32 4, %v1520
    %v1522 = vrot.slane %v50, %v1521
    %v1523 = vmul.f32 %v1517, %v1522
    %v1524 = vadd.f32 %v1514, %v1523
    %v1525 = vmax.f32 %v1524, 0.0
    %vm1526 = vcmask 130048
    %v1527 = vsel %vm1526, %v1525, 0.0
    %1528 = vadd.xlane.f32.xlu0 %v1527
    %v1529 = vpop.xlane.xlu0 %1528
    %v1530 = vmul.f32 %v1525, %v1525
    %v1531 = vsel %vm1526, %v1530, 0.0
    %1532 = vadd.xlane.f32.xlu0 %v1531
    %v1533 = vpop.xlane.xlu0 %1532
    %v1534 = vmul.f32 %v1529, 0.0625
    %v1535 = vmul.f32 %v1533, 0.0625
    %v1536 = vmul.f32 %v1534, %v1534
    %v1537 = vsub.f32 %v1535, %v1536
    %v1538 = vmax.f32 %v1537, 0.0
    %v1539 = vsub.f32 %v1525, %v1534
    %v1540 = vadd.f32 %v1538, 1e-05
    %v1541 = vrsqrt.pop %v1540
    %v1542 = vmul.f32 %v1539, %v1541
    %v1543 = vlaneseq
    %v1544 = vshrl.u32 %v1543, 7
    %v1545 = vsub.s32 0, %v1544
    %v1546 = vrot.slane %v52, %v1545
    %v1547 = vmul.f32 %v1542, %v1546
    %v1548 = vlaneseq
    %v1549 = vshrl.u32 %v1548, 7
    %v1550 = vsub.s32 0, %v1549
    %v1551 = vrot.slane %v53, %v1550
    %v1552 = vadd.f32 %v1547, %v1551
    %v1553 = vlaneseq
    %v1554 = vshrl.u32 %v1553, 7
    %v1555 = vsub.s32 0, %v1554
    %v1556 = vrot.slane %v56, %v1555
    %v1558 = vsel %vm1526, %v1552, 0
    %1560 = vmatprep.subr.mxu0 0.0
    %v1561 = vand.u32 %v54, 4294901760
    %1562 = vmatpush1.msra.mxu0 %v1561
    %1563 = vmatprep.subr.mxu0 0.0
    %v1564 = vand.u32 %v55, 4294901760
    %1565 = vmatpush1.msra.mxu0 %v1564
    %1566 = vmatprep.subr.mxu0 0.0
    %1567 = vmatpush1.msra.mxu0 0.0
    %1568 = vmatprep.subr.mxu0 0.0
    %1569 = vmatpush1.msra.mxu0 0.0
    %1570 = vmatprep.subr.mxu0 0.0
    %1571 = vmatpush1.msra.mxu0 0.0
    %1572 = vmatprep.subr.mxu0 0.0
    %1573 = vmatpush1.msra.mxu0 0.0
    %1574 = vmatprep.subr.mxu0 0.0
    %1575 = vmatpush1.msra.mxu0 0.0
    %1576 = vmatprep.subr.mxu0 0.0
    %1577 = vmatpush1.msra.mxu0 0.0
    %1578 = vmatprep.subr.mxu0 0.0
    %1579 = vmatpush1.msra.mxu0 0.0
    %1580 = vmatprep.subr.mxu0 0.0
    %1581 = vmatpush1.msra.mxu0 0.0
    %1582 = vmatprep.subr.mxu0 0.0
    %1583 = vmatpush1.msra.mxu0 0.0
    %1584 = vmatprep.subr.mxu0 0.0
    %1585 = vmatpush1.msra.mxu0 0.0
    %1586 = vmatprep.subr.mxu0 0.0
    %1587 = vmatpush1.msra.mxu0 0.0
    %1588 = vmatprep.subr.mxu0 0.0
    %1589 = vmatpush1.msra.mxu0 0.0
    %1590 = vmatprep.subr.mxu0 0.0
    %1591 = vmatpush1.msra.mxu0 0.0
    %1592 = vmatprep.subr.mxu0 0.0
    %1593 = vmatpush1.msra.mxu0 0.0
    %1594 = vmatprep.subr.mxu0 0.0
    %1595 = vmatpush1.msra.mxu0 0.0
    %1596 = vmatprep.subr.mxu0 0.0
    %1597 = vmatpush1.msra.mxu0 0.0
    %1598 = vmatprep.subr.mxu0 0.0
    %1599 = vmatpush1.msra.mxu0 0.0
    %1600 = vmatprep.subr.mxu0 0.0
    %1601 = vmatpush1.msra.mxu0 0.0
    %1602 = vmatprep.subr.mxu0 0.0
    %1603 = vmatpush1.msra.mxu0 0.0
    %1604 = vmatprep.subr.mxu0 0.0
    %1605 = vmatpush1.msra.mxu0 0.0
    %1606 = vmatprep.subr.mxu0 0.0
    %1607 = vmatpush1.msra.mxu0 0.0
    %1608 = vmatprep.subr.mxu0 0.0
    %1609 = vmatpush1.msra.mxu0 0.0
    %1610 = vmatprep.subr.mxu0 0.0
    %1611 = vmatpush1.msra.mxu0 0.0
    %1612 = vmatprep.subr.mxu0 0.0
    %1613 = vmatpush1.msra.mxu0 0.0
    %1614 = vmatprep.subr.mxu0 0.0
    %1615 = vmatpush1.msra.mxu0 0.0
    %1616 = vmatprep.subr.mxu0 0.0
    %1617 = vmatpush1.msra.mxu0 0.0
    %1618 = vmatprep.subr.mxu0 0.0
    %1619 = vmatpush1.msra.mxu0 0.0
    %1620 = vmatprep.subr.mxu0 0.0
    %1621 = vmatpush1.msra.mxu0 0.0
    %1622 = vmatprep.subr.mxu0 0.0
    %1623 = vmatpush1.msra.mxu0 0.0
    %1624 = vmatprep.subr.mxu0 0.0
    %1625 = vmatpush1.msra.mxu0 0.0
    %1626 = vmatprep.mubr.f32.mxu0 0.0
    %v1627 = vand.u32 %v1558, 4294901760
    %v1628 = vsub.f32 %v1558, %v1627
    %v1629 = vand.u32 %v1628, 4294901760
    %v1630 = vsub.f32 %v1628, %v1629
    %v1631 = vand.u32 %v1630, 4294901760
    %1632 = vmatmul.mubr.f32.gmra.mrb[0].mxu0 %v1631
    %v1633 = vpop.f32.mrb[0].mxu0
    %v1634 = vadd.f32 %v1556, %v1633
    %v1635 = vpop.f32.mrb[0].mxu0
    %1636 = vdwg.mxu0
    %1637 = vmatprep.subr.mxu0 0.0
    %v1638 = vand.u32 %v54, 4294901760
    %v1639 = vsub.f32 %v54, %v1638
    %v1640 = vand.u32 %v1639, 4294901760
    %v1641 = vsub.f32 %v1639, %v1640
    %v1642 = vand.u32 %v1641, 4294901760
    %1643 = vmatpush1.msra.mxu0 %v1642
    %1644 = vmatprep.subr.mxu0 0.0
    %v1645 = vand.u32 %v55, 4294901760
    %v1646 = vsub.f32 %v55, %v1645
    %v1647 = vand.u32 %v1646, 4294901760
    %v1648 = vsub.f32 %v1646, %v1647
    %v1649 = vand.u32 %v1648, 4294901760
    %1650 = vmatpush1.msra.mxu0 %v1649
    %1651 = vmatprep.subr.mxu0 0.0
    %1652 = vmatpush1.msra.mxu0 0.0
    %1653 = vmatprep.subr.mxu0 0.0
    %1654 = vmatpush1.msra.mxu0 0.0
    %1655 = vmatprep.subr.mxu0 0.0
    %1656 = vmatpush1.msra.mxu0 0.0
    %1657 = vmatprep.subr.mxu0 0.0
    %1658 = vmatpush1.msra.mxu0 0.0
    %1659 = vmatprep.subr.mxu0 0.0
    %1660 = vmatpush1.msra.mxu0 0.0
    %1661 = vmatprep.subr.mxu0 0.0
    %1662 = vmatpush1.msra.mxu0 0.0
    %1663 = vmatprep.subr.mxu0 0.0
    %1664 = vmatpush1.msra.mxu0 0.0
    %1665 = vmatprep.subr.mxu0 0.0
    %1666 = vmatpush1.msra.mxu0 0.0
    %1667 = vmatprep.subr.mxu0 0.0
    %1668 = vmatpush1.msra.mxu0 0.0
    %1669 = vmatprep.subr.mxu0 0.0
    %1670 = vmatpush1.msra.mxu0 0.0
    %1671 = vmatprep.subr.mxu0 0.0
    %1672 = vmatpush1.msra.mxu0 0.0
    %1673 = vmatprep.subr.mxu0 0.0
    %1674 = vmatpush1.msra.mxu0 0.0
    %1675 = vmatprep.subr.mxu0 0.0
    %1676 = vmatpush1.msra.mxu0 0.0
    %1677 = vmatprep.subr.mxu0 0.0
    %1678 = vmatpush1.msra.mxu0 0.0
    %1679 = vmatprep.subr.mxu0 0.0
    %1680 = vmatpush1.msra.mxu0 0.0
    %1681 = vmatprep.subr.mxu0 0.0
    %1682 = vmatpush1.msra.mxu0 0.0
    %1683 = vmatprep.subr.mxu0 0.0
    %1684 = vmatpush1.msra.mxu0 0.0
    %1685 = vmatprep.subr.mxu0 0.0
    %1686 = vmatpush1.msra.mxu0 0.0
    %1687 = vmatprep.subr.mxu0 0.0
    %1688 = vmatpush1.msra.mxu0 0.0
    %1689 = vmatprep.subr.mxu0 0.0
    %1690 = vmatpush1.msra.mxu0 0.0
    %1691 = vmatprep.subr.mxu0 0.0
    %1692 = vmatpush1.msra.mxu0 0.0
    %1693 = vmatprep.subr.mxu0 0.0
    %1694 = vmatpush1.msra.mxu0 0.0
    %1695 = vmatprep.subr.mxu0 0.0
    %1696 = vmatpush1.msra.mxu0 0.0
    %1697 = vmatprep.subr.mxu0 0.0
    %1698 = vmatpush1.msra.mxu0 0.0
    %1699 = vmatprep.subr.mxu0 0.0
    %1700 = vmatpush1.msra.mxu0 0.0
    %1701 = vmatprep.subr.mxu0 0.0
    %1702 = vmatpush1.msra.mxu0 0.0
    %1703 = vmatprep.subr.mxu0 0.0
    %1704 = vmatpush1.msra.mxu0 0.0
    %1705 = vmatprep.subr.mxu0 0.0
    %1706 = vmatpush1.msra.mxu0 0.0
    %1707 = vmatprep.subr.mxu0 0.0
    %1708 = vmatpush1.msra.mxu0 0.0
    %1709 = vmatprep.subr.mxu0 0.0
    %1710 = vmatpush1.msra.mxu0 0.0
    %1711 = vmatprep.mubr.f32.mxu0 0.0
    %v1712 = vand.u32 %v1558, 4294901760
    %1713 = vmatmul.mubr.f32.gmra.mrb[0].mxu0 %v1712
    %v1714 = vpop.f32.mrb[0].mxu0
    %v1715 = vadd.f32 %v1634, %v1714
    %v1716 = vpop.f32.mrb[0].mxu0
    %1717 = vdwg.mxu0
    %1718 = vmatprep.subr.mxu0 0.0
    %v1719 = vand.u32 %v54, 4294901760
    %v1720 = vsub.f32 %v54, %v1719
    %1721 = vmatpush1.msra.mxu0 %v1720
    %1722 = vmatprep.subr.mxu0 0.0
    %v1723 = vand.u32 %v55, 4294901760
    %v1724 = vsub.f32 %v55, %v1723
    %1725 = vmatpush1.msra.mxu0 %v1724
    %1726 = vmatprep.subr.mxu0 0.0
    %1727 = vmatpush1.msra.mxu0 0.0
    %1728 = vmatprep.subr.mxu0 0.0
    %1729 = vmatpush1.msra.mxu0 0.0
    %1730 = vmatprep.subr.mxu0 0.0
    %1731 = vmatpush1.msra.mxu0 0.0
    %1732 = vmatprep.subr.mxu0 0.0
    %1733 = vmatpush1.msra.mxu0 0.0
    %1734 = vmatprep.subr.mxu0 0.0
    %1735 = vmatpush1.msra.mxu0 0.0
    %1736 = vmatprep.subr.mxu0 0.0
    %1737 = vmatpush1.msra.mxu0 0.0
    %1738 = vmatprep.subr.mxu0 0.0
    %1739 = vmatpush1.msra.mxu0 0.0
    %1740 = vmatprep.subr.mxu0 0.0
    %1741 = vmatpush1.msra.mxu0 0.0
    %1742 = vmatprep.subr.mxu0 0.0
    %1743 = vmatpush1.msra.mxu0 0.0
    %1744 = vmatprep.subr.mxu0 0.0
    %1745 = vmatpush1.msra.mxu0 0.0
    %1746 = vmatprep.subr.mxu0 0.0
    %1747 = vmatpush1.msra.mxu0 0.0
    %1748 = vmatprep.subr.mxu0 0.0
    %1749 = vmatpush1.msra.mxu0 0.0
    %1750 = vmatprep.subr.mxu0 0.0
    %1751 = vmatpush1.msra.mxu0 0.0
    %1752 = vmatprep.subr.mxu0 0.0
    %1753 = vmatpush1.msra.mxu0 0.0
    %1754 = vmatprep.subr.mxu0 0.0
    %1755 = vmatpush1.msra.mxu0 0.0
    %1756 = vmatprep.subr.mxu0 0.0
    %1757 = vmatpush1.msra.mxu0 0.0
    %1758 = vmatprep.subr.mxu0 0.0
    %1759 = vmatpush1.msra.mxu0 0.0
    %1760 = vmatprep.subr.mxu0 0.0
    %1761 = vmatpush1.msra.mxu0 0.0
    %1762 = vmatprep.subr.mxu0 0.0
    %1763 = vmatpush1.msra.mxu0 0.0
    %1764 = vmatprep.subr.mxu0 0.0
    %1765 = vmatpush1.msra.mxu0 0.0
    %1766 = vmatprep.subr.mxu0 0.0
    %1767 = vmatpush1.msra.mxu0 0.0
    %1768 = vmatprep.subr.mxu0 0.0
    %1769 = vmatpush1.msra.mxu0 0.0
    %1770 = vmatprep.subr.mxu0 0.0
    %1771 = vmatpush1.msra.mxu0 0.0
    %1772 = vmatprep.subr.mxu0 0.0
    %1773 = vmatpush1.msra.mxu0 0.0
    %1774 = vmatprep.subr.mxu0 0.0
    %1775 = vmatpush1.msra.mxu0 0.0
    %1776 = vmatprep.subr.mxu0 0.0
    %1777 = vmatpush1.msra.mxu0 0.0
    %1778 = vmatprep.subr.mxu0 0.0
    %1779 = vmatpush1.msra.mxu0 0.0
    %1780 = vmatprep.subr.mxu0 0.0
    %1781 = vmatpush1.msra.mxu0 0.0
    %1782 = vmatprep.subr.mxu0 0.0
    %1783 = vmatpush1.msra.mxu0 0.0
    %1784 = vmatprep.subr.mxu0 0.0
    %1785 = vmatpush1.msra.mxu0 0.0
    %1786 = vmatprep.mubr.f32.mxu0 0.0
    %v1787 = vand.u32 %v1558, 4294901760
    %v1788 = vsub.f32 %v1558, %v1787
    %1789 = vmatmul.mubr.f32.gmra.mrb[0].mxu0 %v1788
    %v1790 = vpop.f32.mrb[0].mxu0
    %v1791 = vadd.f32 %v1715, %v1790
    %v1792 = vpop.f32.mrb[0].mxu0
    %1793 = vdwg.mxu0
    %1794 = vmatprep.subr.mxu0 0.0
    %v1795 = vand.u32 %v54, 4294901760
    %1796 = vmatpush1.msra.mxu0 %v1795
    %1797 = vmatprep.subr.mxu0 0.0
    %v1798 = vand.u32 %v55, 4294901760
    %1799 = vmatpush1.msra.mxu0 %v1798
    %1800 = vmatprep.subr.mxu0 0.0
    %1801 = vmatpush1.msra.mxu0 0.0
    %1802 = vmatprep.subr.mxu0 0.0
    %1803 = vmatpush1.msra.mxu0 0.0
    %1804 = vmatprep.subr.mxu0 0.0
    %1805 = vmatpush1.msra.mxu0 0.0
    %1806 = vmatprep.subr.mxu0 0.0
    %1807 = vmatpush1.msra.mxu0 0.0
    %1808 = vmatprep.subr.mxu0 0.0
    %1809 = vmatpush1.msra.mxu0 0.0
    %1810 = vmatprep.subr.mxu0 0.0
    %1811 = vmatpush1.msra.mxu0 0.0
    %1812 = vmatprep.subr.mxu0 0.0
    %1813 = vmatpush1.msra.mxu0 0.0
    %1814 = vmatprep.subr.mxu0 0.0
    %1815 = vmatpush1.msra.mxu0 0.0
    %1816 = vmatprep.subr.mxu0 0.0
    %1817 = vmatpush1.msra.mxu0 0.0
    %1818 = vmatprep.subr.mxu0 0.0
    %1819 = vmatpush1.msra.mxu0 0.0
    %1820 = vmatprep.subr.mxu0 0.0
    %1821 = vmatpush1.msra.mxu0 0.0
    %1822 = vmatprep.subr.mxu0 0.0
    %1823 = vmatpush1.msra.mxu0 0.0
    %1824 = vmatprep.subr.mxu0 0.0
    %1825 = vmatpush1.msra.mxu0 0.0
    %1826 = vmatprep.subr.mxu0 0.0
    %1827 = vmatpush1.msra.mxu0 0.0
    %1828 = vmatprep.subr.mxu0 0.0
    %1829 = vmatpush1.msra.mxu0 0.0
    %1830 = vmatprep.subr.mxu0 0.0
    %1831 = vmatpush1.msra.mxu0 0.0
    %1832 = vmatprep.subr.mxu0 0.0
    %1833 = vmatpush1.msra.mxu0 0.0
    %1834 = vmatprep.subr.mxu0 0.0
    %1835 = vmatpush1.msra.mxu0 0.0
    %1836 = vmatprep.subr.mxu0 0.0
    %1837 = vmatpush1.msra.mxu0 0.0
    %1838 = vmatprep.subr.mxu0 0.0
    %1839 = vmatpush1.msra.mxu0 0.0
    %1840 = vmatprep.subr.mxu0 0.0
    %1841 = vmatpush1.msra.mxu0 0.0
    %1842 = vmatprep.subr.mxu0 0.0
    %1843 = vmatpush1.msra.mxu0 0.0
    %1844 = vmatprep.subr.mxu0 0.0
    %1845 = vmatpush1.msra.mxu0 0.0
    %1846 = vmatprep.subr.mxu0 0.0
    %1847 = vmatpush1.msra.mxu0 0.0
    %1848 = vmatprep.subr.mxu0 0.0
    %1849 = vmatpush1.msra.mxu0 0.0
    %1850 = vmatprep.subr.mxu0 0.0
    %1851 = vmatpush1.msra.mxu0 0.0
    %1852 = vmatprep.subr.mxu0 0.0
    %1853 = vmatpush1.msra.mxu0 0.0
    %1854 = vmatprep.subr.mxu0 0.0
    %1855 = vmatpush1.msra.mxu0 0.0
    %1856 = vmatprep.subr.mxu0 0.0
    %1857 = vmatpush1.msra.mxu0 0.0
    %1858 = vmatprep.subr.mxu0 0.0
    %1859 = vmatpush1.msra.mxu0 0.0
    %1860 = vmatprep.mubr.f32.mxu0 0.0
    %v1861 = vand.u32 %v1558, 4294901760
    %v1862 = vsub.f32 %v1558, %v1861
    %v1863 = vand.u32 %v1862, 4294901760
    %1864 = vmatmul.mubr.f32.gmra.mrb[0].mxu0 %v1863
    %v1865 = vpop.f32.mrb[0].mxu0
    %v1866 = vadd.f32 %v1791, %v1865
    %v1867 = vpop.f32.mrb[0].mxu0
    %1868 = vdwg.mxu0
    %1869 = vmatprep.subr.mxu0 0.0
    %v1870 = vand.u32 %v54, 4294901760
    %v1871 = vsub.f32 %v54, %v1870
    %v1872 = vand.u32 %v1871, 4294901760
    %1873 = vmatpush1.msra.mxu0 %v1872
    %1874 = vmatprep.subr.mxu0 0.0
    %v1875 = vand.u32 %v55, 4294901760
    %v1876 = vsub.f32 %v55, %v1875
    %v1877 = vand.u32 %v1876, 4294901760
    %1878 = vmatpush1.msra.mxu0 %v1877
    %1879 = vmatprep.subr.mxu0 0.0
    %1880 = vmatpush1.msra.mxu0 0.0
    %1881 = vmatprep.subr.mxu0 0.0
    %1882 = vmatpush1.msra.mxu0 0.0
    %1883 = vmatprep.subr.mxu0 0.0
    %1884 = vmatpush1.msra.mxu0 0.0
    %1885 = vmatprep.subr.mxu0 0.0
    %1886 = vmatpush1.msra.mxu0 0.0
    %1887 = vmatprep.subr.mxu0 0.0
    %1888 = vmatpush1.msra.mxu0 0.0
    %1889 = vmatprep.subr.mxu0 0.0
    %1890 = vmatpush1.msra.mxu0 0.0
    %1891 = vmatprep.subr.mxu0 0.0
    %1892 = vmatpush1.msra.mxu0 0.0
    %1893 = vmatprep.subr.mxu0 0.0
    %1894 = vmatpush1.msra.mxu0 0.0
    %1895 = vmatprep.subr.mxu0 0.0
    %1896 = vmatpush1.msra.mxu0 0.0
    %1897 = vmatprep.subr.mxu0 0.0
    %1898 = vmatpush1.msra.mxu0 0.0
    %1899 = vmatprep.subr.mxu0 0.0
    %1900 = vmatpush1.msra.mxu0 0.0
    %1901 = vmatprep.subr.mxu0 0.0
    %1902 = vmatpush1.msra.mxu0 0.0
    %1903 = vmatprep.subr.mxu0 0.0
    %1904 = vmatpush1.msra.mxu0 0.0
    %1905 = vmatprep.subr.mxu0 0.0
    %1906 = vmatpush1.msra.mxu0 0.0
    %1907 = vmatprep.subr.mxu0 0.0
    %1908 = vmatpush1.msra.mxu0 0.0
    %1909 = vmatprep.subr.mxu0 0.0
    %1910 = vmatpush1.msra.mxu0 0.0
    %1911 = vmatprep.subr.mxu0 0.0
    %1912 = vmatpush1.msra.mxu0 0.0
    %1913 = vmatprep.subr.mxu0 0.0
    %1914 = vmatpush1.msra.mxu0 0.0
    %1915 = vmatprep.subr.mxu0 0.0
    %1916 = vmatpush1.msra.mxu0 0.0
    %1917 = vmatprep.subr.mxu0 0.0
    %1918 = vmatpush1.msra.mxu0 0.0
    %1919 = vmatprep.subr.mxu0 0.0
    %1920 = vmatpush1.msra.mxu0 0.0
    %1921 = vmatprep.subr.mxu0 0.0
    %1922 = vmatpush1.msra.mxu0 0.0
    %1923 = vmatprep.subr.mxu0 0.0
    %1924 = vmatpush1.msra.mxu0 0.0
    %1925 = vmatprep.subr.mxu0 0.0
    %1926 = vmatpush1.msra.mxu0 0.0
    %1927 = vmatprep.subr.mxu0 0.0
    %1928 = vmatpush1.msra.mxu0 0.0
    %1929 = vmatprep.subr.mxu0 0.0
    %1930 = vmatpush1.msra.mxu0 0.0
    %1931 = vmatprep.subr.mxu0 0.0
    %1932 = vmatpush1.msra.mxu0 0.0
    %1933 = vmatprep.subr.mxu0 0.0
    %1934 = vmatpush1.msra.mxu0 0.0
    %1935 = vmatprep.subr.mxu0 0.0
    %1936 = vmatpush1.msra.mxu0 0.0
    %1937 = vmatprep.subr.mxu0 0.0
    %1938 = vmatpush1.msra.mxu0 0.0
    %1939 = vmatprep.mubr.f32.mxu0 0.0
    %v1940 = vand.u32 %v1558, 4294901760
    %1941 = vmatmul.mubr.f32.gmra.mrb[0].mxu0 %v1940
    %v1942 = vpop.f32.mrb[0].mxu0
    %v1943 = vadd.f32 %v1866, %v1942
    %v1944 = vpop.f32.mrb[0].mxu0
    %1945 = vdwg.mxu0
    %1946 = vmatprep.subr.mxu0 0.0
    %v1947 = vand.u32 %v54, 4294901760
    %1948 = vmatpush1.msra.mxu0 %v1947
    %1949 = vmatprep.subr.mxu0 0.0
    %v1950 = vand.u32 %v55, 4294901760
    %1951 = vmatpush1.msra.mxu0 %v1950
    %1952 = vmatprep.subr.mxu0 0.0
    %1953 = vmatpush1.msra.mxu0 0.0
    %1954 = vmatprep.subr.mxu0 0.0
    %1955 = vmatpush1.msra.mxu0 0.0
    %1956 = vmatprep.subr.mxu0 0.0
    %1957 = vmatpush1.msra.mxu0 0.0
    %1958 = vmatprep.subr.mxu0 0.0
    %1959 = vmatpush1.msra.mxu0 0.0
    %1960 = vmatprep.subr.mxu0 0.0
    %1961 = vmatpush1.msra.mxu0 0.0
    %1962 = vmatprep.subr.mxu0 0.0
    %1963 = vmatpush1.msra.mxu0 0.0
    %1964 = vmatprep.subr.mxu0 0.0
    %1965 = vmatpush1.msra.mxu0 0.0
    %1966 = vmatprep.subr.mxu0 0.0
    %1967 = vmatpush1.msra.mxu0 0.0
    %1968 = vmatprep.subr.mxu0 0.0
    %1969 = vmatpush1.msra.mxu0 0.0
    %1970 = vmatprep.subr.mxu0 0.0
    %1971 = vmatpush1.msra.mxu0 0.0
    %1972 = vmatprep.subr.mxu0 0.0
    %1973 = vmatpush1.msra.mxu0 0.0
    %1974 = vmatprep.subr.mxu0 0.0
    %1975 = vmatpush1.msra.mxu0 0.0
    %1976 = vmatprep.subr.mxu0 0.0
    %1977 = vmatpush1.msra.mxu0 0.0
    %1978 = vmatprep.subr.mxu0 0.0
    %1979 = vmatpush1.msra.mxu0 0.0
    %1980 = vmatprep.subr.mxu0 0.0
    %1981 = vmatpush1.msra.mxu0 0.0
    %1982 = vmatprep.subr.mxu0 0.0
    %1983 = vmatpush1.msra.mxu0 0.0
    %1984 = vmatprep.subr.mxu0 0.0
    %1985 = vmatpush1.msra.mxu0 0.0
    %1986 = vmatprep.subr.mxu0 0.0
    %1987 = vmatpush1.msra.mxu0 0.0
    %1988 = vmatprep.subr.mxu0 0.0
    %1989 = vmatpush1.msra.mxu0 0.0
    %1990 = vmatprep.subr.mxu0 0.0
    %1991 = vmatpush1.msra.mxu0 0.0
    %1992 = vmatprep.subr.mxu0 0.0
    %1993 = vmatpush1.msra.mxu0 0.0
    %1994 = vmatprep.subr.mxu0 0.0
    %1995 = vmatpush1.msra.mxu0 0.0
    %1996 = vmatprep.subr.mxu0 0.0
    %1997 = vmatpush1.msra.mxu0 0.0
    %1998 = vmatprep.subr.mxu0 0.0
    %1999 = vmatpush1.msra.mxu0 0.0
    %2000 = vmatprep.subr.mxu0 0.0
    %2001 = vmatpush1.msra.mxu0 0.0
    %2002 = vmatprep.subr.mxu0 0.0
    %2003 = vmatpush1.msra.mxu0 0.0
    %2004 = vmatprep.subr.mxu0 0.0
    %2005 = vmatpush1.msra.mxu0 0.0
    %2006 = vmatprep.subr.mxu0 0.0
    %2007 = vmatpush1.msra.mxu0 0.0
    %2008 = vmatprep.subr.mxu0 0.0
    %2009 = vmatpush1.msra.mxu0 0.0
    %2010 = vmatprep.subr.mxu0 0.0
    %2011 = vmatpush1.msra.mxu0 0.0
    %2012 = vmatprep.mubr.f32.mxu0 0.0
    %v2013 = vand.u32 %v1558, 4294901760
    %2014 = vmatmul.mubr.f32.gmra.mrb[0].mxu0 %v2013
    %v2015 = vpop.f32.mrb[0].mxu0
    %v2016 = vadd.f32 %v1943, %v2015
    %v2017 = vpop.f32.mrb[0].mxu0
    %2018 = vdwg.mxu0
    %v2019 = vmax.f32 %v2016, 0.0
    %v2020 = vsel %vm1526, %v2019, 0.0
    %2021 = vadd.xlane.f32.xlu0 %v2020
    %v2022 = vpop.xlane.xlu0 %2021
    %v2023 = vmul.f32 %v2019, %v2019
    %v2024 = vsel %vm1526, %v2023, 0.0
    %2025 = vadd.xlane.f32.xlu0 %v2024
    %v2026 = vpop.xlane.xlu0 %2025
    %v2027 = vmul.f32 %v2022, 0.0625
    %v2028 = vmul.f32 %v2026, 0.0625
    %v2029 = vmul.f32 %v2027, %v2027
    %v2030 = vsub.f32 %v2028, %v2029
    %v2031 = vmax.f32 %v2030, 0.0
    %v2032 = vsub.f32 %v2019, %v2027
    %v2033 = vadd.f32 %v2031, 1e-05
    %v2034 = vrsqrt.pop %v2033
    %v2035 = vmul.f32 %v2032, %v2034
    %v2036 = vlaneseq
    %v2037 = vshrl.u32 %v2036, 7
    %v2038 = vsub.s32 0, %v2037
    %v2039 = vrot.slane %v57, %v2038
    %v2040 = vmul.f32 %v2035, %v2039
    %v2041 = vlaneseq
    %v2042 = vshrl.u32 %v2041, 7
    %v2043 = vsub.s32 0, %v2042
    %v2044 = vrot.slane %v58, %v2043
    %v2045 = vadd.f32 %v2040, %v2044
    %v2046 = vld [vmem:[%s3] sm:$0xff]
    %2048 = vset.pattern.permute.xlu0 0
    %2049 = vperm.xlu0 %2048, %v2046
    %v2050 = vpop.permute.xlu0 %2049
    %v2052 = vlaneseq
    %v2053 = vshrl.u32 %v2052, 7
    %v2054 = vsub.s32 0, %v2053
    %v2055 = vrot.slane %v59, %v2054
    %v2056 = vmul.f32 %v2050, %v2055
    %v2057 = vlaneseq
    %v2058 = vshrl.u32 %v2057, 7
    %v2059 = vsub.s32 0, %v2058
    %v2060 = vrot.slane %v60, %v2059
    %v2061 = vadd.f32 %v2056, %v2060
    %v2062 = vmax.f32 %v2061, 0.0
    %v2063 = vsel %vm1526, %v2062, 0.0
    %2064 = vadd.xlane.f32.xlu0 %v2063
    %v2065 = vpop.xlane.xlu0 %2064
    %v2066 = vmul.f32 %v2062, %v2062
    %v2067 = vsel %vm1526, %v2066, 0.0
    %2068 = vadd.xlane.f32.xlu0 %v2067
    %v2069 = vpop.xlane.xlu0 %2068
    %v2070 = vmul.f32 %v2065, 0.0625
    %v2071 = vmul.f32 %v2069, 0.0625
    %v2072 = vmul.f32 %v2070, %v2070
    %v2073 = vsub.f32 %v2071, %v2072
    %v2074 = vmax.f32 %v2073, 0.0
    %v2075 = vsub.f32 %v2062, %v2070
    %v2076 = vadd.f32 %v2074, 1e-05
    %v2077 = vrsqrt.pop %v2076
    %v2078 = vmul.f32 %v2075, %v2077
    %v2079 = vlaneseq
    %v2080 = vshrl.u32 %v2079, 7
    %v2081 = vsub.s32 0, %v2080
    %v2082 = vrot.slane %v61, %v2081
    %v2083 = vmul.f32 %v2078, %v2082
    %v2084 = vlaneseq
    %v2085 = vshrl.u32 %v2084, 7
    %v2086 = vsub.s32 0, %v2085
    %v2087 = vrot.slane %v62, %v2086
    %v2088 = vadd.f32 %v2083, %v2087
    %v2089 = vlaneseq
    %v2090 = vshrl.u32 %v2089, 7
    %v2091 = vsub.s32 0, %v2090
    %v2092 = vrot.slane %v65, %v2091
    %v2094 = vsel %vm1526, %v2088, 0
    %2096 = vmatprep.subr.mxu0 0.0
    %v2097 = vand.u32 %v63, 4294901760
    %2098 = vmatpush1.msra.mxu0 %v2097
    %2099 = vmatprep.subr.mxu0 0.0
    %v2100 = vand.u32 %v64, 4294901760
    %2101 = vmatpush1.msra.mxu0 %v2100
    %2102 = vmatprep.subr.mxu0 0.0
    %2103 = vmatpush1.msra.mxu0 0.0
    %2104 = vmatprep.subr.mxu0 0.0
    %2105 = vmatpush1.msra.mxu0 0.0
    %2106 = vmatprep.subr.mxu0 0.0
    %2107 = vmatpush1.msra.mxu0 0.0
    %2108 = vmatprep.subr.mxu0 0.0
    %2109 = vmatpush1.msra.mxu0 0.0
    %2110 = vmatprep.subr.mxu0 0.0
    %2111 = vmatpush1.msra.mxu0 0.0
    %2112 = vmatprep.subr.mxu0 0.0
    %2113 = vmatpush1.msra.mxu0 0.0
    %2114 = vmatprep.subr.mxu0 0.0
    %2115 = vmatpush1.msra.mxu0 0.0
    %2116 = vmatprep.subr.mxu0 0.0
    %2117 = vmatpush1.msra.mxu0 0.0
    %2118 = vmatprep.subr.mxu0 0.0
    %2119 = vmatpush1.msra.mxu0 0.0
    %2120 = vmatprep.subr.mxu0 0.0
    %2121 = vmatpush1.msra.mxu0 0.0
    %2122 = vmatprep.subr.mxu0 0.0
    %2123 = vmatpush1.msra.mxu0 0.0
    %2124 = vmatprep.subr.mxu0 0.0
    %2125 = vmatpush1.msra.mxu0 0.0
    %2126 = vmatprep.subr.mxu0 0.0
    %2127 = vmatpush1.msra.mxu0 0.0
    %2128 = vmatprep.subr.mxu0 0.0
    %2129 = vmatpush1.msra.mxu0 0.0
    %2130 = vmatprep.subr.mxu0 0.0
    %2131 = vmatpush1.msra.mxu0 0.0
    %2132 = vmatprep.subr.mxu0 0.0
    %2133 = vmatpush1.msra.mxu0 0.0
    %2134 = vmatprep.subr.mxu0 0.0
    %2135 = vmatpush1.msra.mxu0 0.0
    %2136 = vmatprep.subr.mxu0 0.0
    %2137 = vmatpush1.msra.mxu0 0.0
    %2138 = vmatprep.subr.mxu0 0.0
    %2139 = vmatpush1.msra.mxu0 0.0
    %2140 = vmatprep.subr.mxu0 0.0
    %2141 = vmatpush1.msra.mxu0 0.0
    %2142 = vmatprep.subr.mxu0 0.0
    %2143 = vmatpush1.msra.mxu0 0.0
    %2144 = vmatprep.subr.mxu0 0.0
    %2145 = vmatpush1.msra.mxu0 0.0
    %2146 = vmatprep.subr.mxu0 0.0
    %2147 = vmatpush1.msra.mxu0 0.0
    %2148 = vmatprep.subr.mxu0 0.0
    %2149 = vmatpush1.msra.mxu0 0.0
    %2150 = vmatprep.subr.mxu0 0.0
    %2151 = vmatpush1.msra.mxu0 0.0
    %2152 = vmatprep.subr.mxu0 0.0
    %2153 = vmatpush1.msra.mxu0 0.0
    %2154 = vmatprep.subr.mxu0 0.0
    %2155 = vmatpush1.msra.mxu0 0.0
    %2156 = vmatprep.subr.mxu0 0.0
    %2157 = vmatpush1.msra.mxu0 0.0
    %2158 = vmatprep.subr.mxu0 0.0
    %2159 = vmatpush1.msra.mxu0 0.0
    %2160 = vmatprep.subr.mxu0 0.0
    %2161 = vmatpush1.msra.mxu0 0.0
    %2162 = vmatprep.mubr.f32.mxu0 0.0
    %v2163 = vand.u32 %v2094, 4294901760
    %v2164 = vsub.f32 %v2094, %v2163
    %v2165 = vand.u32 %v2164, 4294901760
    %v2166 = vsub.f32 %v2164, %v2165
    %v2167 = vand.u32 %v2166, 4294901760
    %2168 = vmatmul.mubr.f32.gmra.mrb[0].mxu0 %v2167
    %v2169 = vpop.f32.mrb[0].mxu0
    %v2170 = vadd.f32 %v2092, %v2169
    %v2171 = vpop.f32.mrb[0].mxu0
    %2172 = vdwg.mxu0
    %2173 = vmatprep.subr.mxu0 0.0
    %v2174 = vand.u32 %v63, 4294901760
    %v2175 = vsub.f32 %v63, %v2174
    %v2176 = vand.u32 %v2175, 4294901760
    %v2177 = vsub.f32 %v2175, %v2176
    %v2178 = vand.u32 %v2177, 4294901760
    %2179 = vmatpush1.msra.mxu0 %v2178
    %2180 = vmatprep.subr.mxu0 0.0
    %v2181 = vand.u32 %v64, 4294901760
    %v2182 = vsub.f32 %v64, %v2181
    %v2183 = vand.u32 %v2182, 4294901760
    %v2184 = vsub.f32 %v2182, %v2183
    %v2185 = vand.u32 %v2184, 4294901760
    %2186 = vmatpush1.msra.mxu0 %v2185
    %2187 = vmatprep.subr.mxu0 0.0
    %2188 = vmatpush1.msra.mxu0 0.0
    %2189 = vmatprep.subr.mxu0 0.0
    %2190 = vmatpush1.msra.mxu0 0.0
    %2191 = vmatprep.subr.mxu0 0.0
    %2192 = vmatpush1.msra.mxu0 0.0
    %2193 = vmatprep.subr.mxu0 0.0
    %2194 = vmatpush1.msra.mxu0 0.0
    %2195 = vmatprep.subr.mxu0 0.0
    %2196 = vmatpush1.msra.mxu0 0.0
    %2197 = vmatprep.subr.mxu0 0.0
    %2198 = vmatpush1.msra.mxu0 0.0
    %2199 = vmatprep.subr.mxu0 0.0
    %2200 = vmatpush1.msra.mxu0 0.0
    %2201 = vmatprep.subr.mxu0 0.0
    %2202 = vmatpush1.msra.mxu0 0.0
    %2203 = vmatprep.subr.mxu0 0.0
    %2204 = vmatpush1.msra.mxu0 0.0
    %2205 = vmatprep.subr.mxu0 0.0
    %2206 = vmatpush1.msra.mxu0 0.0
    %2207 = vmatprep.subr.mxu0 0.0
    %2208 = vmatpush1.msra.mxu0 0.0
    %2209 = vmatprep.subr.mxu0 0.0
    %2210 = vmatpush1.msra.mxu0 0.0
    %2211 = vmatprep.subr.mxu0 0.0
    %2212 = vmatpush1.msra.mxu0 0.0
    %2213 = vmatprep.subr.mxu0 0.0
    %2214 = vmatpush1.msra.mxu0 0.0
    %2215 = vmatprep.subr.mxu0 0.0
    %2216 = vmatpush1.msra.mxu0 0.0
    %2217 = vmatprep.subr.mxu0 0.0
    %2218 = vmatpush1.msra.mxu0 0.0
    %2219 = vmatprep.subr.mxu0 0.0
    %2220 = vmatpush1.msra.mxu0 0.0
    %2221 = vmatprep.subr.mxu0 0.0
    %2222 = vmatpush1.msra.mxu0 0.0
    %2223 = vmatprep.subr.mxu0 0.0
    %2224 = vmatpush1.msra.mxu0 0.0
    %2225 = vmatprep.subr.mxu0 0.0
    %2226 = vmatpush1.msra.mxu0 0.0
    %2227 = vmatprep.subr.mxu0 0.0
    %2228 = vmatpush1.msra.mxu0 0.0
    %2229 = vmatprep.subr.mxu0 0.0
    %2230 = vmatpush1.msra.mxu0 0.0
    %2231 = vmatprep.subr.mxu0 0.0
    %2232 = vmatpush1.msra.mxu0 0.0
    %2233 = vmatprep.subr.mxu0 0.0
    %2234 = vmatpush1.msra.mxu0 0.0
    %2235 = vmatprep.subr.mxu0 0.0
    %2236 = vmatpush1.msra.mxu0 0.0
    %2237 = vmatprep.subr.mxu0 0.0
    %2238 = vmatpush1.msra.mxu0 0.0
    %2239 = vmatprep.subr.mxu0 0.0
    %2240 = vmatpush1.msra.mxu0 0.0
    %2241 = vmatprep.subr.mxu0 0.0
    %2242 = vmatpush1.msra.mxu0 0.0
    %2243 = vmatprep.subr.mxu0 0.0
    %2244 = vmatpush1.msra.mxu0 0.0
    %2245 = vmatprep.subr.mxu0 0.0
    %2246 = vmatpush1.msra.mxu0 0.0
    %2247 = vmatprep.mubr.f32.mxu0 0.0
    %v2248 = vand.u32 %v2094, 4294901760
    %2249 = vmatmul.mubr.f32.gmra.mrb[0].mxu0 %v2248
    %v2250 = vpop.f32.mrb[0].mxu0
    %v2251 = vadd.f32 %v2170, %v2250
    %v2252 = vpop.f32.mrb[0].mxu0
    %2253 = vdwg.mxu0
    %2254 = vmatprep.subr.mxu0 0.0
    %v2255 = vand.u32 %v63, 4294901760
    %v2256 = vsub.f32 %v63, %v2255
    %2257 = vmatpush1.msra.mxu0 %v2256
    %2258 = vmatprep.subr.mxu0 0.0
    %v2259 = vand.u32 %v64, 4294901760
    %v2260 = vsub.f32 %v64, %v2259
    %2261 = vmatpush1.msra.mxu0 %v2260
    %2262 = vmatprep.subr.mxu0 0.0
    %2263 = vmatpush1.msra.mxu0 0.0
    %2264 = vmatprep.subr.mxu0 0.0
    %2265 = vmatpush1.msra.mxu0 0.0
    %2266 = vmatprep.subr.mxu0 0.0
    %2267 = vmatpush1.msra.mxu0 0.0
    %2268 = vmatprep.subr.mxu0 0.0
    %2269 = vmatpush1.msra.mxu0 0.0
    %2270 = vmatprep.subr.mxu0 0.0
    %2271 = vmatpush1.msra.mxu0 0.0
    %2272 = vmatprep.subr.mxu0 0.0
    %2273 = vmatpush1.msra.mxu0 0.0
    %2274 = vmatprep.subr.mxu0 0.0
    %2275 = vmatpush1.msra.mxu0 0.0
    %2276 = vmatprep.subr.mxu0 0.0
    %2277 = vmatpush1.msra.mxu0 0.0
    %2278 = vmatprep.subr.mxu0 0.0
    %2279 = vmatpush1.msra.mxu0 0.0
    %2280 = vmatprep.subr.mxu0 0.0
    %2281 = vmatpush1.msra.mxu0 0.0
    %2282 = vmatprep.subr.mxu0 0.0
    %2283 = vmatpush1.msra.mxu0 0.0
    %2284 = vmatprep.subr.mxu0 0.0
    %2285 = vmatpush1.msra.mxu0 0.0
    %2286 = vmatprep.subr.mxu0 0.0
    %2287 = vmatpush1.msra.mxu0 0.0
    %2288 = vmatprep.subr.mxu0 0.0
    %2289 = vmatpush1.msra.mxu0 0.0
    %2290 = vmatprep.subr.mxu0 0.0
    %2291 = vmatpush1.msra.mxu0 0.0
    %2292 = vmatprep.subr.mxu0 0.0
    %2293 = vmatpush1.msra.mxu0 0.0
    %2294 = vmatprep.subr.mxu0 0.0
    %2295 = vmatpush1.msra.mxu0 0.0
    %2296 = vmatprep.subr.mxu0 0.0
    %2297 = vmatpush1.msra.mxu0 0.0
    %2298 = vmatprep.subr.mxu0 0.0
    %2299 = vmatpush1.msra.mxu0 0.0
    %2300 = vmatprep.subr.mxu0 0.0
    %2301 = vmatpush1.msra.mxu0 0.0
    %2302 = vmatprep.subr.mxu0 0.0
    %2303 = vmatpush1.msra.mxu0 0.0
    %2304 = vmatprep.subr.mxu0 0.0
    %2305 = vmatpush1.msra.mxu0 0.0
    %2306 = vmatprep.subr.mxu0 0.0
    %2307 = vmatpush1.msra.mxu0 0.0
    %2308 = vmatprep.subr.mxu0 0.0
    %2309 = vmatpush1.msra.mxu0 0.0
    %2310 = vmatprep.subr.mxu0 0.0
    %2311 = vmatpush1.msra.mxu0 0.0
    %2312 = vmatprep.subr.mxu0 0.0
    %2313 = vmatpush1.msra.mxu0 0.0
    %2314 = vmatprep.subr.mxu0 0.0
    %2315 = vmatpush1.msra.mxu0 0.0
    %2316 = vmatprep.subr.mxu0 0.0
    %2317 = vmatpush1.msra.mxu0 0.0
    %2318 = vmatprep.subr.mxu0 0.0
    %2319 = vmatpush1.msra.mxu0 0.0
    %2320 = vmatprep.subr.mxu0 0.0
    %2321 = vmatpush1.msra.mxu0 0.0
    %2322 = vmatprep.mubr.f32.mxu0 0.0
    %v2323 = vand.u32 %v2094, 4294901760
    %v2324 = vsub.f32 %v2094, %v2323
    %2325 = vmatmul.mubr.f32.gmra.mrb[0].mxu0 %v2324
    %v2326 = vpop.f32.mrb[0].mxu0
    %v2327 = vadd.f32 %v2251, %v2326
    %v2328 = vpop.f32.mrb[0].mxu0
    %2329 = vdwg.mxu0
    %2330 = vmatprep.subr.mxu0 0.0
    %v2331 = vand.u32 %v63, 4294901760
    %2332 = vmatpush1.msra.mxu0 %v2331
    %2333 = vmatprep.subr.mxu0 0.0
    %v2334 = vand.u32 %v64, 4294901760
    %2335 = vmatpush1.msra.mxu0 %v2334
    %2336 = vmatprep.subr.mxu0 0.0
    %2337 = vmatpush1.msra.mxu0 0.0
    %2338 = vmatprep.subr.mxu0 0.0
    %2339 = vmatpush1.msra.mxu0 0.0
    %2340 = vmatprep.subr.mxu0 0.0
    %2341 = vmatpush1.msra.mxu0 0.0
    %2342 = vmatprep.subr.mxu0 0.0
    %2343 = vmatpush1.msra.mxu0 0.0
    %2344 = vmatprep.subr.mxu0 0.0
    %2345 = vmatpush1.msra.mxu0 0.0
    %2346 = vmatprep.subr.mxu0 0.0
    %2347 = vmatpush1.msra.mxu0 0.0
    %2348 = vmatprep.subr.mxu0 0.0
    %2349 = vmatpush1.msra.mxu0 0.0
    %2350 = vmatprep.subr.mxu0 0.0
    %2351 = vmatpush1.msra.mxu0 0.0
    %2352 = vmatprep.subr.mxu0 0.0
    %2353 = vmatpush1.msra.mxu0 0.0
    %2354 = vmatprep.subr.mxu0 0.0
    %2355 = vmatpush1.msra.mxu0 0.0
    %2356 = vmatprep.subr.mxu0 0.0
    %2357 = vmatpush1.msra.mxu0 0.0
    %2358 = vmatprep.subr.mxu0 0.0
    %2359 = vmatpush1.msra.mxu0 0.0
    %2360 = vmatprep.subr.mxu0 0.0
    %2361 = vmatpush1.msra.mxu0 0.0
    %2362 = vmatprep.subr.mxu0 0.0
    %2363 = vmatpush1.msra.mxu0 0.0
    %2364 = vmatprep.subr.mxu0 0.0
    %2365 = vmatpush1.msra.mxu0 0.0
    %2366 = vmatprep.subr.mxu0 0.0
    %2367 = vmatpush1.msra.mxu0 0.0
    %2368 = vmatprep.subr.mxu0 0.0
    %2369 = vmatpush1.msra.mxu0 0.0
    %2370 = vmatprep.subr.mxu0 0.0
    %2371 = vmatpush1.msra.mxu0 0.0
    %2372 = vmatprep.subr.mxu0 0.0
    %2373 = vmatpush1.msra.mxu0 0.0
    %2374 = vmatprep.subr.mxu0 0.0
    %2375 = vmatpush1.msra.mxu0 0.0
    %2376 = vmatprep.subr.mxu0 0.0
    %2377 = vmatpush1.msra.mxu0 0.0
    %2378 = vmatprep.subr.mxu0 0.0
    %2379 = vmatpush1.msra.mxu0 0.0
    %2380 = vmatprep.subr.mxu0 0.0
    %2381 = vmatpush1.msra.mxu0 0.0
    %2382 = vmatprep.subr.mxu0 0.0
    %2383 = vmatpush1.msra.mxu0 0.0
    %2384 = vmatprep.subr.mxu0 0.0
    %2385 = vmatpush1.msra.mxu0 0.0
    %2386 = vmatprep.subr.mxu0 0.0
    %2387 = vmatpush1.msra.mxu0 0.0
    %2388 = vmatprep.subr.mxu0 0.0
    %2389 = vmatpush1.msra.mxu0 0.0
    %2390 = vmatprep.subr.mxu0 0.0
    %2391 = vmatpush1.msra.mxu0 0.0
    %2392 = vmatprep.subr.mxu0 0.0
    %2393 = vmatpush1.msra.mxu0 0.0
    %2394 = vmatprep.subr.mxu0 0.0
    %2395 = vmatpush1.msra.mxu0 0.0
    %2396 = vmatprep.mubr.f32.mxu0 0.0
    %v2397 = vand.u32 %v2094, 4294901760
    %v2398 = vsub.f32 %v2094, %v2397
    %v2399 = vand.u32 %v2398, 4294901760
    %2400 = vmatmul.mubr.f32.gmra.mrb[0].mxu0 %v2399
    %v2401 = vpop.f32.mrb[0].mxu0
    %v2402 = vadd.f32 %v2327, %v2401
    %v2403 = vpop.f32.mrb[0].mxu0
    %2404 = vdwg.mxu0
    %2405 = vmatprep.subr.mxu0 0.0
    %v2406 = vand.u32 %v63, 4294901760
    %v2407 = vsub.f32 %v63, %v2406
    %v2408 = vand.u32 %v2407, 4294901760
    %2409 = vmatpush1.msra.mxu0 %v2408
    %2410 = vmatprep.subr.mxu0 0.0
    %v2411 = vand.u32 %v64, 4294901760
    %v2412 = vsub.f32 %v64, %v2411
    %v2413 = vand.u32 %v2412, 4294901760
    %2414 = vmatpush1.msra.mxu0 %v2413
    %2415 = vmatprep.subr.mxu0 0.0
    %2416 = vmatpush1.msra.mxu0 0.0
    %2417 = vmatprep.subr.mxu0 0.0
    %2418 = vmatpush1.msra.mxu0 0.0
    %2419 = vmatprep.subr.mxu0 0.0
    %2420 = vmatpush1.msra.mxu0 0.0
    %2421 = vmatprep.subr.mxu0 0.0
    %2422 = vmatpush1.msra.mxu0 0.0
    %2423 = vmatprep.subr.mxu0 0.0
    %2424 = vmatpush1.msra.mxu0 0.0
    %2425 = vmatprep.subr.mxu0 0.0
    %2426 = vmatpush1.msra.mxu0 0.0
    %2427 = vmatprep.subr.mxu0 0.0
    %2428 = vmatpush1.msra.mxu0 0.0
    %2429 = vmatprep.subr.mxu0 0.0
    %2430 = vmatpush1.msra.mxu0 0.0
    %2431 = vmatprep.subr.mxu0 0.0
    %2432 = vmatpush1.msra.mxu0 0.0
    %2433 = vmatprep.subr.mxu0 0.0
    %2434 = vmatpush1.msra.mxu0 0.0
    %2435 = vmatprep.subr.mxu0 0.0
    %2436 = vmatpush1.msra.mxu0 0.0
    %2437 = vmatprep.subr.mxu0 0.0
    %2438 = vmatpush1.msra.mxu0 0.0
    %2439 = vmatprep.subr.mxu0 0.0
    %2440 = vmatpush1.msra.mxu0 0.0
    %2441 = vmatprep.subr.mxu0 0.0
    %2442 = vmatpush1.msra.mxu0 0.0
    %2443 = vmatprep.subr.mxu0 0.0
    %2444 = vmatpush1.msra.mxu0 0.0
    %2445 = vmatprep.subr.mxu0 0.0
    %2446 = vmatpush1.msra.mxu0 0.0
    %2447 = vmatprep.subr.mxu0 0.0
    %2448 = vmatpush1.msra.mxu0 0.0
    %2449 = vmatprep.subr.mxu0 0.0
    %2450 = vmatpush1.msra.mxu0 0.0
    %2451 = vmatprep.subr.mxu0 0.0
    %2452 = vmatpush1.msra.mxu0 0.0
    %2453 = vmatprep.subr.mxu0 0.0
    %2454 = vmatpush1.msra.mxu0 0.0
    %2455 = vmatprep.subr.mxu0 0.0
    %2456 = vmatpush1.msra.mxu0 0.0
    %2457 = vmatprep.subr.mxu0 0.0
    %2458 = vmatpush1.msra.mxu0 0.0
    %2459 = vmatprep.subr.mxu0 0.0
    %2460 = vmatpush1.msra.mxu0 0.0
    %2461 = vmatprep.subr.mxu0 0.0
    %2462 = vmatpush1.msra.mxu0 0.0
    %2463 = vmatprep.subr.mxu0 0.0
    %2464 = vmatpush1.msra.mxu0 0.0
    %2465 = vmatprep.subr.mxu0 0.0
    %2466 = vmatpush1.msra.mxu0 0.0
    %2467 = vmatprep.subr.mxu0 0.0
    %2468 = vmatpush1.msra.mxu0 0.0
    %2469 = vmatprep.subr.mxu0 0.0
    %2470 = vmatpush1.msra.mxu0 0.0
    %2471 = vmatprep.subr.mxu0 0.0
    %2472 = vmatpush1.msra.mxu0 0.0
    %2473 = vmatprep.subr.mxu0 0.0
    %2474 = vmatpush1.msra.mxu0 0.0
    %2475 = vmatprep.mubr.f32.mxu0 0.0
    %v2476 = vand.u32 %v2094, 4294901760
    %2477 = vmatmul.mubr.f32.gmra.mrb[0].mxu0 %v2476
    %v2478 = vpop.f32.mrb[0].mxu0
    %v2479 = vadd.f32 %v2402, %v2478
    %v2480 = vpop.f32.mrb[0].mxu0
    %2481 = vdwg.mxu0
    %2482 = vmatprep.subr.mxu0 0.0
    %v2483 = vand.u32 %v63, 4294901760
    %2484 = vmatpush1.msra.mxu0 %v2483
    %2485 = vmatprep.subr.mxu0 0.0
    %v2486 = vand.u32 %v64, 4294901760
    %2487 = vmatpush1.msra.mxu0 %v2486
    %2488 = vmatprep.subr.mxu0 0.0
    %2489 = vmatpush1.msra.mxu0 0.0
    %2490 = vmatprep.subr.mxu0 0.0
    %2491 = vmatpush1.msra.mxu0 0.0
    %2492 = vmatprep.subr.mxu0 0.0
    %2493 = vmatpush1.msra.mxu0 0.0
    %2494 = vmatprep.subr.mxu0 0.0
    %2495 = vmatpush1.msra.mxu0 0.0
    %2496 = vmatprep.subr.mxu0 0.0
    %2497 = vmatpush1.msra.mxu0 0.0
    %2498 = vmatprep.subr.mxu0 0.0
    %2499 = vmatpush1.msra.mxu0 0.0
    %2500 = vmatprep.subr.mxu0 0.0
    %2501 = vmatpush1.msra.mxu0 0.0
    %2502 = vmatprep.subr.mxu0 0.0
    %2503 = vmatpush1.msra.mxu0 0.0
    %2504 = vmatprep.subr.mxu0 0.0
    %2505 = vmatpush1.msra.mxu0 0.0
    %2506 = vmatprep.subr.mxu0 0.0
    %2507 = vmatpush1.msra.mxu0 0.0
    %2508 = vmatprep.subr.mxu0 0.0
    %2509 = vmatpush1.msra.mxu0 0.0
    %2510 = vmatprep.subr.mxu0 0.0
    %2511 = vmatpush1.msra.mxu0 0.0
    %2512 = vmatprep.subr.mxu0 0.0
    %2513 = vmatpush1.msra.mxu0 0.0
    %2514 = vmatprep.subr.mxu0 0.0
    %2515 = vmatpush1.msra.mxu0 0.0
    %2516 = vmatprep.subr.mxu0 0.0
    %2517 = vmatpush1.msra.mxu0 0.0
    %2518 = vmatprep.subr.mxu0 0.0
    %2519 = vmatpush1.msra.mxu0 0.0
    %2520 = vmatprep.subr.mxu0 0.0
    %2521 = vmatpush1.msra.mxu0 0.0
    %2522 = vmatprep.subr.mxu0 0.0
    %2523 = vmatpush1.msra.mxu0 0.0
    %2524 = vmatprep.subr.mxu0 0.0
    %2525 = vmatpush1.msra.mxu0 0.0
    %2526 = vmatprep.subr.mxu0 0.0
    %2527 = vmatpush1.msra.mxu0 0.0
    %2528 = vmatprep.subr.mxu0 0.0
    %2529 = vmatpush1.msra.mxu0 0.0
    %2530 = vmatprep.subr.mxu0 0.0
    %2531 = vmatpush1.msra.mxu0 0.0
    %2532 = vmatprep.subr.mxu0 0.0
    %2533 = vmatpush1.msra.mxu0 0.0
    %2534 = vmatprep.subr.mxu0 0.0
    %2535 = vmatpush1.msra.mxu0 0.0
    %2536 = vmatprep.subr.mxu0 0.0
    %2537 = vmatpush1.msra.mxu0 0.0
    %2538 = vmatprep.subr.mxu0 0.0
    %2539 = vmatpush1.msra.mxu0 0.0
    %2540 = vmatprep.subr.mxu0 0.0
    %2541 = vmatpush1.msra.mxu0 0.0
    %2542 = vmatprep.subr.mxu0 0.0
    %2543 = vmatpush1.msra.mxu0 0.0
    %2544 = vmatprep.subr.mxu0 0.0
    %2545 = vmatpush1.msra.mxu0 0.0
    %2546 = vmatprep.subr.mxu0 0.0
    %2547 = vmatpush1.msra.mxu0 0.0
    %2548 = vmatprep.mubr.f32.mxu0 0.0
    %v2549 = vand.u32 %v2094, 4294901760
    %2550 = vmatmul.mubr.f32.gmra.mrb[0].mxu0 %v2549
    %v2551 = vpop.f32.mrb[0].mxu0
    %v2552 = vadd.f32 %v2479, %v2551
    %v2553 = vpop.f32.mrb[0].mxu0
    %2554 = vdwg.mxu0
    %v2555 = vmax.f32 %v2552, 0.0
    %v2556 = vsel %vm1526, %v2555, 0.0
    %2557 = vadd.xlane.f32.xlu0 %v2556
    %v2558 = vpop.xlane.xlu0 %2557
    %v2559 = vmul.f32 %v2555, %v2555
    %v2560 = vsel %vm1526, %v2559, 0.0
    %2561 = vadd.xlane.f32.xlu0 %v2560
    %v2562 = vpop.xlane.xlu0 %2561
    %v2563 = vmul.f32 %v2558, 0.0625
    %v2564 = vmul.f32 %v2562, 0.0625
    %v2565 = vmul.f32 %v2563, %v2563
    %v2566 = vsub.f32 %v2564, %v2565
    %v2567 = vmax.f32 %v2566, 0.0
    %v2568 = vsub.f32 %v2555, %v2563
    %v2569 = vadd.f32 %v2567, 1e-05
    %v2570 = vrsqrt.pop %v2569
    %v2571 = vmul.f32 %v2568, %v2570
    %v2572 = vlaneseq
    %v2573 = vshrl.u32 %v2572, 7
    %v2574 = vsub.s32 0, %v2573
    %v2575 = vrot.slane %v66, %v2574
    %v2576 = vmul.f32 %v2571, %v2575
    %v2577 = vlaneseq
    %v2578 = vshrl.u32 %v2577, 7
    %v2579 = vsub.s32 0, %v2578
    %v2580 = vrot.slane %v67, %v2579
    %v2581 = vadd.f32 %v2576, %v2580
    %v2583 = vsel %vm1526, %v2045, 0
    %2585 = vmatprep.subr.mxu0 0.0
    %v2586 = vand.u32 %v76, 4294901760
    %2587 = vmatpush1.msra.mxu0 %v2586
    %2588 = vmatprep.subr.mxu0 0.0
    %v2589 = vand.u32 %v77, 4294901760
    %2590 = vmatpush1.msra.mxu0 %v2589
    %2591 = vmatprep.subr.mxu0 0.0
    %2592 = vmatpush1.msra.mxu0 0.0
    %2593 = vmatprep.subr.mxu0 0.0
    %2594 = vmatpush1.msra.mxu0 0.0
    %2595 = vmatprep.subr.mxu0 0.0
    %2596 = vmatpush1.msra.mxu0 0.0
    %2597 = vmatprep.subr.mxu0 0.0
    %2598 = vmatpush1.msra.mxu0 0.0
    %2599 = vmatprep.subr.mxu0 0.0
    %2600 = vmatpush1.msra.mxu0 0.0
    %2601 = vmatprep.subr.mxu0 0.0
    %2602 = vmatpush1.msra.mxu0 0.0
    %2603 = vmatprep.subr.mxu0 0.0
    %2604 = vmatpush1.msra.mxu0 0.0
    %2605 = vmatprep.subr.mxu0 0.0
    %2606 = vmatpush1.msra.mxu0 0.0
    %2607 = vmatprep.subr.mxu0 0.0
    %2608 = vmatpush1.msra.mxu0 0.0
    %2609 = vmatprep.subr.mxu0 0.0
    %2610 = vmatpush1.msra.mxu0 0.0
    %2611 = vmatprep.subr.mxu0 0.0
    %2612 = vmatpush1.msra.mxu0 0.0
    %2613 = vmatprep.subr.mxu0 0.0
    %2614 = vmatpush1.msra.mxu0 0.0
    %2615 = vmatprep.subr.mxu0 0.0
    %2616 = vmatpush1.msra.mxu0 0.0
    %2617 = vmatprep.subr.mxu0 0.0
    %2618 = vmatpush1.msra.mxu0 0.0
    %2619 = vmatprep.subr.mxu0 0.0
    %2620 = vmatpush1.msra.mxu0 0.0
    %2621 = vmatprep.subr.mxu0 0.0
    %2622 = vmatpush1.msra.mxu0 0.0
    %2623 = vmatprep.subr.mxu0 0.0
    %2624 = vmatpush1.msra.mxu0 0.0
    %2625 = vmatprep.subr.mxu0 0.0
    %2626 = vmatpush1.msra.mxu0 0.0
    %2627 = vmatprep.subr.mxu0 0.0
    %2628 = vmatpush1.msra.mxu0 0.0
    %2629 = vmatprep.subr.mxu0 0.0
    %2630 = vmatpush1.msra.mxu0 0.0
    %2631 = vmatprep.subr.mxu0 0.0
    %2632 = vmatpush1.msra.mxu0 0.0
    %2633 = vmatprep.subr.mxu0 0.0
    %2634 = vmatpush1.msra.mxu0 0.0
    %2635 = vmatprep.subr.mxu0 0.0
    %2636 = vmatpush1.msra.mxu0 0.0
    %2637 = vmatprep.subr.mxu0 0.0
    %2638 = vmatpush1.msra.mxu0 0.0
    %2639 = vmatprep.subr.mxu0 0.0
    %2640 = vmatpush1.msra.mxu0 0.0
    %2641 = vmatprep.subr.mxu0 0.0
    %2642 = vmatpush1.msra.mxu0 0.0
    %2643 = vmatprep.subr.mxu0 0.0
    %2644 = vmatpush1.msra.mxu0 0.0
    %2645 = vmatprep.subr.mxu0 0.0
    %2646 = vmatpush1.msra.mxu0 0.0
    %2647 = vmatprep.subr.mxu0 0.0
    %2648 = vmatpush1.msra.mxu0 0.0
    %2649 = vmatprep.subr.mxu0 0.0
    %2650 = vmatpush1.msra.mxu0 0.0
    %2651 = vmatprep.mubr.f32.mxu0 0.0
    %v2652 = vand.u32 %v2583, 4294901760
    %v2653 = vsub.f32 %v2583, %v2652
    %v2654 = vand.u32 %v2653, 4294901760
    %v2655 = vsub.f32 %v2653, %v2654
    %v2656 = vand.u32 %v2655, 4294901760
    %2657 = vmatmul.mubr.f32.gmra.mrb[0].mxu0 %v2656
    %v2658 = vpop.f32.mrb[0].mxu0
    %v2659 = vadd.f32 0.0, %v2658
    %v2660 = vpop.f32.mrb[0].mxu0
    %2661 = vdwg.mxu0
    %2662 = vmatprep.subr.mxu0 0.0
    %v2663 = vand.u32 %v76, 4294901760
    %v2664 = vsub.f32 %v76, %v2663
    %v2665 = vand.u32 %v2664, 4294901760
    %v2666 = vsub.f32 %v2664, %v2665
    %v2667 = vand.u32 %v2666, 4294901760
    %2668 = vmatpush1.msra.mxu0 %v2667
    %2669 = vmatprep.subr.mxu0 0.0
    %v2670 = vand.u32 %v77, 4294901760
    %v2671 = vsub.f32 %v77, %v2670
    %v2672 = vand.u32 %v2671, 4294901760
    %v2673 = vsub.f32 %v2671, %v2672
    %v2674 = vand.u32 %v2673, 4294901760
    %2675 = vmatpush1.msra.mxu0 %v2674
    %2676 = vmatprep.subr.mxu0 0.0
    %2677 = vmatpush1.msra.mxu0 0.0
    %2678 = vmatprep.subr.mxu0 0.0
    %2679 = vmatpush1.msra.mxu0 0.0
    %2680 = vmatprep.subr.mxu0 0.0
    %2681 = vmatpush1.msra.mxu0 0.0
    %2682 = vmatprep.subr.mxu0 0.0
    %2683 = vmatpush1.msra.mxu0 0.0
    %2684 = vmatprep.subr.mxu0 0.0
    %2685 = vmatpush1.msra.mxu0 0.0
    %2686 = vmatprep.subr.mxu0 0.0
    %2687 = vmatpush1.msra.mxu0 0.0
    %2688 = vmatprep.subr.mxu0 0.0
    %2689 = vmatpush1.msra.mxu0 0.0
    %2690 = vmatprep.subr.mxu0 0.0
    %2691 = vmatpush1.msra.mxu0 0.0
    %2692 = vmatprep.subr.mxu0 0.0
    %2693 = vmatpush1.msra.mxu0 0.0
    %2694 = vmatprep.subr.mxu0 0.0
    %2695 = vmatpush1.msra.mxu0 0.0
    %2696 = vmatprep.subr.mxu0 0.0
    %2697 = vmatpush1.msra.mxu0 0.0
    %2698 = vmatprep.subr.mxu0 0.0
    %2699 = vmatpush1.msra.mxu0 0.0
    %2700 = vmatprep.subr.mxu0 0.0
    %2701 = vmatpush1.msra.mxu0 0.0
    %2702 = vmatprep.subr.mxu0 0.0
    %2703 = vmatpush1.msra.mxu0 0.0
    %2704 = vmatprep.subr.mxu0 0.0
    %2705 = vmatpush1.msra.mxu0 0.0
    %2706 = vmatprep.subr.mxu0 0.0
    %2707 = vmatpush1.msra.mxu0 0.0
    %2708 = vmatprep.subr.mxu0 0.0
    %2709 = vmatpush1.msra.mxu0 0.0
    %2710 = vmatprep.subr.mxu0 0.0
    %2711 = vmatpush1.msra.mxu0 0.0
    %2712 = vmatprep.subr.mxu0 0.0
    %2713 = vmatpush1.msra.mxu0 0.0
    %2714 = vmatprep.subr.mxu0 0.0
    %2715 = vmatpush1.msra.mxu0 0.0
    %2716 = vmatprep.subr.mxu0 0.0
    %2717 = vmatpush1.msra.mxu0 0.0
    %2718 = vmatprep.subr.mxu0 0.0
    %2719 = vmatpush1.msra.mxu0 0.0
    %2720 = vmatprep.subr.mxu0 0.0
    %2721 = vmatpush1.msra.mxu0 0.0
    %2722 = vmatprep.subr.mxu0 0.0
    %2723 = vmatpush1.msra.mxu0 0.0
    %2724 = vmatprep.subr.mxu0 0.0
    %2725 = vmatpush1.msra.mxu0 0.0
    %2726 = vmatprep.subr.mxu0 0.0
    %2727 = vmatpush1.msra.mxu0 0.0
    %2728 = vmatprep.subr.mxu0 0.0
    %2729 = vmatpush1.msra.mxu0 0.0
    %2730 = vmatprep.subr.mxu0 0.0
    %2731 = vmatpush1.msra.mxu0 0.0
    %2732 = vmatprep.subr.mxu0 0.0
    %2733 = vmatpush1.msra.mxu0 0.0
    %2734 = vmatprep.subr.mxu0 0.0
    %2735 = vmatpush1.msra.mxu0 0.0
    %2736 = vmatprep.mubr.f32.mxu0 0.0
    %v2737 = vand.u32 %v2583, 4294901760
    %2738 = vmatmul.mubr.f32.gmra.mrb[0].mxu0 %v2737
    %v2739 = vpop.f32.mrb[0].mxu0
    %v2740 = vadd.f32 %v2659, %v2739
    %v2741 = vpop.f32.mrb[0].mxu0
    %2742 = vdwg.mxu0
    %2743 = vmatprep.subr.mxu0 0.0
    %v2744 = vand.u32 %v76, 4294901760
    %v2745 = vsub.f32 %v76, %v2744
    %2746 = vmatpush1.msra.mxu0 %v2745
    %2747 = vmatprep.subr.mxu0 0.0
    %v2748 = vand.u32 %v77, 4294901760
    %v2749 = vsub.f32 %v77, %v2748
    %2750 = vmatpush1.msra.mxu0 %v2749
    %2751 = vmatprep.subr.mxu0 0.0
    %2752 = vmatpush1.msra.mxu0 0.0
    %2753 = vmatprep.subr.mxu0 0.0
    %2754 = vmatpush1.msra.mxu0 0.0
    %2755 = vmatprep.subr.mxu0 0.0
    %2756 = vmatpush1.msra.mxu0 0.0
    %2757 = vmatprep.subr.mxu0 0.0
    %2758 = vmatpush1.msra.mxu0 0.0
    %2759 = vmatprep.subr.mxu0 0.0
    %2760 = vmatpush1.msra.mxu0 0.0
    %2761 = vmatprep.subr.mxu0 0.0
    %2762 = vmatpush1.msra.mxu0 0.0
    %2763 = vmatprep.subr.mxu0 0.0
    %2764 = vmatpush1.msra.mxu0 0.0
    %2765 = vmatprep.subr.mxu0 0.0
    %2766 = vmatpush1.msra.mxu0 0.0
    %2767 = vmatprep.subr.mxu0 0.0
    %2768 = vmatpush1.msra.mxu0 0.0
    %2769 = vmatprep.subr.mxu0 0.0
    %2770 = vmatpush1.msra.mxu0 0.0
    %2771 = vmatprep.subr.mxu0 0.0
    %2772 = vmatpush1.msra.mxu0 0.0
    %2773 = vmatprep.subr.mxu0 0.0
    %2774 = vmatpush1.msra.mxu0 0.0
    %2775 = vmatprep.subr.mxu0 0.0
    %2776 = vmatpush1.msra.mxu0 0.0
    %2777 = vmatprep.subr.mxu0 0.0
    %2778 = vmatpush1.msra.mxu0 0.0
    %2779 = vmatprep.subr.mxu0 0.0
    %2780 = vmatpush1.msra.mxu0 0.0
    %2781 = vmatprep.subr.mxu0 0.0
    %2782 = vmatpush1.msra.mxu0 0.0
    %2783 = vmatprep.subr.mxu0 0.0
    %2784 = vmatpush1.msra.mxu0 0.0
    %2785 = vmatprep.subr.mxu0 0.0
    %2786 = vmatpush1.msra.mxu0 0.0
    %2787 = vmatprep.subr.mxu0 0.0
    %2788 = vmatpush1.msra.mxu0 0.0
    %2789 = vmatprep.subr.mxu0 0.0
    %2790 = vmatpush1.msra.mxu0 0.0
    %2791 = vmatprep.subr.mxu0 0.0
    %2792 = vmatpush1.msra.mxu0 0.0
    %2793 = vmatprep.subr.mxu0 0.0
    %2794 = vmatpush1.msra.mxu0 0.0
    %2795 = vmatprep.subr.mxu0 0.0
    %2796 = vmatpush1.msra.mxu0 0.0
    %2797 = vmatprep.subr.mxu0 0.0
    %2798 = vmatpush1.msra.mxu0 0.0
    %2799 = vmatprep.subr.mxu0 0.0
    %2800 = vmatpush1.msra.mxu0 0.0
    %2801 = vmatprep.subr.mxu0 0.0
    %2802 = vmatpush1.msra.mxu0 0.0
    %2803 = vmatprep.subr.mxu0 0.0
    %2804 = vmatpush1.msra.mxu0 0.0
    %2805 = vmatprep.subr.mxu0 0.0
    %2806 = vmatpush1.msra.mxu0 0.0
    %2807 = vmatprep.subr.mxu0 0.0
    %2808 = vmatpush1.msra.mxu0 0.0
    %2809 = vmatprep.subr.mxu0 0.0
    %2810 = vmatpush1.msra.mxu0 0.0
    %2811 = vmatprep.mubr.f32.mxu0 0.0
    %v2812 = vand.u32 %v2583, 4294901760
    %v2813 = vsub.f32 %v2583, %v2812
    %2814 = vmatmul.mubr.f32.gmra.mrb[0].mxu0 %v2813
    %v2815 = vpop.f32.mrb[0].mxu0
    %v2816 = vadd.f32 %v2740, %v2815
    %v2817 = vpop.f32.mrb[0].mxu0
    %2818 = vdwg.mxu0
    %2819 = vmatprep.subr.mxu0 0.0
    %v2820 = vand.u32 %v76, 4294901760
    %2821 = vmatpush1.msra.mxu0 %v2820
    %2822 = vmatprep.subr.mxu0 0.0
    %v2823 = vand.u32 %v77, 4294901760
    %2824 = vmatpush1.msra.mxu0 %v2823
    %2825 = vmatprep.subr.mxu0 0.0
    %2826 = vmatpush1.msra.mxu0 0.0
    %2827 = vmatprep.subr.mxu0 0.0
    %2828 = vmatpush1.msra.mxu0 0.0
    %2829 = vmatprep.subr.mxu0 0.0
    %2830 = vmatpush1.msra.mxu0 0.0
    %2831 = vmatprep.subr.mxu0 0.0
    %2832 = vmatpush1.msra.mxu0 0.0
    %2833 = vmatprep.subr.mxu0 0.0
    %2834 = vmatpush1.msra.mxu0 0.0
    %2835 = vmatprep.subr.mxu0 0.0
    %2836 = vmatpush1.msra.mxu0 0.0
    %2837 = vmatprep.subr.mxu0 0.0
    %2838 = vmatpush1.msra.mxu0 0.0
    %2839 = vmatprep.subr.mxu0 0.0
    %2840 = vmatpush1.msra.mxu0 0.0
    %2841 = vmatprep.subr.mxu0 0.0
    %2842 = vmatpush1.msra.mxu0 0.0
    %2843 = vmatprep.subr.mxu0 0.0
    %2844 = vmatpush1.msra.mxu0 0.0
    %2845 = vmatprep.subr.mxu0 0.0
    %2846 = vmatpush1.msra.mxu0 0.0
    %2847 = vmatprep.subr.mxu0 0.0
    %2848 = vmatpush1.msra.mxu0 0.0
    %2849 = vmatprep.subr.mxu0 0.0
    %2850 = vmatpush1.msra.mxu0 0.0
    %2851 = vmatprep.subr.mxu0 0.0
    %2852 = vmatpush1.msra.mxu0 0.0
    %2853 = vmatprep.subr.mxu0 0.0
    %2854 = vmatpush1.msra.mxu0 0.0
    %2855 = vmatprep.subr.mxu0 0.0
    %2856 = vmatpush1.msra.mxu0 0.0
    %2857 = vmatprep.subr.mxu0 0.0
    %2858 = vmatpush1.msra.mxu0 0.0
    %2859 = vmatprep.subr.mxu0 0.0
    %2860 = vmatpush1.msra.mxu0 0.0
    %2861 = vmatprep.subr.mxu0 0.0
    %2862 = vmatpush1.msra.mxu0 0.0
    %2863 = vmatprep.subr.mxu0 0.0
    %2864 = vmatpush1.msra.mxu0 0.0
    %2865 = vmatprep.subr.mxu0 0.0
    %2866 = vmatpush1.msra.mxu0 0.0
    %2867 = vmatprep.subr.mxu0 0.0
    %2868 = vmatpush1.msra.mxu0 0.0
    %2869 = vmatprep.subr.mxu0 0.0
    %2870 = vmatpush1.msra.mxu0 0.0
    %2871 = vmatprep.subr.mxu0 0.0
    %2872 = vmatpush1.msra.mxu0 0.0
    %2873 = vmatprep.subr.mxu0 0.0
    %2874 = vmatpush1.msra.mxu0 0.0
    %2875 = vmatprep.subr.mxu0 0.0
    %2876 = vmatpush1.msra.mxu0 0.0
    %2877 = vmatprep.subr.mxu0 0.0
    %2878 = vmatpush1.msra.mxu0 0.0
    %2879 = vmatprep.subr.mxu0 0.0
    %2880 = vmatpush1.msra.mxu0 0.0
    %2881 = vmatprep.subr.mxu0 0.0
    %2882 = vmatpush1.msra.mxu0 0.0
    %2883 = vmatprep.subr.mxu0 0.0
    %2884 = vmatpush1.msra.mxu0 0.0
    %2885 = vmatprep.mubr.f32.mxu0 0.0
    %v2886 = vand.u32 %v2583, 4294901760
    %v2887 = vsub.f32 %v2583, %v2886
    %v2888 = vand.u32 %v2887, 4294901760
    %2889 = vmatmul.mubr.f32.gmra.mrb[0].mxu0 %v2888
    %v2890 = vpop.f32.mrb[0].mxu0
    %v2891 = vadd.f32 %v2816, %v2890
    %v2892 = vpop.f32.mrb[0].mxu0
    %2893 = vdwg.mxu0
    %2894 = vmatprep.subr.mxu0 0.0
    %v2895 = vand.u32 %v76, 4294901760
    %v2896 = vsub.f32 %v76, %v2895
    %v2897 = vand.u32 %v2896, 4294901760
    %2898 = vmatpush1.msra.mxu0 %v2897
    %2899 = vmatprep.subr.mxu0 0.0
    %v2900 = vand.u32 %v77, 4294901760
    %v2901 = vsub.f32 %v77, %v2900
    %v2902 = vand.u32 %v2901, 4294901760
    %2903 = vmatpush1.msra.mxu0 %v2902
    %2904 = vmatprep.subr.mxu0 0.0
    %2905 = vmatpush1.msra.mxu0 0.0
    %2906 = vmatprep.subr.mxu0 0.0
    %2907 = vmatpush1.msra.mxu0 0.0
    %2908 = vmatprep.subr.mxu0 0.0
    %2909 = vmatpush1.msra.mxu0 0.0
    %2910 = vmatprep.subr.mxu0 0.0
    %2911 = vmatpush1.msra.mxu0 0.0
    %2912 = vmatprep.subr.mxu0 0.0
    %2913 = vmatpush1.msra.mxu0 0.0
    %2914 = vmatprep.subr.mxu0 0.0
    %2915 = vmatpush1.msra.mxu0 0.0
    %2916 = vmatprep.subr.mxu0 0.0
    %2917 = vmatpush1.msra.mxu0 0.0
    %2918 = vmatprep.subr.mxu0 0.0
    %2919 = vmatpush1.msra.mxu0 0.0
    %2920 = vmatprep.subr.mxu0 0.0
    %2921 = vmatpush1.msra.mxu0 0.0
    %2922 = vmatprep.subr.mxu0 0.0
    %2923 = vmatpush1.msra.mxu0 0.0
    %2924 = vmatprep.subr.mxu0 0.0
    %2925 = vmatpush1.msra.mxu0 0.0
    %2926 = vmatprep.subr.mxu0 0.0
    %2927 = vmatpush1.msra.mxu0 0.0
    %2928 = vmatprep.subr.mxu0 0.0
    %2929 = vmatpush1.msra.mxu0 0.0
    %2930 = vmatprep.subr.mxu0 0.0
    %2931 = vmatpush1.msra.mxu0 0.0
    %2932 = vmatprep.subr.mxu0 0.0
    %2933 = vmatpush1.msra.mxu0 0.0
    %2934 = vmatprep.subr.mxu0 0.0
    %2935 = vmatpush1.msra.mxu0 0.0
    %2936 = vmatprep.subr.mxu0 0.0
    %2937 = vmatpush1.msra.mxu0 0.0
    %2938 = vmatprep.subr.mxu0 0.0
    %2939 = vmatpush1.msra.mxu0 0.0
    %2940 = vmatprep.subr.mxu0 0.0
    %2941 = vmatpush1.msra.mxu0 0.0
    %2942 = vmatprep.subr.mxu0 0.0
    %2943 = vmatpush1.msra.mxu0 0.0
    %2944 = vmatprep.subr.mxu0 0.0
    %2945 = vmatpush1.msra.mxu0 0.0
    %2946 = vmatprep.subr.mxu0 0.0
    %2947 = vmatpush1.msra.mxu0 0.0
    %2948 = vmatprep.subr.mxu0 0.0
    %2949 = vmatpush1.msra.mxu0 0.0
    %2950 = vmatprep.subr.mxu0 0.0
    %2951 = vmatpush1.msra.mxu0 0.0
    %2952 = vmatprep.subr.mxu0 0.0
    %2953 = vmatpush1.msra.mxu0 0.0
    %2954 = vmatprep.subr.mxu0 0.0
    %2955 = vmatpush1.msra.mxu0 0.0
    %2956 = vmatprep.subr.mxu0 0.0
    %2957 = vmatpush1.msra.mxu0 0.0
    %2958 = vmatprep.subr.mxu0 0.0
    %2959 = vmatpush1.msra.mxu0 0.0
    %2960 = vmatprep.subr.mxu0 0.0
    %2961 = vmatpush1.msra.mxu0 0.0
    %2962 = vmatprep.subr.mxu0 0.0
    %2963 = vmatpush1.msra.mxu0 0.0
    %2964 = vmatprep.mubr.f32.mxu0 0.0
    %v2965 = vand.u32 %v2583, 4294901760
    %2966 = vmatmul.mubr.f32.gmra.mrb[0].mxu0 %v2965
    %v2967 = vpop.f32.mrb[0].mxu0
    %v2968 = vadd.f32 %v2891, %v2967
    %v2969 = vpop.f32.mrb[0].mxu0
    %2970 = vdwg.mxu0
    %2971 = vmatprep.subr.mxu0 0.0
    %v2972 = vand.u32 %v76, 4294901760
    %2973 = vmatpush1.msra.mxu0 %v2972
    %2974 = vmatprep.subr.mxu0 0.0
    %v2975 = vand.u32 %v77, 4294901760
    %2976 = vmatpush1.msra.mxu0 %v2975
    %2977 = vmatprep.subr.mxu0 0.0
    %2978 = vmatpush1.msra.mxu0 0.0
    %2979 = vmatprep.subr.mxu0 0.0
    %2980 = vmatpush1.msra.mxu0 0.0
    %2981 = vmatprep.subr.mxu0 0.0
    %2982 = vmatpush1.msra.mxu0 0.0
    %2983 = vmatprep.subr.mxu0 0.0
    %2984 = vmatpush1.msra.mxu0 0.0
    %2985 = vmatprep.subr.mxu0 0.0
    %2986 = vmatpush1.msra.mxu0 0.0
    %2987 = vmatprep.subr.mxu0 0.0
    %2988 = vmatpush1.msra.mxu0 0.0
    %2989 = vmatprep.subr.mxu0 0.0
    %2990 = vmatpush1.msra.mxu0 0.0
    %2991 = vmatprep.subr.mxu0 0.0
    %2992 = vmatpush1.msra.mxu0 0.0
    %2993 = vmatprep.subr.mxu0 0.0
    %2994 = vmatpush1.msra.mxu0 0.0
    %2995 = vmatprep.subr.mxu0 0.0
    %2996 = vmatpush1.msra.mxu0 0.0
    %2997 = vmatprep.subr.mxu0 0.0
    %2998 = vmatpush1.msra.mxu0 0.0
    %2999 = vmatprep.subr.mxu0 0.0
    %3000 = vmatpush1.msra.mxu0 0.0
    %3001 = vmatprep.subr.mxu0 0.0
    %3002 = vmatpush1.msra.mxu0 0.0
    %3003 = vmatprep.subr.mxu0 0.0
    %3004 = vmatpush1.msra.mxu0 0.0
    %3005 = vmatprep.subr.mxu0 0.0
    %3006 = vmatpush1.msra.mxu0 0.0
    %3007 = vmatprep.subr.mxu0 0.0
    %3008 = vmatpush1.msra.mxu0 0.0
    %3009 = vmatprep.subr.mxu0 0.0
    %3010 = vmatpush1.msra.mxu0 0.0
    %3011 = vmatprep.subr.mxu0 0.0
    %3012 = vmatpush1.msra.mxu0 0.0
    %3013 = vmatprep.subr.mxu0 0.0
    %3014 = vmatpush1.msra.mxu0 0.0
    %3015 = vmatprep.subr.mxu0 0.0
    %3016 = vmatpush1.msra.mxu0 0.0
    %3017 = vmatprep.subr.mxu0 0.0
    %3018 = vmatpush1.msra.mxu0 0.0
    %3019 = vmatprep.subr.mxu0 0.0
    %3020 = vmatpush1.msra.mxu0 0.0
    %3021 = vmatprep.subr.mxu0 0.0
    %3022 = vmatpush1.msra.mxu0 0.0
    %3023 = vmatprep.subr.mxu0 0.0
    %3024 = vmatpush1.msra.mxu0 0.0
    %3025 = vmatprep.subr.mxu0 0.0
    %3026 = vmatpush1.msra.mxu0 0.0
    %3027 = vmatprep.subr.mxu0 0.0
    %3028 = vmatpush1.msra.mxu0 0.0
    %3029 = vmatprep.subr.mxu0 0.0
    %3030 = vmatpush1.msra.mxu0 0.0
    %3031 = vmatprep.subr.mxu0 0.0
    %3032 = vmatpush1.msra.mxu0 0.0
    %3033 = vmatprep.subr.mxu0 0.0
    %3034 = vmatpush1.msra.mxu0 0.0
    %3035 = vmatprep.subr.mxu0 0.0
    %3036 = vmatpush1.msra.mxu0 0.0
    %3037 = vmatprep.mubr.f32.mxu0 0.0
    %v3038 = vand.u32 %v2583, 4294901760
    %3039 = vmatmul.mubr.f32.gmra.mrb[0].mxu0 %v3038
    %v3040 = vpop.f32.mrb[0].mxu0
    %v3041 = vadd.f32 %v2968, %v3040
    %v3042 = vpop.f32.mrb[0].mxu0
    %3043 = vdwg.mxu0
    %v3045 = vsel %vm112, %v1468, 0
    %3047 = vmatprep.subr.mxu0 0.0
    %v3048 = vand.u32 %v68, 4294901760
    %3049 = vmatpush1.msra.mxu0 %v3048
    %3050 = vmatprep.subr.mxu0 0.0
    %v3051 = vand.u32 %v69, 4294901760
    %3052 = vmatpush1.msra.mxu0 %v3051
    %3053 = vmatprep.subr.mxu0 0.0
    %v3054 = vand.u32 %v70, 4294901760
    %3055 = vmatpush1.msra.mxu0 %v3054
    %3056 = vmatprep.subr.mxu0 0.0
    %v3057 = vand.u32 %v71, 4294901760
    %3058 = vmatpush1.msra.mxu0 %v3057
    %3059 = vmatprep.subr.mxu0 0.0
    %v3060 = vand.u32 %v72, 4294901760
    %3061 = vmatpush1.msra.mxu0 %v3060
    %3062 = vmatprep.subr.mxu0 0.0
    %v3063 = vand.u32 %v73, 4294901760
    %3064 = vmatpush1.msra.mxu0 %v3063
    %3065 = vmatprep.subr.mxu0 0.0
    %v3066 = vand.u32 %v74, 4294901760
    %3067 = vmatpush1.msra.mxu0 %v3066
    %3068 = vmatprep.subr.mxu0 0.0
    %v3069 = vand.u32 %v75, 4294901760
    %3070 = vmatpush1.msra.mxu0 %v3069
    %3071 = vmatprep.subr.mxu0 0.0
    %3072 = vmatpush1.msra.mxu0 0.0
    %3073 = vmatprep.subr.mxu0 0.0
    %3074 = vmatpush1.msra.mxu0 0.0
    %3075 = vmatprep.subr.mxu0 0.0
    %3076 = vmatpush1.msra.mxu0 0.0
    %3077 = vmatprep.subr.mxu0 0.0
    %3078 = vmatpush1.msra.mxu0 0.0
    %3079 = vmatprep.subr.mxu0 0.0
    %3080 = vmatpush1.msra.mxu0 0.0
    %3081 = vmatprep.subr.mxu0 0.0
    %3082 = vmatpush1.msra.mxu0 0.0
    %3083 = vmatprep.subr.mxu0 0.0
    %3084 = vmatpush1.msra.mxu0 0.0
    %3085 = vmatprep.subr.mxu0 0.0
    %3086 = vmatpush1.msra.mxu0 0.0
    %3087 = vmatprep.subr.mxu0 0.0
    %3088 = vmatpush1.msra.mxu0 0.0
    %3089 = vmatprep.subr.mxu0 0.0
    %3090 = vmatpush1.msra.mxu0 0.0
    %3091 = vmatprep.subr.mxu0 0.0
    %3092 = vmatpush1.msra.mxu0 0.0
    %3093 = vmatprep.subr.mxu0 0.0
    %3094 = vmatpush1.msra.mxu0 0.0
    %3095 = vmatprep.subr.mxu0 0.0
    %3096 = vmatpush1.msra.mxu0 0.0
    %3097 = vmatprep.subr.mxu0 0.0
    %3098 = vmatpush1.msra.mxu0 0.0
    %3099 = vmatprep.subr.mxu0 0.0
    %3100 = vmatpush1.msra.mxu0 0.0
    %3101 = vmatprep.subr.mxu0 0.0
    %3102 = vmatpush1.msra.mxu0 0.0
    %3103 = vmatprep.subr.mxu0 0.0
    %3104 = vmatpush1.msra.mxu0 0.0
    %3105 = vmatprep.subr.mxu0 0.0
    %3106 = vmatpush1.msra.mxu0 0.0
    %3107 = vmatprep.subr.mxu0 0.0
    %3108 = vmatpush1.msra.mxu0 0.0
    %3109 = vmatprep.subr.mxu0 0.0
    %3110 = vmatpush1.msra.mxu0 0.0
    %3111 = vmatprep.subr.mxu0 0.0
    %3112 = vmatpush1.msra.mxu0 0.0
    %3113 = vmatprep.subr.mxu0 0.0
    %3114 = vmatpush1.msra.mxu0 0.0
    %3115 = vmatprep.subr.mxu0 0.0
    %3116 = vmatpush1.msra.mxu0 0.0
    %3117 = vmatprep.subr.mxu0 0.0
    %3118 = vmatpush1.msra.mxu0 0.0
    %3119 = vmatprep.mubr.f32.mxu0 0.0
    %v3120 = vand.u32 %v3045, 4294901760
    %v3121 = vsub.f32 %v3045, %v3120
    %v3122 = vand.u32 %v3121, 4294901760
    %v3123 = vsub.f32 %v3121, %v3122
    %v3124 = vand.u32 %v3123, 4294901760
    %3125 = vmatmul.mubr.f32.gmra.mrb[0].mxu0 %v3124
    %v3126 = vpop.f32.mrb[0].mxu0
    %v3127 = vadd.f32 %v3041, %v3126
    %v3128 = vpop.f32.mrb[0].mxu0
    %3129 = vdwg.mxu0
    %3130 = vmatprep.subr.mxu0 0.0
    %v3131 = vand.u32 %v68, 4294901760
    %v3132 = vsub.f32 %v68, %v3131
    %v3133 = vand.u32 %v3132, 4294901760
    %v3134 = vsub.f32 %v3132, %v3133
    %v3135 = vand.u32 %v3134, 4294901760
    %3136 = vmatpush1.msra.mxu0 %v3135
    %3137 = vmatprep.subr.mxu0 0.0
    %v3138 = vand.u32 %v69, 4294901760
    %v3139 = vsub.f32 %v69, %v3138
    %v3140 = vand.u32 %v3139, 4294901760
    %v3141 = vsub.f32 %v3139, %v3140
    %v3142 = vand.u32 %v3141, 4294901760
    %3143 = vmatpush1.msra.mxu0 %v3142
    %3144 = vmatprep.subr.mxu0 0.0
    %v3145 = vand.u32 %v70, 4294901760
    %v3146 = vsub.f32 %v70, %v3145
    %v3147 = vand.u32 %v3146, 4294901760
    %v3148 = vsub.f32 %v3146, %v3147
    %v3149 = vand.u32 %v3148, 4294901760
    %3150 = vmatpush1.msra.mxu0 %v3149
    %3151 = vmatprep.subr.mxu0 0.0
    %v3152 = vand.u32 %v71, 4294901760
    %v3153 = vsub.f32 %v71, %v3152
    %v3154 = vand.u32 %v3153, 4294901760
    %v3155 = vsub.f32 %v3153, %v3154
    %v3156 = vand.u32 %v3155, 4294901760
    %3157 = vmatpush1.msra.mxu0 %v3156
    %3158 = vmatprep.subr.mxu0 0.0
    %v3159 = vand.u32 %v72, 4294901760
    %v3160 = vsub.f32 %v72, %v3159
    %v3161 = vand.u32 %v3160, 4294901760
    %v3162 = vsub.f32 %v3160, %v3161
    %v3163 = vand.u32 %v3162, 4294901760
    %3164 = vmatpush1.msra.mxu0 %v3163
    %3165 = vmatprep.subr.mxu0 0.0
    %v3166 = vand.u32 %v73, 4294901760
    %v3167 = vsub.f32 %v73, %v3166
    %v3168 = vand.u32 %v3167, 4294901760
    %v3169 = vsub.f32 %v3167, %v3168
    %v3170 = vand.u32 %v3169, 4294901760
    %3171 = vmatpush1.msra.mxu0 %v3170
    %3172 = vmatprep.subr.mxu0 0.0
    %v3173 = vand.u32 %v74, 4294901760
    %v3174 = vsub.f32 %v74, %v3173
    %v3175 = vand.u32 %v3174, 4294901760
    %v3176 = vsub.f32 %v3174, %v3175
    %v3177 = vand.u32 %v3176, 4294901760
    %3178 = vmatpush1.msra.mxu0 %v3177
    %3179 = vmatprep.subr.mxu0 0.0
    %v3180 = vand.u32 %v75, 4294901760
    %v3181 = vsub.f32 %v75, %v3180
    %v3182 = vand.u32 %v3181, 4294901760
    %v3183 = vsub.f32 %v3181, %v3182
    %v3184 = vand.u32 %v3183, 4294901760
    %3185 = vmatpush1.msra.mxu0 %v3184
    %3186 = vmatprep.subr.mxu0 0.0
    %3187 = vmatpush1.msra.mxu0 0.0
    %3188 = vmatprep.subr.mxu0 0.0
    %3189 = vmatpush1.msra.mxu0 0.0
    %3190 = vmatprep.subr.mxu0 0.0
    %3191 = vmatpush1.msra.mxu0 0.0
    %3192 = vmatprep.subr.mxu0 0.0
    %3193 = vmatpush1.msra.mxu0 0.0
    %3194 = vmatprep.subr.mxu0 0.0
    %3195 = vmatpush1.msra.mxu0 0.0
    %3196 = vmatprep.subr.mxu0 0.0
    %3197 = vmatpush1.msra.mxu0 0.0
    %3198 = vmatprep.subr.mxu0 0.0
    %3199 = vmatpush1.msra.mxu0 0.0
    %3200 = vmatprep.subr.mxu0 0.0
    %3201 = vmatpush1.msra.mxu0 0.0
    %3202 = vmatprep.subr.mxu0 0.0
    %3203 = vmatpush1.msra.mxu0 0.0
    %3204 = vmatprep.subr.mxu0 0.0
    %3205 = vmatpush1.msra.mxu0 0.0
    %3206 = vmatprep.subr.mxu0 0.0
    %3207 = vmatpush1.msra.mxu0 0.0
    %3208 = vmatprep.subr.mxu0 0.0
    %3209 = vmatpush1.msra.mxu0 0.0
    %3210 = vmatprep.subr.mxu0 0.0
    %3211 = vmatpush1.msra.mxu0 0.0
    %3212 = vmatprep.subr.mxu0 0.0
    %3213 = vmatpush1.msra.mxu0 0.0
    %3214 = vmatprep.subr.mxu0 0.0
    %3215 = vmatpush1.msra.mxu0 0.0
    %3216 = vmatprep.subr.mxu0 0.0
    %3217 = vmatpush1.msra.mxu0 0.0
    %3218 = vmatprep.subr.mxu0 0.0
    %3219 = vmatpush1.msra.mxu0 0.0
    %3220 = vmatprep.subr.mxu0 0.0
    %3221 = vmatpush1.msra.mxu0 0.0
    %3222 = vmatprep.subr.mxu0 0.0
    %3223 = vmatpush1.msra.mxu0 0.0
    %3224 = vmatprep.subr.mxu0 0.0
    %3225 = vmatpush1.msra.mxu0 0.0
    %3226 = vmatprep.subr.mxu0 0.0
    %3227 = vmatpush1.msra.mxu0 0.0
    %3228 = vmatprep.subr.mxu0 0.0
    %3229 = vmatpush1.msra.mxu0 0.0
    %3230 = vmatprep.subr.mxu0 0.0
    %3231 = vmatpush1.msra.mxu0 0.0
    %3232 = vmatprep.subr.mxu0 0.0
    %3233 = vmatpush1.msra.mxu0 0.0
    %3234 = vmatprep.mubr.f32.mxu0 0.0
    %v3235 = vand.u32 %v3045, 4294901760
    %3236 = vmatmul.mubr.f32.gmra.mrb[0].mxu0 %v3235
    %v3237 = vpop.f32.mrb[0].mxu0
    %v3238 = vadd.f32 %v3127, %v3237
    %v3239 = vpop.f32.mrb[0].mxu0
    %3240 = vdwg.mxu0
    %3241 = vmatprep.subr.mxu0 0.0
    %v3242 = vand.u32 %v68, 4294901760
    %v3243 = vsub.f32 %v68, %v3242
    %3244 = vmatpush1.msra.mxu0 %v3243
    %3245 = vmatprep.subr.mxu0 0.0
    %v3246 = vand.u32 %v69, 4294901760
    %v3247 = vsub.f32 %v69, %v3246
    %3248 = vmatpush1.msra.mxu0 %v3247
    %3249 = vmatprep.subr.mxu0 0.0
    %v3250 = vand.u32 %v70, 4294901760
    %v3251 = vsub.f32 %v70, %v3250
    %3252 = vmatpush1.msra.mxu0 %v3251
    %3253 = vmatprep.subr.mxu0 0.0
    %v3254 = vand.u32 %v71, 4294901760
    %v3255 = vsub.f32 %v71, %v3254
    %3256 = vmatpush1.msra.mxu0 %v3255
    %3257 = vmatprep.subr.mxu0 0.0
    %v3258 = vand.u32 %v72, 4294901760
    %v3259 = vsub.f32 %v72, %v3258
    %3260 = vmatpush1.msra.mxu0 %v3259
    %3261 = vmatprep.subr.mxu0 0.0
    %v3262 = vand.u32 %v73, 4294901760
    %v3263 = vsub.f32 %v73, %v3262
    %3264 = vmatpush1.msra.mxu0 %v3263
    %3265 = vmatprep.subr.mxu0 0.0
    %v3266 = vand.u32 %v74, 4294901760
    %v3267 = vsub.f32 %v74, %v3266
    %3268 = vmatpush1.msra.mxu0 %v3267
    %3269 = vmatprep.subr.mxu0 0.0
    %v3270 = vand.u32 %v75, 4294901760
    %v3271 = vsub.f32 %v75, %v3270
    %3272 = vmatpush1.msra.mxu0 %v3271
    %3273 = vmatprep.subr.mxu0 0.0
    %3274 = vmatpush1.msra.mxu0 0.0
    %3275 = vmatprep.subr.mxu0 0.0
    %3276 = vmatpush1.msra.mxu0 0.0
    %3277 = vmatprep.subr.mxu0 0.0
    %3278 = vmatpush1.msra.mxu0 0.0
    %3279 = vmatprep.subr.mxu0 0.0
    %3280 = vmatpush1.msra.mxu0 0.0
    %3281 = vmatprep.subr.mxu0 0.0
    %3282 = vmatpush1.msra.mxu0 0.0
    %3283 = vmatprep.subr.mxu0 0.0
    %3284 = vmatpush1.msra.mxu0 0.0
    %3285 = vmatprep.subr.mxu0 0.0
    %3286 = vmatpush1.msra.mxu0 0.0
    %3287 = vmatprep.subr.mxu0 0.0
    %3288 = vmatpush1.msra.mxu0 0.0
    %3289 = vmatprep.subr.mxu0 0.0
    %3290 = vmatpush1.msra.mxu0 0.0
    %3291 = vmatprep.subr.mxu0 0.0
    %3292 = vmatpush1.msra.mxu0 0.0
    %3293 = vmatprep.subr.mxu0 0.0
    %3294 = vmatpush1.msra.mxu0 0.0
    %3295 = vmatprep.subr.mxu0 0.0
    %3296 = vmatpush1.msra.mxu0 0.0
    %3297 = vmatprep.subr.mxu0 0.0
    %3298 = vmatpush1.msra.mxu0 0.0
    %3299 = vmatprep.subr.mxu0 0.0
    %3300 = vmatpush1.msra.mxu0 0.0
    %3301 = vmatprep.subr.mxu0 0.0
    %3302 = vmatpush1.msra.mxu0 0.0
    %3303 = vmatprep.subr.mxu0 0.0
    %3304 = vmatpush1.msra.mxu0 0.0
    %3305 = vmatprep.subr.mxu0 0.0
    %3306 = vmatpush1.msra.mxu0 0.0
    %3307 = vmatprep.subr.mxu0 0.0
    %3308 = vmatpush1.msra.mxu0 0.0
    %3309 = vmatprep.subr.mxu0 0.0
    %3310 = vmatpush1.msra.mxu0 0.0
    %3311 = vmatprep.subr.mxu0 0.0
    %3312 = vmatpush1.msra.mxu0 0.0
    %3313 = vmatprep.subr.mxu0 0.0
    %3314 = vmatpush1.msra.mxu0 0.0
    %3315 = vmatprep.subr.mxu0 0.0
    %3316 = vmatpush1.msra.mxu0 0.0
    %3317 = vmatprep.subr.mxu0 0.0
    %3318 = vmatpush1.msra.mxu0 0.0
    %3319 = vmatprep.subr.mxu0 0.0
    %3320 = vmatpush1.msra.mxu0 0.0
    %3321 = vmatprep.mubr.f32.mxu0 0.0
    %v3322 = vand.u32 %v3045, 4294901760
    %v3323 = vsub.f32 %v3045, %v3322
    %3324 = vmatmul.mubr.f32.gmra.mrb[0].mxu0 %v3323
    %v3325 = vpop.f32.mrb[0].mxu0
    %v3326 = vadd.f32 %v3238, %v3325
    %v3327 = vpop.f32.mrb[0].mxu0
    %3328 = vdwg.mxu0
    %3329 = vmatprep.subr.mxu0 0.0
    %v3330 = vand.u32 %v68, 4294901760
    %3331 = vmatpush1.msra.mxu0 %v3330
    %3332 = vmatprep.subr.mxu0 0.0
    %v3333 = vand.u32 %v69, 4294901760
    %3334 = vmatpush1.msra.mxu0 %v3333
    %3335 = vmatprep.subr.mxu0 0.0
    %v3336 = vand.u32 %v70, 4294901760
    %3337 = vmatpush1.msra.mxu0 %v3336
    %3338 = vmatprep.subr.mxu0 0.0
    %v3339 = vand.u32 %v71, 4294901760
    %3340 = vmatpush1.msra.mxu0 %v3339
    %3341 = vmatprep.subr.mxu0 0.0
    %v3342 = vand.u32 %v72, 4294901760
    %3343 = vmatpush1.msra.mxu0 %v3342
    %3344 = vmatprep.subr.mxu0 0.0
    %v3345 = vand.u32 %v73, 4294901760
    %3346 = vmatpush1.msra.mxu0 %v3345
    %3347 = vmatprep.subr.mxu0 0.0
    %v3348 = vand.u32 %v74, 4294901760
    %3349 = vmatpush1.msra.mxu0 %v3348
    %3350 = vmatprep.subr.mxu0 0.0
    %v3351 = vand.u32 %v75, 4294901760
    %3352 = vmatpush1.msra.mxu0 %v3351
    %3353 = vmatprep.subr.mxu0 0.0
    %3354 = vmatpush1.msra.mxu0 0.0
    %3355 = vmatprep.subr.mxu0 0.0
    %3356 = vmatpush1.msra.mxu0 0.0
    %3357 = vmatprep.subr.mxu0 0.0
    %3358 = vmatpush1.msra.mxu0 0.0
    %3359 = vmatprep.subr.mxu0 0.0
    %3360 = vmatpush1.msra.mxu0 0.0
    %3361 = vmatprep.subr.mxu0 0.0
    %3362 = vmatpush1.msra.mxu0 0.0
    %3363 = vmatprep.subr.mxu0 0.0
    %3364 = vmatpush1.msra.mxu0 0.0
    %3365 = vmatprep.subr.mxu0 0.0
    %3366 = vmatpush1.msra.mxu0 0.0
    %3367 = vmatprep.subr.mxu0 0.0
    %3368 = vmatpush1.msra.mxu0 0.0
    %3369 = vmatprep.subr.mxu0 0.0
    %3370 = vmatpush1.msra.mxu0 0.0
    %3371 = vmatprep.subr.mxu0 0.0
    %3372 = vmatpush1.msra.mxu0 0.0
    %3373 = vmatprep.subr.mxu0 0.0
    %3374 = vmatpush1.msra.mxu0 0.0
    %3375 = vmatprep.subr.mxu0 0.0
    %3376 = vmatpush1.msra.mxu0 0.0
    %3377 = vmatprep.subr.mxu0 0.0
    %3378 = vmatpush1.msra.mxu0 0.0
    %3379 = vmatprep.subr.mxu0 0.0
    %3380 = vmatpush1.msra.mxu0 0.0
    %3381 = vmatprep.subr.mxu0 0.0
    %3382 = vmatpush1.msra.mxu0 0.0
    %3383 = vmatprep.subr.mxu0 0.0
    %3384 = vmatpush1.msra.mxu0 0.0
    %3385 = vmatprep.subr.mxu0 0.0
    %3386 = vmatpush1.msra.mxu0 0.0
    %3387 = vmatprep.subr.mxu0 0.0
    %3388 = vmatpush1.msra.mxu0 0.0
    %3389 = vmatprep.subr.mxu0 0.0
    %3390 = vmatpush1.msra.mxu0 0.0
    %3391 = vmatprep.subr.mxu0 0.0
    %3392 = vmatpush1.msra.mxu0 0.0
    %3393 = vmatprep.subr.mxu0 0.0
    %3394 = vmatpush1.msra.mxu0 0.0
    %3395 = vmatprep.subr.mxu0 0.0
    %3396 = vmatpush1.msra.mxu0 0.0
    %3397 = vmatprep.subr.mxu0 0.0
    %3398 = vmatpush1.msra.mxu0 0.0
    %3399 = vmatprep.subr.mxu0 0.0
    %3400 = vmatpush1.msra.mxu0 0.0
    %3401 = vmatprep.mubr.f32.mxu0 0.0
    %v3402 = vand.u32 %v3045, 4294901760
    %v3403 = vsub.f32 %v3045, %v3402
    %v3404 = vand.u32 %v3403, 4294901760
    %3405 = vmatmul.mubr.f32.gmra.mrb[0].mxu0 %v3404
    %v3406 = vpop.f32.mrb[0].mxu0
    %v3407 = vadd.f32 %v3326, %v3406
    %v3408 = vpop.f32.mrb[0].mxu0
    %3409 = vdwg.mxu0
    %3410 = vmatprep.subr.mxu0 0.0
    %v3411 = vand.u32 %v68, 4294901760
    %v3412 = vsub.f32 %v68, %v3411
    %v3413 = vand.u32 %v3412, 4294901760
    %3414 = vmatpush1.msra.mxu0 %v3413
    %3415 = vmatprep.subr.mxu0 0.0
    %v3416 = vand.u32 %v69, 4294901760
    %v3417 = vsub.f32 %v69, %v3416
    %v3418 = vand.u32 %v3417, 4294901760
    %3419 = vmatpush1.msra.mxu0 %v3418
    %3420 = vmatprep.subr.mxu0 0.0
    %v3421 = vand.u32 %v70, 4294901760
    %v3422 = vsub.f32 %v70, %v3421
    %v3423 = vand.u32 %v3422, 4294901760
    %3424 = vmatpush1.msra.mxu0 %v3423
    %3425 = vmatprep.subr.mxu0 0.0
    %v3426 = vand.u32 %v71, 4294901760
    %v3427 = vsub.f32 %v71, %v3426
    %v3428 = vand.u32 %v3427, 4294901760
    %3429 = vmatpush1.msra.mxu0 %v3428
    %3430 = vmatprep.subr.mxu0 0.0
    %v3431 = vand.u32 %v72, 4294901760
    %v3432 = vsub.f32 %v72, %v3431
    %v3433 = vand.u32 %v3432, 4294901760
    %3434 = vmatpush1.msra.mxu0 %v3433
    %3435 = vmatprep.subr.mxu0 0.0
    %v3436 = vand.u32 %v73, 4294901760
    %v3437 = vsub.f32 %v73, %v3436
    %v3438 = vand.u32 %v3437, 4294901760
    %3439 = vmatpush1.msra.mxu0 %v3438
    %3440 = vmatprep.subr.mxu0 0.0
    %v3441 = vand.u32 %v74, 4294901760
    %v3442 = vsub.f32 %v74, %v3441
    %v3443 = vand.u32 %v3442, 4294901760
    %3444 = vmatpush1.msra.mxu0 %v3443
    %3445 = vmatprep.subr.mxu0 0.0
    %v3446 = vand.u32 %v75, 4294901760
    %v3447 = vsub.f32 %v75, %v3446
    %v3448 = vand.u32 %v3447, 4294901760
    %3449 = vmatpush1.msra.mxu0 %v3448
    %3450 = vmatprep.subr.mxu0 0.0
    %3451 = vmatpush1.msra.mxu0 0.0
    %3452 = vmatprep.subr.mxu0 0.0
    %3453 = vmatpush1.msra.mxu0 0.0
    %3454 = vmatprep.subr.mxu0 0.0
    %3455 = vmatpush1.msra.mxu0 0.0
    %3456 = vmatprep.subr.mxu0 0.0
    %3457 = vmatpush1.msra.mxu0 0.0
    %3458 = vmatprep.subr.mxu0 0.0
    %3459 = vmatpush1.msra.mxu0 0.0
    %3460 = vmatprep.subr.mxu0 0.0
    %3461 = vmatpush1.msra.mxu0 0.0
    %3462 = vmatprep.subr.mxu0 0.0
    %3463 = vmatpush1.msra.mxu0 0.0
    %3464 = vmatprep.subr.mxu0 0.0
    %3465 = vmatpush1.msra.mxu0 0.0
    %3466 = vmatprep.subr.mxu0 0.0
    %3467 = vmatpush1.msra.mxu0 0.0
    %3468 = vmatprep.subr.mxu0 0.0
    %3469 = vmatpush1.msra.mxu0 0.0
    %3470 = vmatprep.subr.mxu0 0.0
    %3471 = vmatpush1.msra.mxu0 0.0
    %3472 = vmatprep.subr.mxu0 0.0
    %3473 = vmatpush1.msra.mxu0 0.0
    %3474 = vmatprep.subr.mxu0 0.0
    %3475 = vmatpush1.msra.mxu0 0.0
    %3476 = vmatprep.subr.mxu0 0.0
    %3477 = vmatpush1.msra.mxu0 0.0
    %3478 = vmatprep.subr.mxu0 0.0
    %3479 = vmatpush1.msra.mxu0 0.0
    %3480 = vmatprep.subr.mxu0 0.0
    %3481 = vmatpush1.msra.mxu0 0.0
    %3482 = vmatprep.subr.mxu0 0.0
    %3483 = vmatpush1.msra.mxu0 0.0
    %3484 = vmatprep.subr.mxu0 0.0
    %3485 = vmatpush1.msra.mxu0 0.0
    %3486 = vmatprep.subr.mxu0 0.0
    %3487 = vmatpush1.msra.mxu0 0.0
    %3488 = vmatprep.subr.mxu0 0.0
    %3489 = vmatpush1.msra.mxu0 0.0
    %3490 = vmatprep.subr.mxu0 0.0
    %3491 = vmatpush1.msra.mxu0 0.0
    %3492 = vmatprep.subr.mxu0 0.0
    %3493 = vmatpush1.msra.mxu0 0.0
    %3494 = vmatprep.subr.mxu0 0.0
    %3495 = vmatpush1.msra.mxu0 0.0
    %3496 = vmatprep.subr.mxu0 0.0
    %3497 = vmatpush1.msra.mxu0 0.0
    %3498 = vmatprep.mubr.f32.mxu0 0.0
    %v3499 = vand.u32 %v3045, 4294901760
    %3500 = vmatmul.mubr.f32.gmra.mrb[0].mxu0 %v3499
    %v3501 = vpop.f32.mrb[0].mxu0
    %v3502 = vadd.f32 %v3407, %v3501
    %v3503 = vpop.f32.mrb[0].mxu0
    %3504 = vdwg.mxu0
    %3505 = vmatprep.subr.mxu0 0.0
    %v3506 = vand.u32 %v68, 4294901760
    %3507 = vmatpush1.msra.mxu0 %v3506
    %3508 = vmatprep.subr.mxu0 0.0
    %v3509 = vand.u32 %v69, 4294901760
    %3510 = vmatpush1.msra.mxu0 %v3509
    %3511 = vmatprep.subr.mxu0 0.0
    %v3512 = vand.u32 %v70, 4294901760
    %3513 = vmatpush1.msra.mxu0 %v3512
    %3514 = vmatprep.subr.mxu0 0.0
    %v3515 = vand.u32 %v71, 4294901760
    %3516 = vmatpush1.msra.mxu0 %v3515
    %3517 = vmatprep.subr.mxu0 0.0
    %v3518 = vand.u32 %v72, 4294901760
    %3519 = vmatpush1.msra.mxu0 %v3518
    %3520 = vmatprep.subr.mxu0 0.0
    %v3521 = vand.u32 %v73, 4294901760
    %3522 = vmatpush1.msra.mxu0 %v3521
    %3523 = vmatprep.subr.mxu0 0.0
    %v3524 = vand.u32 %v74, 4294901760
    %3525 = vmatpush1.msra.mxu0 %v3524
    %3526 = vmatprep.subr.mxu0 0.0
    %v3527 = vand.u32 %v75, 4294901760
    %3528 = vmatpush1.msra.mxu0 %v3527
    %3529 = vmatprep.subr.mxu0 0.0
    %3530 = vmatpush1.msra.mxu0 0.0
    %3531 = vmatprep.subr.mxu0 0.0
    %3532 = vmatpush1.msra.mxu0 0.0
    %3533 = vmatprep.subr.mxu0 0.0
    %3534 = vmatpush1.msra.mxu0 0.0
    %3535 = vmatprep.subr.mxu0 0.0
    %3536 = vmatpush1.msra.mxu0 0.0
    %3537 = vmatprep.subr.mxu0 0.0
    %3538 = vmatpush1.msra.mxu0 0.0
    %3539 = vmatprep.subr.mxu0 0.0
    %3540 = vmatpush1.msra.mxu0 0.0
    %3541 = vmatprep.subr.mxu0 0.0
    %3542 = vmatpush1.msra.mxu0 0.0
    %3543 = vmatprep.subr.mxu0 0.0
    %3544 = vmatpush1.msra.mxu0 0.0
    %3545 = vmatprep.subr.mxu0 0.0
    %3546 = vmatpush1.msra.mxu0 0.0
    %3547 = vmatprep.subr.mxu0 0.0
    %3548 = vmatpush1.msra.mxu0 0.0
    %3549 = vmatprep.subr.mxu0 0.0
    %3550 = vmatpush1.msra.mxu0 0.0
    %3551 = vmatprep.subr.mxu0 0.0
    %3552 = vmatpush1.msra.mxu0 0.0
    %3553 = vmatprep.subr.mxu0 0.0
    %3554 = vmatpush1.msra.mxu0 0.0
    %3555 = vmatprep.subr.mxu0 0.0
    %3556 = vmatpush1.msra.mxu0 0.0
    %3557 = vmatprep.subr.mxu0 0.0
    %3558 = vmatpush1.msra.mxu0 0.0
    %3559 = vmatprep.subr.mxu0 0.0
    %3560 = vmatpush1.msra.mxu0 0.0
    %3561 = vmatprep.subr.mxu0 0.0
    %3562 = vmatpush1.msra.mxu0 0.0
    %3563 = vmatprep.subr.mxu0 0.0
    %3564 = vmatpush1.msra.mxu0 0.0
    %3565 = vmatprep.subr.mxu0 0.0
    %3566 = vmatpush1.msra.mxu0 0.0
    %3567 = vmatprep.subr.mxu0 0.0
    %3568 = vmatpush1.msra.mxu0 0.0
    %3569 = vmatprep.subr.mxu0 0.0
    %3570 = vmatpush1.msra.mxu0 0.0
    %3571 = vmatprep.subr.mxu0 0.0
    %3572 = vmatpush1.msra.mxu0 0.0
    %3573 = vmatprep.subr.mxu0 0.0
    %3574 = vmatpush1.msra.mxu0 0.0
    %3575 = vmatprep.subr.mxu0 0.0
    %3576 = vmatpush1.msra.mxu0 0.0
    %3577 = vmatprep.mubr.f32.mxu0 0.0
    %v3578 = vand.u32 %v3045, 4294901760
    %3579 = vmatmul.mubr.f32.gmra.mrb[0].mxu0 %v3578
    %v3580 = vpop.f32.mrb[0].mxu0
    %v3581 = vadd.f32 %v3502, %v3580
    %v3582 = vpop.f32.mrb[0].mxu0
    %3583 = vdwg.mxu0
    %v3585 = vsel %vm1526, %v2581, 0
    %3587 = vmatprep.subr.mxu0 0.0
    %v3588 = vand.u32 %v78, 4294901760
    %3589 = vmatpush1.msra.mxu0 %v3588
    %3590 = vmatprep.subr.mxu0 0.0
    %v3591 = vand.u32 %v79, 4294901760
    %3592 = vmatpush1.msra.mxu0 %v3591
    %3593 = vmatprep.subr.mxu0 0.0
    %3594 = vmatpush1.msra.mxu0 0.0
    %3595 = vmatprep.subr.mxu0 0.0
    %3596 = vmatpush1.msra.mxu0 0.0
    %3597 = vmatprep.subr.mxu0 0.0
    %3598 = vmatpush1.msra.mxu0 0.0
    %3599 = vmatprep.subr.mxu0 0.0
    %3600 = vmatpush1.msra.mxu0 0.0
    %3601 = vmatprep.subr.mxu0 0.0
    %3602 = vmatpush1.msra.mxu0 0.0
    %3603 = vmatprep.subr.mxu0 0.0
    %3604 = vmatpush1.msra.mxu0 0.0
    %3605 = vmatprep.subr.mxu0 0.0
    %3606 = vmatpush1.msra.mxu0 0.0
    %3607 = vmatprep.subr.mxu0 0.0
    %3608 = vmatpush1.msra.mxu0 0.0
    %3609 = vmatprep.subr.mxu0 0.0
    %3610 = vmatpush1.msra.mxu0 0.0
    %3611 = vmatprep.subr.mxu0 0.0
    %3612 = vmatpush1.msra.mxu0 0.0
    %3613 = vmatprep.subr.mxu0 0.0
    %3614 = vmatpush1.msra.mxu0 0.0
    %3615 = vmatprep.subr.mxu0 0.0
    %3616 = vmatpush1.msra.mxu0 0.0
    %3617 = vmatprep.subr.mxu0 0.0
    %3618 = vmatpush1.msra.mxu0 0.0
    %3619 = vmatprep.subr.mxu0 0.0
    %3620 = vmatpush1.msra.mxu0 0.0
    %3621 = vmatprep.subr.mxu0 0.0
    %3622 = vmatpush1.msra.mxu0 0.0
    %3623 = vmatprep.subr.mxu0 0.0
    %3624 = vmatpush1.msra.mxu0 0.0
    %3625 = vmatprep.subr.mxu0 0.0
    %3626 = vmatpush1.msra.mxu0 0.0
    %3627 = vmatprep.subr.mxu0 0.0
    %3628 = vmatpush1.msra.mxu0 0.0
    %3629 = vmatprep.subr.mxu0 0.0
    %3630 = vmatpush1.msra.mxu0 0.0
    %3631 = vmatprep.subr.mxu0 0.0
    %3632 = vmatpush1.msra.mxu0 0.0
    %3633 = vmatprep.subr.mxu0 0.0
    %3634 = vmatpush1.msra.mxu0 0.0
    %3635 = vmatprep.subr.mxu0 0.0
    %3636 = vmatpush1.msra.mxu0 0.0
    %3637 = vmatprep.subr.mxu0 0.0
    %3638 = vmatpush1.msra.mxu0 0.0
    %3639 = vmatprep.subr.mxu0 0.0
    %3640 = vmatpush1.msra.mxu0 0.0
    %3641 = vmatprep.subr.mxu0 0.0
    %3642 = vmatpush1.msra.mxu0 0.0
    %3643 = vmatprep.subr.mxu0 0.0
    %3644 = vmatpush1.msra.mxu0 0.0
    %3645 = vmatprep.subr.mxu0 0.0
    %3646 = vmatpush1.msra.mxu0 0.0
    %3647 = vmatprep.subr.mxu0 0.0
    %3648 = vmatpush1.msra.mxu0 0.0
    %3649 = vmatprep.subr.mxu0 0.0
    %3650 = vmatpush1.msra.mxu0 0.0
    %3651 = vmatprep.subr.mxu0 0.0
    %3652 = vmatpush1.msra.mxu0 0.0
    %3653 = vmatprep.mubr.f32.mxu0 0.0
    %v3654 = vand.u32 %v3585, 4294901760
    %v3655 = vsub.f32 %v3585, %v3654
    %v3656 = vand.u32 %v3655, 4294901760
    %v3657 = vsub.f32 %v3655, %v3656
    %v3658 = vand.u32 %v3657, 4294901760
    %3659 = vmatmul.mubr.f32.gmra.mrb[0].mxu0 %v3658
    %v3660 = vpop.f32.mrb[0].mxu0
    %v3661 = vadd.f32 0.0, %v3660
    %v3662 = vpop.f32.mrb[0].mxu0
    %3663 = vdwg.mxu0
    %3664 = vmatprep.subr.mxu0 0.0
    %v3665 = vand.u32 %v78, 4294901760
    %v3666 = vsub.f32 %v78, %v3665
    %v3667 = vand.u32 %v3666, 4294901760
    %v3668 = vsub.f32 %v3666, %v3667
    %v3669 = vand.u32 %v3668, 4294901760
    %3670 = vmatpush1.msra.mxu0 %v3669
    %3671 = vmatprep.subr.mxu0 0.0
    %v3672 = vand.u32 %v79, 4294901760
    %v3673 = vsub.f32 %v79, %v3672
    %v3674 = vand.u32 %v3673, 4294901760
    %v3675 = vsub.f32 %v3673, %v3674
    %v3676 = vand.u32 %v3675, 4294901760
    %3677 = vmatpush1.msra.mxu0 %v3676
    %3678 = vmatprep.subr.mxu0 0.0
    %3679 = vmatpush1.msra.mxu0 0.0
    %3680 = vmatprep.subr.mxu0 0.0
    %3681 = vmatpush1.msra.mxu0 0.0
    %3682 = vmatprep.subr.mxu0 0.0
    %3683 = vmatpush1.msra.mxu0 0.0
    %3684 = vmatprep.subr.mxu0 0.0
    %3685 = vmatpush1.msra.mxu0 0.0
    %3686 = vmatprep.subr.mxu0 0.0
    %3687 = vmatpush1.msra.mxu0 0.0
    %3688 = vmatprep.subr.mxu0 0.0
    %3689 = vmatpush1.msra.mxu0 0.0
    %3690 = vmatprep.subr.mxu0 0.0
    %3691 = vmatpush1.msra.mxu0 0.0
    %3692 = vmatprep.subr.mxu0 0.0
    %3693 = vmatpush1.msra.mxu0 0.0
    %3694 = vmatprep.subr.mxu0 0.0
    %3695 = vmatpush1.msra.mxu0 0.0
    %3696 = vmatprep.subr.mxu0 0.0
    %3697 = vmatpush1.msra.mxu0 0.0
    %3698 = vmatprep.subr.mxu0 0.0
    %3699 = vmatpush1.msra.mxu0 0.0
    %3700 = vmatprep.subr.mxu0 0.0
    %3701 = vmatpush1.msra.mxu0 0.0
    %3702 = vmatprep.subr.mxu0 0.0
    %3703 = vmatpush1.msra.mxu0 0.0
    %3704 = vmatprep.subr.mxu0 0.0
    %3705 = vmatpush1.msra.mxu0 0.0
    %3706 = vmatprep.subr.mxu0 0.0
    %3707 = vmatpush1.msra.mxu0 0.0
    %3708 = vmatprep.subr.mxu0 0.0
    %3709 = vmatpush1.msra.mxu0 0.0
    %3710 = vmatprep.subr.mxu0 0.0
    %3711 = vmatpush1.msra.mxu0 0.0
    %3712 = vmatprep.subr.mxu0 0.0
    %3713 = vmatpush1.msra.mxu0 0.0
    %3714 = vmatprep.subr.mxu0 0.0
    %3715 = vmatpush1.msra.mxu0 0.0
    %3716 = vmatprep.subr.mxu0 0.0
    %3717 = vmatpush1.msra.mxu0 0.0
    %3718 = vmatprep.subr.mxu0 0.0
    %3719 = vmatpush1.msra.mxu0 0.0
    %3720 = vmatprep.subr.mxu0 0.0
    %3721 = vmatpush1.msra.mxu0 0.0
    %3722 = vmatprep.subr.mxu0 0.0
    %3723 = vmatpush1.msra.mxu0 0.0
    %3724 = vmatprep.subr.mxu0 0.0
    %3725 = vmatpush1.msra.mxu0 0.0
    %3726 = vmatprep.subr.mxu0 0.0
    %3727 = vmatpush1.msra.mxu0 0.0
    %3728 = vmatprep.subr.mxu0 0.0
    %3729 = vmatpush1.msra.mxu0 0.0
    %3730 = vmatprep.subr.mxu0 0.0
    %3731 = vmatpush1.msra.mxu0 0.0
    %3732 = vmatprep.subr.mxu0 0.0
    %3733 = vmatpush1.msra.mxu0 0.0
    %3734 = vmatprep.subr.mxu0 0.0
    %3735 = vmatpush1.msra.mxu0 0.0
    %3736 = vmatprep.subr.mxu0 0.0
    %3737 = vmatpush1.msra.mxu0 0.0
    %3738 = vmatprep.mubr.f32.mxu0 0.0
    %v3739 = vand.u32 %v3585, 4294901760
    %3740 = vmatmul.mubr.f32.gmra.mrb[0].mxu0 %v3739
    %v3741 = vpop.f32.mrb[0].mxu0
    %v3742 = vadd.f32 %v3661, %v3741
    %v3743 = vpop.f32.mrb[0].mxu0
    %3744 = vdwg.mxu0
    %3745 = vmatprep.subr.mxu0 0.0
    %v3746 = vand.u32 %v78, 4294901760
    %v3747 = vsub.f32 %v78, %v3746
    %3748 = vmatpush1.msra.mxu0 %v3747
    %3749 = vmatprep.subr.mxu0 0.0
    %v3750 = vand.u32 %v79, 4294901760
    %v3751 = vsub.f32 %v79, %v3750
    %3752 = vmatpush1.msra.mxu0 %v3751
    %3753 = vmatprep.subr.mxu0 0.0
    %3754 = vmatpush1.msra.mxu0 0.0
    %3755 = vmatprep.subr.mxu0 0.0
    %3756 = vmatpush1.msra.mxu0 0.0
    %3757 = vmatprep.subr.mxu0 0.0
    %3758 = vmatpush1.msra.mxu0 0.0
    %3759 = vmatprep.subr.mxu0 0.0
    %3760 = vmatpush1.msra.mxu0 0.0
    %3761 = vmatprep.subr.mxu0 0.0
    %3762 = vmatpush1.msra.mxu0 0.0
    %3763 = vmatprep.subr.mxu0 0.0
    %3764 = vmatpush1.msra.mxu0 0.0
    %3765 = vmatprep.subr.mxu0 0.0
    %3766 = vmatpush1.msra.mxu0 0.0
    %3767 = vmatprep.subr.mxu0 0.0
    %3768 = vmatpush1.msra.mxu0 0.0
    %3769 = vmatprep.subr.mxu0 0.0
    %3770 = vmatpush1.msra.mxu0 0.0
    %3771 = vmatprep.subr.mxu0 0.0
    %3772 = vmatpush1.msra.mxu0 0.0
    %3773 = vmatprep.subr.mxu0 0.0
    %3774 = vmatpush1.msra.mxu0 0.0
    %3775 = vmatprep.subr.mxu0 0.0
    %3776 = vmatpush1.msra.mxu0 0.0
    %3777 = vmatprep.subr.mxu0 0.0
    %3778 = vmatpush1.msra.mxu0 0.0
    %3779 = vmatprep.subr.mxu0 0.0
    %3780 = vmatpush1.msra.mxu0 0.0
    %3781 = vmatprep.subr.mxu0 0.0
    %3782 = vmatpush1.msra.mxu0 0.0
    %3783 = vmatprep.subr.mxu0 0.0
    %3784 = vmatpush1.msra.mxu0 0.0
    %3785 = vmatprep.subr.mxu0 0.0
    %3786 = vmatpush1.msra.mxu0 0.0
    %3787 = vmatprep.subr.mxu0 0.0
    %3788 = vmatpush1.msra.mxu0 0.0
    %3789 = vmatprep.subr.mxu0 0.0
    %3790 = vmatpush1.msra.mxu0 0.0
    %3791 = vmatprep.subr.mxu0 0.0
    %3792 = vmatpush1.msra.mxu0 0.0
    %3793 = vmatprep.subr.mxu0 0.0
    %3794 = vmatpush1.msra.mxu0 0.0
    %3795 = vmatprep.subr.mxu0 0.0
    %3796 = vmatpush1.msra.mxu0 0.0
    %3797 = vmatprep.subr.mxu0 0.0
    %3798 = vmatpush1.msra.mxu0 0.0
    %3799 = vmatprep.subr.mxu0 0.0
    %3800 = vmatpush1.msra.mxu0 0.0
    %3801 = vmatprep.subr.mxu0 0.0
    %3802 = vmatpush1.msra.mxu0 0.0
    %3803 = vmatprep.subr.mxu0 0.0
    %3804 = vmatpush1.msra.mxu0 0.0
    %3805 = vmatprep.subr.mxu0 0.0
    %3806 = vmatpush1.msra.mxu0 0.0
    %3807 = vmatprep.subr.mxu0 0.0
    %3808 = vmatpush1.msra.mxu0 0.0
    %3809 = vmatprep.subr.mxu0 0.0
    %3810 = vmatpush1.msra.mxu0 0.0
    %3811 = vmatprep.subr.mxu0 0.0
    %3812 = vmatpush1.msra.mxu0 0.0
    %3813 = vmatprep.mubr.f32.mxu0 0.0
    %v3814 = vand.u32 %v3585, 4294901760
    %v3815 = vsub.f32 %v3585, %v3814
    %3816 = vmatmul.mubr.f32.gmra.mrb[0].mxu0 %v3815
    %v3817 = vpop.f32.mrb[0].mxu0
    %v3818 = vadd.f32 %v3742, %v3817
    %v3819 = vpop.f32.mrb[0].mxu0
    %3820 = vdwg.mxu0
    %3821 = vmatprep.subr.mxu0 0.0
    %v3822 = vand.u32 %v78, 4294901760
    %3823 = vmatpush1.msra.mxu0 %v3822
    %3824 = vmatprep.subr.mxu0 0.0
    %v3825 = vand.u32 %v79, 4294901760
    %3826 = vmatpush1.msra.mxu0 %v3825
    %3827 = vmatprep.subr.mxu0 0.0
    %3828 = vmatpush1.msra.mxu0 0.0
    %3829 = vmatprep.subr.mxu0 0.0
    %3830 = vmatpush1.msra.mxu0 0.0
    %3831 = vmatprep.subr.mxu0 0.0
    %3832 = vmatpush1.msra.mxu0 0.0
    %3833 = vmatprep.subr.mxu0 0.0
    %3834 = vmatpush1.msra.mxu0 0.0
    %3835 = vmatprep.subr.mxu0 0.0
    %3836 = vmatpush1.msra.mxu0 0.0
    %3837 = vmatprep.subr.mxu0 0.0
    %3838 = vmatpush1.msra.mxu0 0.0
    %3839 = vmatprep.subr.mxu0 0.0
    %3840 = vmatpush1.msra.mxu0 0.0
    %3841 = vmatprep.subr.mxu0 0.0
    %3842 = vmatpush1.msra.mxu0 0.0
    %3843 = vmatprep.subr.mxu0 0.0
    %3844 = vmatpush1.msra.mxu0 0.0
    %3845 = vmatprep.subr.mxu0 0.0
    %3846 = vmatpush1.msra.mxu0 0.0
    %3847 = vmatprep.subr.mxu0 0.0
    %3848 = vmatpush1.msra.mxu0 0.0
    %3849 = vmatprep.subr.mxu0 0.0
    %3850 = vmatpush1.msra.mxu0 0.0
    %3851 = vmatprep.subr.mxu0 0.0
    %3852 = vmatpush1.msra.mxu0 0.0
    %3853 = vmatprep.subr.mxu0 0.0
    %3854 = vmatpush1.msra.mxu0 0.0
    %3855 = vmatprep.subr.mxu0 0.0
    %3856 = vmatpush1.msra.mxu0 0.0
    %3857 = vmatprep.subr.mxu0 0.0
    %3858 = vmatpush1.msra.mxu0 0.0
    %3859 = vmatprep.subr.mxu0 0.0
    %3860 = vmatpush1.msra.mxu0 0.0
    %3861 = vmatprep.subr.mxu0 0.0
    %3862 = vmatpush1.msra.mxu0 0.0
    %3863 = vmatprep.subr.mxu0 0.0
    %3864 = vmatpush1.msra.mxu0 0.0
    %3865 = vmatprep.subr.mxu0 0.0
    %3866 = vmatpush1.msra.mxu0 0.0
    %3867 = vmatprep.subr.mxu0 0.0
    %3868 = vmatpush1.msra.mxu0 0.0
    %3869 = vmatprep.subr.mxu0 0.0
    %3870 = vmatpush1.msra.mxu0 0.0
    %3871 = vmatprep.subr.mxu0 0.0
    %3872 = vmatpush1.msra.mxu0 0.0
    %3873 = vmatprep.subr.mxu0 0.0
    %3874 = vmatpush1.msra.mxu0 0.0
    %3875 = vmatprep.subr.mxu0 0.0
    %3876 = vmatpush1.msra.mxu0 0.0
    %3877 = vmatprep.subr.mxu0 0.0
    %3878 = vmatpush1.msra.mxu0 0.0
    %3879 = vmatprep.subr.mxu0 0.0
    %3880 = vmatpush1.msra.mxu0 0.0
    %3881 = vmatprep.subr.mxu0 0.0
    %3882 = vmatpush1.msra.mxu0 0.0
    %3883 = vmatprep.subr.mxu0 0.0
    %3884 = vmatpush1.msra.mxu0 0.0
    %3885 = vmatprep.subr.mxu0 0.0
    %3886 = vmatpush1.msra.mxu0 0.0
    %3887 = vmatprep.mubr.f32.mxu0 0.0
    %v3888 = vand.u32 %v3585, 4294901760
    %v3889 = vsub.f32 %v3585, %v3888
    %v3890 = vand.u32 %v3889, 4294901760
    %3891 = vmatmul.mubr.f32.gmra.mrb[0].mxu0 %v3890
    %v3892 = vpop.f32.mrb[0].mxu0
    %v3893 = vadd.f32 %v3818, %v3892
    %v3894 = vpop.f32.mrb[0].mxu0
    %3895 = vdwg.mxu0
    %3896 = vmatprep.subr.mxu0 0.0
    %v3897 = vand.u32 %v78, 4294901760
    %v3898 = vsub.f32 %v78, %v3897
    %v3899 = vand.u32 %v3898, 4294901760
    %3900 = vmatpush1.msra.mxu0 %v3899
    %3901 = vmatprep.subr.mxu0 0.0
    %v3902 = vand.u32 %v79, 4294901760
    %v3903 = vsub.f32 %v79, %v3902
    %v3904 = vand.u32 %v3903, 4294901760
    %3905 = vmatpush1.msra.mxu0 %v3904
    %3906 = vmatprep.subr.mxu0 0.0
    %3907 = vmatpush1.msra.mxu0 0.0
    %3908 = vmatprep.subr.mxu0 0.0
    %3909 = vmatpush1.msra.mxu0 0.0
    %3910 = vmatprep.subr.mxu0 0.0
    %3911 = vmatpush1.msra.mxu0 0.0
    %3912 = vmatprep.subr.mxu0 0.0
    %3913 = vmatpush1.msra.mxu0 0.0
    %3914 = vmatprep.subr.mxu0 0.0
    %3915 = vmatpush1.msra.mxu0 0.0
    %3916 = vmatprep.subr.mxu0 0.0
    %3917 = vmatpush1.msra.mxu0 0.0
    %3918 = vmatprep.subr.mxu0 0.0
    %3919 = vmatpush1.msra.mxu0 0.0
    %3920 = vmatprep.subr.mxu0 0.0
    %3921 = vmatpush1.msra.mxu0 0.0
    %3922 = vmatprep.subr.mxu0 0.0
    %3923 = vmatpush1.msra.mxu0 0.0
    %3924 = vmatprep.subr.mxu0 0.0
    %3925 = vmatpush1.msra.mxu0 0.0
    %3926 = vmatprep.subr.mxu0 0.0
    %3927 = vmatpush1.msra.mxu0 0.0
    %3928 = vmatprep.subr.mxu0 0.0
    %3929 = vmatpush1.msra.mxu0 0.0
    %3930 = vmatprep.subr.mxu0 0.0
    %3931 = vmatpush1.msra.mxu0 0.0
    %3932 = vmatprep.subr.mxu0 0.0
    %3933 = vmatpush1.msra.mxu0 0.0
    %3934 = vmatprep.subr.mxu0 0.0
    %3935 = vmatpush1.msra.mxu0 0.0
    %3936 = vmatprep.subr.mxu0 0.0
    %3937 = vmatpush1.msra.mxu0 0.0
    %3938 = vmatprep.subr.mxu0 0.0
    %3939 = vmatpush1.msra.mxu0 0.0
    %3940 = vmatprep.subr.mxu0 0.0
    %3941 = vmatpush1.msra.mxu0 0.0
    %3942 = vmatprep.subr.mxu0 0.0
    %3943 = vmatpush1.msra.mxu0 0.0
    %3944 = vmatprep.subr.mxu0 0.0
    %3945 = vmatpush1.msra.mxu0 0.0
    %3946 = vmatprep.subr.mxu0 0.0
    %3947 = vmatpush1.msra.mxu0 0.0
    %3948 = vmatprep.subr.mxu0 0.0
    %3949 = vmatpush1.msra.mxu0 0.0
    %3950 = vmatprep.subr.mxu0 0.0
    %3951 = vmatpush1.msra.mxu0 0.0
    %3952 = vmatprep.subr.mxu0 0.0
    %3953 = vmatpush1.msra.mxu0 0.0
    %3954 = vmatprep.subr.mxu0 0.0
    %3955 = vmatpush1.msra.mxu0 0.0
    %3956 = vmatprep.subr.mxu0 0.0
    %3957 = vmatpush1.msra.mxu0 0.0
    %3958 = vmatprep.subr.mxu0 0.0
    %3959 = vmatpush1.msra.mxu0 0.0
    %3960 = vmatprep.subr.mxu0 0.0
    %3961 = vmatpush1.msra.mxu0 0.0
    %3962 = vmatprep.subr.mxu0 0.0
    %3963 = vmatpush1.msra.mxu0 0.0
    %3964 = vmatprep.subr.mxu0 0.0
    %3965 = vmatpush1.msra.mxu0 0.0
    %3966 = vmatprep.mubr.f32.mxu0 0.0
    %v3967 = vand.u32 %v3585, 4294901760
    %3968 = vmatmul.mubr.f32.gmra.mrb[0].mxu0 %v3967
    %v3969 = vpop.f32.mrb[0].mxu0
    %v3970 = vadd.f32 %v3893, %v3969
    %v3971 = vpop.f32.mrb[0].mxu0
    %3972 = vdwg.mxu0
    %3973 = vmatprep.subr.mxu0 0.0
    %v3974 = vand.u32 %v78, 4294901760
    %3975 = vmatpush1.msra.mxu0 %v3974
    %3976 = vmatprep.subr.mxu0 0.0
    %v3977 = vand.u32 %v79, 4294901760
    %3978 = vmatpush1.msra.mxu0 %v3977
    %3979 = vmatprep.subr.mxu0 0.0
    %3980 = vmatpush1.msra.mxu0 0.0
    %3981 = vmatprep.subr.mxu0 0.0
    %3982 = vmatpush1.msra.mxu0 0.0
    %3983 = vmatprep.subr.mxu0 0.0
    %3984 = vmatpush1.msra.mxu0 0.0
    %3985 = vmatprep.subr.mxu0 0.0
    %3986 = vmatpush1.msra.mxu0 0.0
    %3987 = vmatprep.subr.mxu0 0.0
    %3988 = vmatpush1.msra.mxu0 0.0
    %3989 = vmatprep.subr.mxu0 0.0
    %3990 = vmatpush1.msra.mxu0 0.0
    %3991 = vmatprep.subr.mxu0 0.0
    %3992 = vmatpush1.msra.mxu0 0.0
    %3993 = vmatprep.subr.mxu0 0.0
    %3994 = vmatpush1.msra.mxu0 0.0
    %3995 = vmatprep.subr.mxu0 0.0
    %3996 = vmatpush1.msra.mxu0 0.0
    %3997 = vmatprep.subr.mxu0 0.0
    %3998 = vmatpush1.msra.mxu0 0.0
    %3999 = vmatprep.subr.mxu0 0.0
    %4000 = vmatpush1.msra.mxu0 0.0
    %4001 = vmatprep.subr.mxu0 0.0
    %4002 = vmatpush1.msra.mxu0 0.0
    %4003 = vmatprep.subr.mxu0 0.0
    %4004 = vmatpush1.msra.mxu0 0.0
    %4005 = vmatprep.subr.mxu0 0.0
    %4006 = vmatpush1.msra.mxu0 0.0
    %4007 = vmatprep.subr.mxu0 0.0
    %4008 = vmatpush1.msra.mxu0 0.0
    %4009 = vmatprep.subr.mxu0 0.0
    %4010 = vmatpush1.msra.mxu0 0.0
    %4011 = vmatprep.subr.mxu0 0.0
    %4012 = vmatpush1.msra.mxu0 0.0
    %4013 = vmatprep.subr.mxu0 0.0
    %4014 = vmatpush1.msra.mxu0 0.0
    %4015 = vmatprep.subr.mxu0 0.0
    %4016 = vmatpush1.msra.mxu0 0.0
    %4017 = vmatprep.subr.mxu0 0.0
    %4018 = vmatpush1.msra.mxu0 0.0
    %4019 = vmatprep.subr.mxu0 0.0
    %4020 = vmatpush1.msra.mxu0 0.0
    %4021 = vmatprep.subr.mxu0 0.0
    %4022 = vmatpush1.msra.mxu0 0.0
    %4023 = vmatprep.subr.mxu0 0.0
    %4024 = vmatpush1.msra.mxu0 0.0
    %4025 = vmatprep.subr.mxu0 0.0
    %4026 = vmatpush1.msra.mxu0 0.0
    %4027 = vmatprep.subr.mxu0 0.0
    %4028 = vmatpush1.msra.mxu0 0.0
    %4029 = vmatprep.subr.mxu0 0.0
    %4030 = vmatpush1.msra.mxu0 0.0
    %4031 = vmatprep.subr.mxu0 0.0
    %4032 = vmatpush1.msra.mxu0 0.0
    %4033 = vmatprep.subr.mxu0 0.0
    %4034 = vmatpush1.msra.mxu0 0.0
    %4035 = vmatprep.subr.mxu0 0.0
    %4036 = vmatpush1.msra.mxu0 0.0
    %4037 = vmatprep.subr.mxu0 0.0
    %4038 = vmatpush1.msra.mxu0 0.0
    %4039 = vmatprep.mubr.f32.mxu0 0.0
    %v4040 = vand.u32 %v3585, 4294901760
    %4041 = vmatmul.mubr.f32.gmra.mrb[0].mxu0 %v4040
    %v4042 = vpop.f32.mrb[0].mxu0
    %v4043 = vadd.f32 %v3970, %v4042
    %v4044 = vpop.f32.mrb[0].mxu0
    %4045 = vdwg.mxu0
    %v4046 = vadd.f32 %v3581, %v4043
    %v4047 = vlaneseq
    %v4048 = vshrl.u32 %v4047, 7
    %v4049 = vsub.s32 0, %v4048
    %v4050 = vrot.slane %v80, %v4049
    %v4051 = vadd.f32 %v4046, %v4050
    %v4052 = vmax.f32 %v4051, 0.0
    %vm4053 = vcmask 261120
    %v4054 = vsel %vm4053, %v4052, 0.0
    %4055 = vadd.xlane.f32.xlu0 %v4054
    %v4056 = vpop.xlane.xlu0 %4055
    %v4057 = vmul.f32 %v4052, %v4052
    %v4058 = vsel %vm4053, %v4057, 0.0
    %4059 = vadd.xlane.f32.xlu0 %v4058
    %v4060 = vpop.xlane.xlu0 %4059
    %v4061 = vmul.f32 %v4056, 0.03125
    %v4062 = vmul.f32 %v4060, 0.03125
    %v4063 = vmul.f32 %v4061, %v4061
    %v4064 = vsub.f32 %v4062, %v4063
    %v4065 = vmax.f32 %v4064, 0.0
    %v4066 = vsub.f32 %v4052, %v4061
    %v4067 = vadd.f32 %v4065, 1e-05
    %v4068 = vrsqrt.pop %v4067
    %v4069 = vmul.f32 %v4066, %v4068
    %v4070 = vlaneseq
    %v4071 = vshrl.u32 %v4070, 7
    %v4072 = vsub.s32 0, %v4071
    %v4073 = vrot.slane %v81, %v4072
    %v4074 = vmul.f32 %v4069, %v4073
    %v4075 = vlaneseq
    %v4076 = vshrl.u32 %v4075, 7
    %v4077 = vsub.s32 0, %v4076
    %v4078 = vrot.slane %v82, %v4077
    %v4079 = vadd.f32 %v4074, %v4078
    %v4080 = vlaneseq
    %v4081 = vshrl.u32 %v4080, 7
    %v4082 = vsub.s32 0, %v4081
    %v4083 = vrot.slane %v83, %v4082
    %v4084 = vmul.f32 %v4079, %v4083
    %v4085 = vsel %vm4053, %v4084, 0.0
    %4086 = vadd.xlane.f32.xlu0 %v4085
    %v4087 = vpop.xlane.xlu0 %4086
    %v4088 = vlaneseq
    %v4089 = vshrl.u32 %v4088, 7
    %v4090 = vsub.s32 0, %v4089
    %v4091 = vrot.slane %v84, %v4090
    %v4092 = vadd.f32 %v4087, %v4091
    %v4093 = vadd.f32 %v2046, %v4092
    %vm4094 = vcmask 7168
    %4095 = vst.msk [vmem:[%s5] sm:$0xff] %vm4094, %v4093
    // Predicated region
    $region26: #{underwater_encoder.1} parent=1 // pred_check
      _
    $region27: #{underwater_encoder.1} parent=1 // pred_check_branch
      %4097 = sbr.rel (0) target = $region29
    $region28: #{underwater_encoder.1} parent=1 // pred_region
      _
    $region29: #{underwater_encoder.1} parent=1 // pred_fallthru
      _
    // Predicated region
    $region30: #{underwater_encoder.1} parent=1 // pred_check
      _
    $region31: #{underwater_encoder.1} parent=1 // pred_check_branch
      %4099 = sbr.rel (0) target = $region33
    $region32: #{underwater_encoder.1} parent=1 // pred_region
      _
    $region33: #{underwater_encoder.1} parent=1 // pred_fallthru
      _
    %4100 = vsyncpa [#allocation4], 1

</llo_original>
